<compile_context>
chip_gen: v7x
topology: tpu7x:2x2x1
jax: 0.10.0
libtpu: 0.0.40
codegen_flags: <defaults>
</compile_context>

<pallas_src>
import functools

import jax
import jax.numpy as jnp
from jax.experimental import pallas as pl
from jax.experimental.pallas import tpu as pltpu


# ----------------------------------------------------------------------------
# Fused residual-block kernel
# ----------------------------------------------------------------------------
def _conv3x3(xpad, w_ref, b_ref, H, W, C):
    """3x3 'SAME' conv on a zero-padded value, as a single MXU matmul.

    xpad : (H+2, W+2, C) float32 value (border is zero)
    w_ref: Ref (9*C, C)  taps flattened in (ky, kx, cin) order
    b_ref: Ref (1, C)
    returns (H*W, C) float32
    """
    taps = []
    for dy in range(3):
        for dx in range(3):
            taps.append(xpad[dy:dy + H, dx:dx + W, :].reshape(H * W, C))
    patches = jnp.concatenate(taps, axis=-1)                  # (H*W, 9*C)
    out = jnp.dot(patches, w_ref[...],
                  preferred_element_type=jnp.float32)         # one K=9C matmul
    return out + b_ref[...].astype(jnp.float32)


def _resblock_kernel(x_ref, w1_ref, b1_ref, w2_ref, b2_ref, o_ref, pad_s,
                     *, H, W, C):
    # Zero-bordered padded input built in VMEM (no HBM pad copies).
    pad_s[...] = jnp.zeros_like(pad_s)
    pad_s[1:H + 1, 1:W + 1, :] = x_ref[0].astype(pad_s.dtype)

    # conv1 + ReLU; `h` never leaves the chip.
    h = jnp.maximum(_conv3x3(pad_s[...], w1_ref, b1_ref, H, W, C), 0.0)

    # Reuse the same scratch for padded `h` (border is still zero).
    pad_s[1:H + 1, 1:W + 1, :] = h.reshape(H, W, C)

    # conv2 + residual add (f32), then store.
    y = _conv3x3(pad_s[...], w2_ref, b2_ref, H, W, C)
    o_ref[...] = (x_ref[...].astype(jnp.float32)
                  + y.reshape(1, H, W, C)).astype(o_ref.dtype)


def _fused_resblock(x, w1, b1, w2, b2):
    """x: (N, H, W, C) NHWC.  w*: (9*C, C).  b*: (1, C)."""
    N, H, W, C = x.shape
    return pl.pallas_call(
        functools.partial(_resblock_kernel, H=H, W=W, C=C),
        out_shape=jax.ShapeDtypeStruct((N, H, W, C), x.dtype),
        grid=(N,),
        in_specs=[
            pl.BlockSpec((1, H, W, C), lambda n: (n, 0, 0, 0)),   # x (residual)
            pl.BlockSpec((9 * C, C), lambda n: (0, 0)),           # w1 (shared)
            pl.BlockSpec((1, C), lambda n: (0, 0)),               # b1
            pl.BlockSpec((9 * C, C), lambda n: (0, 0)),           # w2
            pl.BlockSpec((1, C), lambda n: (0, 0)),               # b2
        ],
        out_specs=pl.BlockSpec((1, H, W, C), lambda n: (n, 0, 0, 0)),
        scratch_shapes=[pltpu.VMEM((H + 2, W + 2, C), jnp.float32)],
        input_output_aliases={0: 0},   # update X in place in HBM
        compiler_params=pltpu.CompilerParams(
            dimension_semantics=("parallel",),
        ),
    )(x, w1, b1, w2, b2)


# ----------------------------------------------------------------------------
# Public forward (PyTorch-style NCHW in/out)
# ----------------------------------------------------------------------------
def projnetx_forward(x_nchw, params):
    """x_nchw: (N, C, H, W).  params: list of T tuples (w1, b1, w2, b2),
    w* of shape (3, 3, C, C) [HWIO], b* of shape (1, C)."""
    x = jnp.transpose(x_nchw, (0, 2, 3, 1))       # NCHW -> NHWC (C on lanes)
    C = x.shape[-1]
    for (w1, b1, w2, b2) in params:
        x = _fused_resblock(x, w1.reshape(9 * C, C), b1,
                            w2.reshape(9 * C, C), b2)
    return jnp.transpose(x, (0, 3, 1, 2))         # NHWC -> NCHW


# ----------------------------------------------------------------------------
# Pure-JAX reference (for correctness check only)
# ----------------------------------------------------------------------------
def _ref_conv(x, w, b):
    y = jax.lax.conv_general_dilated(
        x, w, window_strides=(1, 1), padding="SAME",
        dimension_numbers=("NHWC", "HWIO", "NHWC"),
    )
    return y + b.reshape(1, 1, 1, -1)


def projnetx_reference(x_nchw, params):
    x = jnp.transpose(x_nchw, (0, 2, 3, 1))
    for (w1, b1, w2, b2) in params:
        h = jnp.maximum(_ref_conv(x, w1, b1), 0.0)
        x = x + _ref_conv(h, w2, b2)
    return jnp.transpose(x, (0, 3, 1, 2))


# ----------------------------------------------------------------------------
# Parameter init (deterministic, mimics PyTorch Conv2d default scale)
# ----------------------------------------------------------------------------
def init_params(key, channels, T):
    fan_in = channels * 3 * 3
    bound = 1.0 / float(fan_in) ** 0.5
    params = []
    for _ in range(T):
        key, k1, k2, k3, k4 = jax.random.split(key, 5)
        w1 = jax.random.uniform(k1, (3, 3, channels, channels),
                                minval=-bound, maxval=bound, dtype=jnp.float32)
        b1 = jax.random.uniform(k2, (1, channels),
                                minval=-bound, maxval=bound, dtype=jnp.float32)
        w2 = jax.random.uniform(k3, (3, 3, channels, channels),
                                minval=-bound, maxval=bound, dtype=jnp.float32)
        b2 = jax.random.uniform(k4, (1, channels),
                                minval=-bound, maxval=bound, dtype=jnp.float32)
        params.append((w1, b1, w2, b2))
    return params


if __name__ == "__main__":
    N, C, H, W, T = 2, 8, 16, 16, 2
    key = jax.random.PRNGKey(0)
    key, kx = jax.random.split(key)
    x = jax.random.normal(kx, (N, C, H, W), dtype=jnp.float32)  # NCHW like PyTorch
    params = init_params(key, C, T)

    fwd = jax.jit(projnetx_forward)
    out = jax.block_until_ready(fwd(x, params))

    ref = jax.block_until_ready(projnetx_reference(x, params))
    assert out.shape == (N, C, H, W)
    max_err = float(jnp.max(jnp.abs(out - ref)))
    assert jnp.allclose(out, ref, atol=1e-3, rtol=1e-3), f"max abs err {max_err}"

    print("KERNEL_OK")
</pallas_src>

<mosaic_0001>
module attributes {stable_mosaic.version = 11 : i64} {
  func.func @_resblock_kernel(%arg0: i32, %arg1: memref<1x16x16x8xf32, #tpu.memory_space<vmem>>, %arg2: memref<72x8xf32, #tpu.memory_space<vmem>>, %arg3: memref<1x8xf32, #tpu.memory_space<vmem>>, %arg4: memref<72x8xf32, #tpu.memory_space<vmem>>, %arg5: memref<1x8xf32, #tpu.memory_space<vmem>>, %arg6: memref<1x16x16x8xf32, #tpu.memory_space<vmem>>, %arg7: memref<18x18x8xf32, #tpu.memory_space<vmem>>) attributes {dimension_semantics = [#tpu.dimension_semantics<parallel>], iteration_bounds = array<i64: 2>, scalar_prefetch = 0 : i64, scratch_operands = 1 : i64, tpu.core_type = #tpu.core_type<tc>, window_params = [{transform_indices = @transform_0, window_bounds = array<i64: 1, 16, 16, 8>}, {pipeline_mode = #tpu.pipeline_mode<synchronous>, transform_indices = @transform_1, window_bounds = array<i64: 72, 8>}, {pipeline_mode = #tpu.pipeline_mode<synchronous>, transform_indices = @transform_2, window_bounds = array<i64: 1, 8>}, {pipeline_mode = #tpu.pipeline_mode<synchronous>, transform_indices = @transform_3, window_bounds = array<i64: 72, 8>}, {pipeline_mode = #tpu.pipeline_mode<synchronous>, transform_indices = @transform_4, window_bounds = array<i64: 1, 8>}, {transform_indices = @transform_5, window_bounds = array<i64: 1, 16, 16, 8>}]} {
    %cst = arith.constant 0.000000e+00 : f32
    %0 = vector.broadcast %cst : f32 to vector<18x18x8xf32>
    %c0 = arith.constant 0 : index
    %c0_0 = arith.constant 0 : index
    %c0_1 = arith.constant 0 : index
    %1 = vector.load %arg7[%c0, %c0_0, %c0_1] : memref<18x18x8xf32, #tpu.memory_space<vmem>>, vector<18x18x8xf32>
    tpu.vector_store %arg7[%c0, %c0_0, %c0_1], %0 {strides = array<i32>} : memref<18x18x8xf32, #tpu.memory_space<vmem>>, vector<18x18x8xf32>,
    %c0_2 = arith.constant 0 : index
    %c0_3 = arith.constant 0 : index
    %c0_4 = arith.constant 0 : index
    %c0_5 = arith.constant 0 : index
    %2 = vector.load %arg1[%c0_2, %c0_3, %c0_4, %c0_5] : memref<1x16x16x8xf32, #tpu.memory_space<vmem>>, vector<1x16x16x8xf32>
    %3 = vector.shape_cast %2 : vector<1x16x16x8xf32> to vector<16x16x8xf32>
    %c1 = arith.constant 1 : index
    %c1_6 = arith.constant 1 : index
    %c0_7 = arith.constant 0 : index
    %4 = vector.load %arg7[%c1, %c1_6, %c0_7] : memref<18x18x8xf32, #tpu.memory_space<vmem>>, vector<16x16x8xf32>
    tpu.vector_store %arg7[%c1, %c1_6, %c0_7], %3 {strides = array<i32>} : memref<18x18x8xf32, #tpu.memory_space<vmem>>, vector<16x16x8xf32>,
    %c0_8 = arith.constant 0 : index
    %c0_9 = arith.constant 0 : index
    %c0_10 = arith.constant 0 : index
    %5 = vector.load %arg7[%c0_8, %c0_9, %c0_10] : memref<18x18x8xf32, #tpu.memory_space<vmem>>, vector<18x18x8xf32>
    %6 = vector.extract_strided_slice %5 {offsets = [0, 0, 0], sizes = [16, 16, 8], strides = [1, 1, 1]} : vector<18x18x8xf32> to vector<16x16x8xf32>
    %7 = vector.shape_cast %6 : vector<16x16x8xf32> to vector<256x8xf32>
    %8 = vector.extract_strided_slice %5 {offsets = [0, 1, 0], sizes = [16, 16, 8], strides = [1, 1, 1]} : vector<18x18x8xf32> to vector<16x16x8xf32>
    %9 = vector.shape_cast %8 : vector<16x16x8xf32> to vector<256x8xf32>
    %10 = vector.extract_strided_slice %5 {offsets = [0, 2, 0], sizes = [16, 16, 8], strides = [1, 1, 1]} : vector<18x18x8xf32> to vector<16x16x8xf32>
    %11 = vector.shape_cast %10 : vector<16x16x8xf32> to vector<256x8xf32>
    %12 = vector.extract_strided_slice %5 {offsets = [1, 0, 0], sizes = [16, 16, 8], strides = [1, 1, 1]} : vector<18x18x8xf32> to vector<16x16x8xf32>
    %13 = vector.shape_cast %12 : vector<16x16x8xf32> to vector<256x8xf32>
    %14 = vector.extract_strided_slice %5 {offsets = [1, 1, 0], sizes = [16, 16, 8], strides = [1, 1, 1]} : vector<18x18x8xf32> to vector<16x16x8xf32>
    %15 = vector.shape_cast %14 : vector<16x16x8xf32> to vector<256x8xf32>
    %16 = vector.extract_strided_slice %5 {offsets = [1, 2, 0], sizes = [16, 16, 8], strides = [1, 1, 1]} : vector<18x18x8xf32> to vector<16x16x8xf32>
    %17 = vector.shape_cast %16 : vector<16x16x8xf32> to vector<256x8xf32>
    %18 = vector.extract_strided_slice %5 {offsets = [2, 0, 0], sizes = [16, 16, 8], strides = [1, 1, 1]} : vector<18x18x8xf32> to vector<16x16x8xf32>
    %19 = vector.shape_cast %18 : vector<16x16x8xf32> to vector<256x8xf32>
    %20 = vector.extract_strided_slice %5 {offsets = [2, 1, 0], sizes = [16, 16, 8], strides = [1, 1, 1]} : vector<18x18x8xf32> to vector<16x16x8xf32>
    %21 = vector.shape_cast %20 : vector<16x16x8xf32> to vector<256x8xf32>
    %22 = vector.extract_strided_slice %5 {offsets = [2, 2, 0], sizes = [16, 16, 8], strides = [1, 1, 1]} : vector<18x18x8xf32> to vector<16x16x8xf32>
    %23 = vector.shape_cast %22 : vector<16x16x8xf32> to vector<256x8xf32>
    %24 = tpu.concatenate %7, %9, %11, %13, %15, %17, %19, %21, %23 in 1 : vector<256x8xf32>, vector<256x8xf32>, vector<256x8xf32>, vector<256x8xf32>, vector<256x8xf32>, vector<256x8xf32>, vector<256x8xf32>, vector<256x8xf32>, vector<256x8xf32> -> vector<256x72xf32>
    %c0_11 = arith.constant 0 : index
    %c0_12 = arith.constant 0 : index
    %25 = vector.load %arg2[%c0_11, %c0_12] : memref<72x8xf32, #tpu.memory_space<vmem>>, vector<72x8xf32>
    %cst_13 = arith.constant dense<0.000000e+00> : vector<256x8xf32>
    %26 = tpu.matmul %24, %25, %cst_13 {dimension_numbers = #tpu.dot_dimension_numbers<[1], [0], [0], [1], [0, 0, 1, 1], [], []>} : vector<256x72xf32>, vector<72x8xf32>, vector<256x8xf32> -> vector<256x8xf32>
    %c0_14 = arith.constant 0 : index
    %c0_15 = arith.constant 0 : index
    %27 = vector.load %arg3[%c0_14, %c0_15] : memref<1x8xf32, #tpu.memory_space<vmem>>, vector<1x8xf32>
    %28 = vector.broadcast %27 : vector<1x8xf32> to vector<256x8xf32>
    %29 = arith.addf %26, %28 : vector<256x8xf32>
    %cst_16 = arith.constant 0.000000e+00 : f32
    %30 = vector.broadcast %cst_16 : f32 to vector<256x8xf32>
    %31 = arith.maximumf %29, %30 : vector<256x8xf32>
    %32 = vector.shape_cast %31 : vector<256x8xf32> to vector<16x16x8xf32>
    %c1_17 = arith.constant 1 : index
    %c1_18 = arith.constant 1 : index
    %c0_19 = arith.constant 0 : index
    %33 = vector.load %arg7[%c1_17, %c1_18, %c0_19] : memref<18x18x8xf32, #tpu.memory_space<vmem>>, vector<16x16x8xf32>
    tpu.vector_store %arg7[%c1_17, %c1_18, %c0_19], %32 {strides = array<i32>} : memref<18x18x8xf32, #tpu.memory_space<vmem>>, vector<16x16x8xf32>,
    %c0_20 = arith.constant 0 : index
    %c0_21 = arith.constant 0 : index
    %c0_22 = arith.constant 0 : index
    %34 = vector.load %arg7[%c0_20, %c0_21, %c0_22] : memref<18x18x8xf32, #tpu.memory_space<vmem>>, vector<18x18x8xf32>
    %35 = vector.extract_strided_slice %34 {offsets = [0, 0, 0], sizes = [16, 16, 8], strides = [1, 1, 1]} : vector<18x18x8xf32> to vector<16x16x8xf32>
    %36 = vector.shape_cast %35 : vector<16x16x8xf32> to vector<256x8xf32>
    %37 = vector.extract_strided_slice %34 {offsets = [0, 1, 0], sizes = [16, 16, 8], strides = [1, 1, 1]} : vector<18x18x8xf32> to vector<16x16x8xf32>
    %38 = vector.shape_cast %37 : vector<16x16x8xf32> to vector<256x8xf32>
    %39 = vector.extract_strided_slice %34 {offsets = [0, 2, 0], sizes = [16, 16, 8], strides = [1, 1, 1]} : vector<18x18x8xf32> to vector<16x16x8xf32>
    %40 = vector.shape_cast %39 : vector<16x16x8xf32> to vector<256x8xf32>
    %41 = vector.extract_strided_slice %34 {offsets = [1, 0, 0], sizes = [16, 16, 8], strides = [1, 1, 1]} : vector<18x18x8xf32> to vector<16x16x8xf32>
    %42 = vector.shape_cast %41 : vector<16x16x8xf32> to vector<256x8xf32>
    %43 = vector.extract_strided_slice %34 {offsets = [1, 1, 0], sizes = [16, 16, 8], strides = [1, 1, 1]} : vector<18x18x8xf32> to vector<16x16x8xf32>
    %44 = vector.shape_cast %43 : vector<16x16x8xf32> to vector<256x8xf32>
    %45 = vector.extract_strided_slice %34 {offsets = [1, 2, 0], sizes = [16, 16, 8], strides = [1, 1, 1]} : vector<18x18x8xf32> to vector<16x16x8xf32>
    %46 = vector.shape_cast %45 : vector<16x16x8xf32> to vector<256x8xf32>
    %47 = vector.extract_strided_slice %34 {offsets = [2, 0, 0], sizes = [16, 16, 8], strides = [1, 1, 1]} : vector<18x18x8xf32> to vector<16x16x8xf32>
    %48 = vector.shape_cast %47 : vector<16x16x8xf32> to vector<256x8xf32>
    %49 = vector.extract_strided_slice %34 {offsets = [2, 1, 0], sizes = [16, 16, 8], strides = [1, 1, 1]} : vector<18x18x8xf32> to vector<16x16x8xf32>
    %50 = vector.shape_cast %49 : vector<16x16x8xf32> to vector<256x8xf32>
    %51 = vector.extract_strided_slice %34 {offsets = [2, 2, 0], sizes = [16, 16, 8], strides = [1, 1, 1]} : vector<18x18x8xf32> to vector<16x16x8xf32>
    %52 = vector.shape_cast %51 : vector<16x16x8xf32> to vector<256x8xf32>
    %53 = tpu.concatenate %36, %38, %40, %42, %44, %46, %48, %50, %52 in 1 : vector<256x8xf32>, vector<256x8xf32>, vector<256x8xf32>, vector<256x8xf32>, vector<256x8xf32>, vector<256x8xf32>, vector<256x8xf32>, vector<256x8xf32>, vector<256x8xf32> -> vector<256x72xf32>
    %c0_23 = arith.constant 0 : index
    %c0_24 = arith.constant 0 : index
    %54 = vector.load %arg4[%c0_23, %c0_24] : memref<72x8xf32, #tpu.memory_space<vmem>>, vector<72x8xf32>
    %cst_25 = arith.constant dense<0.000000e+00> : vector<256x8xf32>
    %55 = tpu.matmul %53, %54, %cst_25 {dimension_numbers = #tpu.dot_dimension_numbers<[1], [0], [0], [1], [0, 0, 1, 1], [], []>} : vector<256x72xf32>, vector<72x8xf32>, vector<256x8xf32> -> vector<256x8xf32>
    %c0_26 = arith.constant 0 : index
    %c0_27 = arith.constant 0 : index
    %56 = vector.load %arg5[%c0_26, %c0_27] : memref<1x8xf32, #tpu.memory_space<vmem>>, vector<1x8xf32>
    %57 = vector.broadcast %56 : vector<1x8xf32> to vector<256x8xf32>
    %58 = arith.addf %55, %57 : vector<256x8xf32>
    %c0_28 = arith.constant 0 : index
    %c0_29 = arith.constant 0 : index
    %c0_30 = arith.constant 0 : index
    %c0_31 = arith.constant 0 : index
    %59 = vector.load %arg1[%c0_28, %c0_29, %c0_30, %c0_31] : memref<1x16x16x8xf32, #tpu.memory_space<vmem>>, vector<1x16x16x8xf32>
    %60 = vector.shape_cast %58 : vector<256x8xf32> to vector<1x16x16x8xf32>
    %61 = arith.addf %59, %60 : vector<1x16x16x8xf32>
    %c0_32 = arith.constant 0 : index
    %c0_33 = arith.constant 0 : index
    %c0_34 = arith.constant 0 : index
    %c0_35 = arith.constant 0 : index
    %62 = vector.load %arg6[%c0_32, %c0_33, %c0_34, %c0_35] : memref<1x16x16x8xf32, #tpu.memory_space<vmem>>, vector<1x16x16x8xf32>
    tpu.vector_store %arg6[%c0_32, %c0_33, %c0_34, %c0_35], %61 {strides = array<i32>} : memref<1x16x16x8xf32, #tpu.memory_space<vmem>>, vector<1x16x16x8xf32>,
    return
  }
  func.func @transform_0(%arg0: i32) -> (i32, i32, i32, i32) {
    %c0_i32 = arith.constant 0 : i32
    %c0_i32_0 = arith.constant 0 : i32
    %c0_i32_1 = arith.constant 0 : i32
    %c0_i32_2 = arith.constant 0 : i32
    return %arg0, %c0_i32, %c0_i32_0, %c0_i32_1 : i32, i32, i32, i32
  }
  func.func @transform_1(%arg0: i32) -> (i32, i32) {
    %c0_i32 = arith.constant 0 : i32
    %c0_i32_0 = arith.constant 0 : i32
    %c0_i32_1 = arith.constant 0 : i32
    return %c0_i32, %c0_i32_0 : i32, i32
  }
  func.func @transform_2(%arg0: i32) -> (i32, i32) {
    %c0_i32 = arith.constant 0 : i32
    %c0_i32_0 = arith.constant 0 : i32
    %c0_i32_1 = arith.constant 0 : i32
    return %c0_i32, %c0_i32_0 : i32, i32
  }
  func.func @transform_3(%arg0: i32) -> (i32, i32) {
    %c0_i32 = arith.constant 0 : i32
    %c0_i32_0 = arith.constant 0 : i32
    %c0_i32_1 = arith.constant 0 : i32
    return %c0_i32, %c0_i32_0 : i32, i32
  }
  func.func @transform_4(%arg0: i32) -> (i32, i32) {
    %c0_i32 = arith.constant 0 : i32
    %c0_i32_0 = arith.constant 0 : i32
    %c0_i32_1 = arith.constant 0 : i32
    return %c0_i32, %c0_i32_0 : i32, i32
  }
  func.func @transform_5(%arg0: i32) -> (i32, i32, i32, i32) {
    %c0_i32 = arith.constant 0 : i32
    %c0_i32_0 = arith.constant 0 : i32
    %c0_i32_1 = arith.constant 0 : i32
    %c0_i32_2 = arith.constant 0 : i32
    return %arg0, %c0_i32, %c0_i32_0, %c0_i32_1 : i32, i32, i32, i32
  }
}

</mosaic_0001>

<llo_original>
// kernel: projnetx_forward.2
$region0: #{projnetx_forward.2}
  #allocation0 [shape = 'u32[]', space=smem, size = 0x4, offset = 0x4, fixed_abs, tag = 'smem constant byte address 0x4 - core index']
  #allocation1 [shape = 'u32[144,128]{1,0:T(1,128)}', space=vmem, size = 0x12000, scoped, tag = 'internal scratch']
  #allocation2 [shape = 'f32[18,18,8]{2,1,0:T(8,128)}', space=vmem, size = 0x36000, scoped, tag = 'scratch operand']
  %s0 = inlined_call_operand.vmem [shape: f32[2,16,16,8], index: 0, kind: input, shape index: {}, may-alias: {0,5}]
  %s1 = inlined_call_operand.vmem [shape: f32[72,8], index: 1, kind: input, shape index: {}]
  %s2 = inlined_call_operand.vmem [shape: f32[1,8], index: 2, kind: input, shape index: {}]
  %s3 = inlined_call_operand.vmem [shape: f32[72,8], index: 3, kind: input, shape index: {}]
  %s4 = inlined_call_operand.vmem [shape: f32[1,8], index: 4, kind: input, shape index: {}]
  %s5 = inlined_call_operand.vmem [shape: f32[2,16,16,8], index: 5, kind: output, shape index: {}, may-alias: {0,5}]
  %s6 = sld [smem:[#allocation0]]
  $region53: #{projnetx_forward.2} parent=0
    _
  %s8 = ssub.s32 1, %s6
  %s9 = scalar_select 0, %s8, %s6
  loop: start=0, step=1, limit=4
  $region2: #{projnetx_forward.2} parent=0 // loop_pre_header
    _
  $region3: #{projnetx_forward.2} parent=0 // loop_header
    %s11 = sphi 0, %s15
    %p12 = scmp.ge.s32.totalorder %s11, 4
    %s21 = sphi 0, %s23
    %s24 = sphi 0, %s21
    %s25 = sphi 0, %s24
    %s41 = sphi 0, %s25
    %s45 = sphi 0, %s45
    %s47 = sphi 0, %s45
    %s48 = sphi 0, %s47
    %s62 = sphi 0, %s48
    %s66 = sphi 0, %s66
    %s68 = sphi 0, %s66
    %s69 = sphi 0, %s68
    %s83 = sphi 0, %s69
    %s87 = sphi 0, %s87
    %s89 = sphi 0, %s87
    %s90 = sphi 0, %s89
    %s104 = sphi 0, %s90
    %s108 = sphi 0, %s108
    %s110 = sphi 0, %s108
    %s111 = sphi 0, %s110
    %s125 = sphi 0, %s111
    %s131 = sphi 0, %s133
    %s134 = sphi 0, %s131
    %s135 = sphi 0, %s134
    %s151 = sphi 0, %s135
  $region4: #{projnetx_forward.2} parent=0 // loop_header_branch
    %14 = sbr.rel (%p12) target = $region8
  $region5: #{projnetx_forward.2} parent=0 // loop_body
    %s16 = ssub.s32 %s11, 1
    %s17 = ssub.s32 %s11, 2
    %s18 = sadd.s32 %s11, 1
    %s19 = ssub.s32 %s11, %s18
    %p20 = scmp.eq.s32.totalorder %s19, 0
    %s22 = sadd.s32 %s21, 1
    %s23 = scalar_select %p20, %s21, %s22
    %p26 = pneg %p20
    %p27 = scmp.eq.s32.totalorder %s11, 1
    %p28 = por %p26, %p27
    %p29 = scmp.ne.s32.totalorder %s21, %s24
    %p30 = scmp.eq.s32.totalorder %s11, 0
    %p31 = por %p29, %p30
    %p32 = scmp.ne.s32.totalorder %s21, %s24
    %p33 = scmp.eq.s32.totalorder %s16, 1
    %p34 = por %p32, %p33
    %p35 = scmp.ne.s32.totalorder %s24, %s25
    %p36 = scmp.eq.s32.totalorder %s16, 0
    %p37 = por %p35, %p36
    %p38 = scmp.ne.s32.totalorder %s24, %s25
    %p39 = scmp.eq.s32.totalorder %s17, 1
    %p40 = por %p38, %p39
    %p42 = scmp.ne.s32.totalorder %s25, %s41
    %p43 = scmp.eq.s32.totalorder %s17, 0
    %p44 = por %p42, %p43
    %s46 = sadd.s32 %s45, 1
    %p49 = scmp.eq.s32.totalorder %s11, 1
    %p50 = scmp.ne.s32.totalorder %s45, %s47
    %p51 = scmp.eq.s32.totalorder %s11, 0
    %p52 = por %p50, %p51
    %p53 = scmp.ne.s32.totalorder %s45, %s47
    %p54 = scmp.eq.s32.totalorder %s16, 1
    %p55 = por %p53, %p54
    %p56 = scmp.ne.s32.totalorder %s47, %s48
    %p57 = scmp.eq.s32.totalorder %s16, 0
    %p58 = por %p56, %p57
    %p59 = scmp.ne.s32.totalorder %s47, %s48
    %p60 = scmp.eq.s32.totalorder %s17, 1
    %p61 = por %p59, %p60
    %p63 = scmp.ne.s32.totalorder %s48, %s62
    %p64 = scmp.eq.s32.totalorder %s17, 0
    %p65 = por %p63, %p64
    %s67 = sadd.s32 %s66, 1
    %p70 = scmp.eq.s32.totalorder %s11, 1
    %p71 = scmp.ne.s32.totalorder %s66, %s68
    %p72 = scmp.eq.s32.totalorder %s11, 0
    %p73 = por %p71, %p72
    %p74 = scmp.ne.s32.totalorder %s66, %s68
    %p75 = scmp.eq.s32.totalorder %s16, 1
    %p76 = por %p74, %p75
    %p77 = scmp.ne.s32.totalorder %s68, %s69
    %p78 = scmp.eq.s32.totalorder %s16, 0
    %p79 = por %p77, %p78
    %p80 = scmp.ne.s32.totalorder %s68, %s69
    %p81 = scmp.eq.s32.totalorder %s17, 1
    %p82 = por %p80, %p81
    %p84 = scmp.ne.s32.totalorder %s69, %s83
    %p85 = scmp.eq.s32.totalorder %s17, 0
    %p86 = por %p84, %p85
    %s88 = sadd.s32 %s87, 1
    %p91 = scmp.eq.s32.totalorder %s11, 1
    %p92 = scmp.ne.s32.totalorder %s87, %s89
    %p93 = scmp.eq.s32.totalorder %s11, 0
    %p94 = por %p92, %p93
    %p95 = scmp.ne.s32.totalorder %s87, %s89
    %p96 = scmp.eq.s32.totalorder %s16, 1
    %p97 = por %p95, %p96
    %p98 = scmp.ne.s32.totalorder %s89, %s90
    %p99 = scmp.eq.s32.totalorder %s16, 0
    %p100 = por %p98, %p99
    %p101 = scmp.ne.s32.totalorder %s89, %s90
    %p102 = scmp.eq.s32.totalorder %s17, 1
    %p103 = por %p101, %p102
    %p105 = scmp.ne.s32.totalorder %s90, %s104
    %p106 = scmp.eq.s32.totalorder %s17, 0
    %p107 = por %p105, %p106
    %s109 = sadd.s32 %s108, 1
    %p112 = scmp.eq.s32.totalorder %s11, 1
    %p113 = scmp.ne.s32.totalorder %s108, %s110
    %p114 = scmp.eq.s32.totalorder %s11, 0
    %p115 = por %p113, %p114
    %p116 = scmp.ne.s32.totalorder %s108, %s110
    %p117 = scmp.eq.s32.totalorder %s16, 1
    %p118 = por %p116, %p117
    %p119 = scmp.ne.s32.totalorder %s110, %s111
    %p120 = scmp.eq.s32.totalorder %s16, 0
    %p121 = por %p119, %p120
    %p122 = scmp.ne.s32.totalorder %s110, %s111
    %p123 = scmp.eq.s32.totalorder %s17, 1
    %p124 = por %p122, %p123
    %p126 = scmp.ne.s32.totalorder %s111, %s125
    %p127 = scmp.eq.s32.totalorder %s17, 0
    %p128 = por %p126, %p127
    %s129 = ssub.s32 %s11, %s18
    %p130 = scmp.eq.s32.totalorder %s129, 0
    %s132 = sadd.s32 %s131, 1
    %s133 = scalar_select %p130, %s131, %s132
    %p136 = pneg %p130
    %p137 = scmp.eq.s32.totalorder %s11, 1
    %p138 = por %p136, %p137
    %p139 = scmp.ne.s32.totalorder %s131, %s134
    %p140 = scmp.eq.s32.totalorder %s11, 0
    %p141 = por %p139, %p140
    %p142 = scmp.ne.s32.totalorder %s131, %s134
    %p143 = scmp.eq.s32.totalorder %s16, 1
    %p144 = por %p142, %p143
    %p145 = scmp.ne.s32.totalorder %s134, %s135
    %p146 = scmp.eq.s32.totalorder %s16, 0
    %p147 = por %p145, %p146
    %p148 = scmp.ne.s32.totalorder %s134, %s135
    %p149 = scmp.eq.s32.totalorder %s17, 1
    %p150 = por %p148, %p149
    %p152 = scmp.ne.s32.totalorder %s135, %s151
    %p153 = scmp.eq.s32.totalorder %s17, 0
    %p154 = por %p152, %p153
    %p155 = scmp.le.s32.totalorder 1, %s11
    %p156 = scmp.lt.s32.totalorder %s11, 3
    %p157 = pnand %p155, %p156
    %p158 = pneg %p157
    // Predicated region
    $region9: #{projnetx_forward.2} parent=5 // pred_check
      _
    $region10: #{projnetx_forward.2} parent=5 // pred_check_branch
      %160 = sbr.rel (%p157) target = $region12
    $region11: #{projnetx_forward.2} parent=5 // pred_region
      %s161 = ssub.s32 %s11, 1
      // Predicated region
      $region13: #{projnetx_forward.2} parent=11 // pred_check
        %p162 = pneg %p58
      $region14: #{projnetx_forward.2} parent=11 // pred_check_branch
        %164 = sbr.rel (%p162) target = $region16
      $region15: #{projnetx_forward.2} parent=11 // pred_region
        _
      $region16: #{projnetx_forward.2} parent=11 // pred_fallthru
        _
      // Predicated region
      $region17: #{projnetx_forward.2} parent=11 // pred_check
        %p165 = pneg %p79
      $region18: #{projnetx_forward.2} parent=11 // pred_check_branch
        %167 = sbr.rel (%p165) target = $region20
      $region19: #{projnetx_forward.2} parent=11 // pred_region
        _
      $region20: #{projnetx_forward.2} parent=11 // pred_fallthru
        _
      // Predicated region
      $region21: #{projnetx_forward.2} parent=11 // pred_check
        %p168 = pneg %p100
      $region22: #{projnetx_forward.2} parent=11 // pred_check_branch
        %170 = sbr.rel (%p168) target = $region24
      $region23: #{projnetx_forward.2} parent=11 // pred_region
        _
      $region24: #{projnetx_forward.2} parent=11 // pred_fallthru
        _
      // Predicated region
      $region25: #{projnetx_forward.2} parent=11 // pred_check
        %p171 = pneg %p121
      $region26: #{projnetx_forward.2} parent=11 // pred_check_branch
        %173 = sbr.rel (%p171) target = $region28
      $region27: #{projnetx_forward.2} parent=11 // pred_region
        _
      $region28: #{projnetx_forward.2} parent=11 // pred_fallthru
        _
    $region12: #{projnetx_forward.2} parent=5 // pred_fallthru
      _
    %p174 = scmp.lt.s32.totalorder %s11, 2
    // Predicated region
    $region29: #{projnetx_forward.2} parent=5 // pred_check
      %p175 = pneg %p174
    $region30: #{projnetx_forward.2} parent=5 // pred_check_branch
      %177 = sbr.rel (%p175) target = $region32
    $region31: #{projnetx_forward.2} parent=5 // pred_region
      // Predicated region
      $region33: #{projnetx_forward.2} parent=31 // pred_check
        %p178 = pneg %p31
      $region34: #{projnetx_forward.2} parent=31 // pred_check_branch
        %180 = sbr.rel (%p178) target = $region36
      $region35: #{projnetx_forward.2} parent=31 // pred_region
        %p181 = scmp.lt.s32.totalorder %s11, 1
        %s182 = scalar_select %p181, %s11, 1
        %s183 = smul.addr %s182, 32
        %s184 = smul.addr %s183, 8
        %s185 = scalar_lea.vmem %s0, %s184
      $region36: #{projnetx_forward.2} parent=31 // pred_fallthru
        _
    $region32: #{projnetx_forward.2} parent=5 // pred_fallthru
      _
    %p186 = scmp.le.s32.totalorder 1, %s11
    %p187 = scmp.lt.s32.totalorder %s11, 3
    %p188 = pnand %p186, %p187
    %p189 = pneg %p188
    // Predicated region
    $region37: #{projnetx_forward.2} parent=5 // pred_check
      _
    $region38: #{projnetx_forward.2} parent=5 // pred_check_branch
      %191 = sbr.rel (%p188) target = $region40
    $region39: #{projnetx_forward.2} parent=5 // pred_region
      %s192 = ssub.s32 %s11, 1
      %p193 = scmp.lt.s32.totalorder %s16, 1
      %s194 = scalar_select %p193, %s16, 1
      %s195 = smul.addr %s194, 32
      %s196 = smul.addr %s195, 8
      %s197 = scalar_lea.vmem %s0, %s196
      %p198 = pneg %p37
      %p199 = pneg %p34
      %p200 = pneg %p58
      %p201 = pneg %p55
      %p202 = pneg %p79
      %p203 = pneg %p76
      %p204 = pneg %p100
      %p205 = pneg %p97
      %p206 = pneg %p121
      %p207 = pneg %p118
      %p208 = pneg %p147
      %p209 = pneg %p144
      %p210 = scmp.lt.s32.totalorder %s16, 1
      %s211 = scalar_select %p210, %s16, 1
      %s212 = smul.addr %s211, 32
      %s213 = smul.addr %s212, 8
      %s214 = scalar_lea.vmem %s5, %s213
      %p215 = scmp.lt.s32.totalorder %s16, 1
      %s216 = scalar_select %p215, %s16, 1
      %s217 = smul.addr %s216, 32
      %s218 = smul.addr %s217, 8
      %s219 = scalar_lea.vmem %s0, %s218
      %p220 = scmp.lt.s32.totalorder %s16, 1
      %s221 = scalar_select %p220, %s16, 1
      %s222 = smul.addr %s221, 32
      %s223 = smul.addr %s222, 8
      %s224 = scalar_lea.vmem %s5, %s223
      %vm225 = vcmask 64512
      %226 = vst.msk [vmem:[#allocation2] sm:$0xff] %vm225, 0.0
      %227 = vst.msk [vmem:[#allocation2 + $0x8] sm:$0xff] %vm225, 0.0
      %vm228 = vcmask 58368
      %229 = vst.msk [vmem:[#allocation2 + $0x10] sm:$0x3] %vm228, 0.0
      %230 = vst.msk [vmem:[#allocation2 + $0x18] sm:$0xff] %vm225, 0.0
      %231 = vst.msk [vmem:[#allocation2 + $0x20] sm:$0xff] %vm225, 0.0
      %232 = vst.msk [vmem:[#allocation2 + $0x28] sm:$0x3] %vm228, 0.0
      %233 = vst.msk [vmem:[#allocation2 + $0x30] sm:$0xff] %vm225, 0.0
      %234 = vst.msk [vmem:[#allocation2 + $0x38] sm:$0xff] %vm225, 0.0
      %235 = vst.msk [vmem:[#allocation2 + $0x40] sm:$0x3] %vm228, 0.0
      %236 = vst.msk [vmem:[#allocation2 + $0x48] sm:$0xff] %vm225, 0.0
      %237 = vst.msk [vmem:[#allocation2 + $0x50] sm:$0xff] %vm225, 0.0
      %238 = vst.msk [vmem:[#allocation2 + $0x58] sm:$0x3] %vm228, 0.0
      %239 = vst.msk [vmem:[#allocation2 + $0x60] sm:$0xff] %vm225, 0.0
      %240 = vst.msk [vmem:[#allocation2 + $0x68] sm:$0xff] %vm225, 0.0
      %241 = vst.msk [vmem:[#allocation2 + $0x70] sm:$0x3] %vm228, 0.0
      %242 = vst.msk [vmem:[#allocation2 + $0x78] sm:$0xff] %vm225, 0.0
      %243 = vst.msk [vmem:[#allocation2 + $0x80] sm:$0xff] %vm225, 0.0
      %244 = vst.msk [vmem:[#allocation2 + $0x88] sm:$0x3] %vm228, 0.0
      %245 = vst.msk [vmem:[#allocation2 + $0x90] sm:$0xff] %vm225, 0.0
      %246 = vst.msk [vmem:[#allocation2 + $0x98] sm:$0xff] %vm225, 0.0
      %247 = vst.msk [vmem:[#allocation2 + $0xa0] sm:$0x3] %vm228, 0.0
      %248 = vst.msk [vmem:[#allocation2 + $0xa8] sm:$0xff] %vm225, 0.0
      %249 = vst.msk [vmem:[#allocation2 + $0xb0] sm:$0xff] %vm225, 0.0
      %250 = vst.msk [vmem:[#allocation2 + $0xb8] sm:$0x3] %vm228, 0.0
      %251 = vst.msk [vmem:[#allocation2 + $0xc0] sm:$0xff] %vm225, 0.0
      %252 = vst.msk [vmem:[#allocation2 + $0xc8] sm:$0xff] %vm225, 0.0
      %253 = vst.msk [vmem:[#allocation2 + $0xd0] sm:$0x3] %vm228, 0.0
      %254 = vst.msk [vmem:[#allocation2 + $0xd8] sm:$0xff] %vm225, 0.0
      %255 = vst.msk [vmem:[#allocation2 + $0xe0] sm:$0xff] %vm225, 0.0
      %256 = vst.msk [vmem:[#allocation2 + $0xe8] sm:$0x3] %vm228, 0.0
      %257 = vst.msk [vmem:[#allocation2 + $0xf0] sm:$0xff] %vm225, 0.0
      %258 = vst.msk [vmem:[#allocation2 + $0xf8] sm:$0xff] %vm225, 0.0
      %259 = vst.msk [vmem:[#allocation2 + $0x100] sm:$0x3] %vm228, 0.0
      %260 = vst.msk [vmem:[#allocation2 + $0x108] sm:$0xff] %vm225, 0.0
      %261 = vst.msk [vmem:[#allocation2 + $0x110] sm:$0xff] %vm225, 0.0
      %262 = vst.msk [vmem:[#allocation2 + $0x118] sm:$0x3] %vm228, 0.0
      %263 = vst.msk [vmem:[#allocation2 + $0x120] sm:$0xff] %vm225, 0.0
      %264 = vst.msk [vmem:[#allocation2 + $0x128] sm:$0xff] %vm225, 0.0
      %265 = vst.msk [vmem:[#allocation2 + $0x130] sm:$0x3] %vm228, 0.0
      %266 = vst.msk [vmem:[#allocation2 + $0x138] sm:$0xff] %vm225, 0.0
      %267 = vst.msk [vmem:[#allocation2 + $0x140] sm:$0xff] %vm225, 0.0
      %268 = vst.msk [vmem:[#allocation2 + $0x148] sm:$0x3] %vm228, 0.0
      %269 = vst.msk [vmem:[#allocation2 + $0x150] sm:$0xff] %vm225, 0.0
      %270 = vst.msk [vmem:[#allocation2 + $0x158] sm:$0xff] %vm225, 0.0
      %271 = vst.msk [vmem:[#allocation2 + $0x160] sm:$0x3] %vm228, 0.0
      %272 = vst.msk [vmem:[#allocation2 + $0x168] sm:$0xff] %vm225, 0.0
      %273 = vst.msk [vmem:[#allocation2 + $0x170] sm:$0xff] %vm225, 0.0
      %274 = vst.msk [vmem:[#allocation2 + $0x178] sm:$0x3] %vm228, 0.0
      %275 = vst.msk [vmem:[#allocation2 + $0x180] sm:$0xff] %vm225, 0.0
      %276 = vst.msk [vmem:[#allocation2 + $0x188] sm:$0xff] %vm225, 0.0
      %277 = vst.msk [vmem:[#allocation2 + $0x190] sm:$0x3] %vm228, 0.0
      %278 = vst.msk [vmem:[#allocation2 + $0x198] sm:$0xff] %vm225, 0.0
      %279 = vst.msk [vmem:[#allocation2 + $0x1a0] sm:$0xff] %vm225, 0.0
      %280 = vst.msk [vmem:[#allocation2 + $0x1a8] sm:$0x3] %vm228, 0.0
      %v281 = vld [vmem:[%s219] sm:$0xff]
      %v282 = vld [vmem:[%s219 + $0x8] sm:$0xff]
      %v283 = vld [vmem:[%s219 + $0x10] sm:$0xff]
      %v284 = vld [vmem:[%s219 + $0x18] sm:$0xff]
      %v285 = vld [vmem:[%s219 + $0x20] sm:$0xff]
      %v286 = vld [vmem:[%s219 + $0x28] sm:$0xff]
      %v287 = vld [vmem:[%s219 + $0x30] sm:$0xff]
      %v288 = vld [vmem:[%s219 + $0x38] sm:$0xff]
      %v289 = vld [vmem:[%s219 + $0x40] sm:$0xff]
      %v290 = vld [vmem:[%s219 + $0x48] sm:$0xff]
      %v291 = vld [vmem:[%s219 + $0x50] sm:$0xff]
      %v292 = vld [vmem:[%s219 + $0x58] sm:$0xff]
      %v293 = vld [vmem:[%s219 + $0x60] sm:$0xff]
      %v294 = vld [vmem:[%s219 + $0x68] sm:$0xff]
      %v295 = vld [vmem:[%s219 + $0x70] sm:$0xff]
      %v296 = vld [vmem:[%s219 + $0x78] sm:$0xff]
      %v297 = vld [vmem:[%s219 + $0x80] sm:$0xff]
      %v298 = vld [vmem:[%s219 + $0x88] sm:$0xff]
      %v299 = vld [vmem:[%s219 + $0x90] sm:$0xff]
      %v300 = vld [vmem:[%s219 + $0x98] sm:$0xff]
      %v301 = vld [vmem:[%s219 + $0xa0] sm:$0xff]
      %v302 = vld [vmem:[%s219 + $0xa8] sm:$0xff]
      %v303 = vld [vmem:[%s219 + $0xb0] sm:$0xff]
      %v304 = vld [vmem:[%s219 + $0xb8] sm:$0xff]
      %v305 = vld [vmem:[%s219 + $0xc0] sm:$0xff]
      %v306 = vld [vmem:[%s219 + $0xc8] sm:$0xff]
      %v307 = vld [vmem:[%s219 + $0xd0] sm:$0xff]
      %v308 = vld [vmem:[%s219 + $0xd8] sm:$0xff]
      %v309 = vld [vmem:[%s219 + $0xe0] sm:$0xff]
      %v310 = vld [vmem:[%s219 + $0xe8] sm:$0xff]
      %v311 = vld [vmem:[%s219 + $0xf0] sm:$0xff]
      %v312 = vld [vmem:[%s219 + $0xf8] sm:$0xff]
      %s313 = scalar_lea.vmem [#allocation2], 24
      %314 = vst.msk [vmem:[%s313 + $0x1] sm:$0xff] %vm225, %v281
      %315 = vst.msk [vmem:[%s313 + $0x9] sm:$0xff] %vm225, %v282
      %316 = vst.msk [vmem:[%s313 + $0x19] sm:$0xff] %vm225, %v283
      %317 = vst.msk [vmem:[%s313 + $0x21] sm:$0xff] %vm225, %v284
      %318 = vst.msk [vmem:[%s313 + $0x31] sm:$0xff] %vm225, %v285
      %319 = vst.msk [vmem:[%s313 + $0x39] sm:$0xff] %vm225, %v286
      %320 = vst.msk [vmem:[%s313 + $0x49] sm:$0xff] %vm225, %v287
      %321 = vst.msk [vmem:[%s313 + $0x51] sm:$0xff] %vm225, %v288
      %322 = vst.msk [vmem:[%s313 + $0x61] sm:$0xff] %vm225, %v289
      %323 = vst.msk [vmem:[%s313 + $0x69] sm:$0xff] %vm225, %v290
      %324 = vst.msk [vmem:[%s313 + $0x79] sm:$0xff] %vm225, %v291
      %325 = vst.msk [vmem:[%s313 + $0x81] sm:$0xff] %vm225, %v292
      %326 = vst.msk [vmem:[%s313 + $0x91] sm:$0xff] %vm225, %v293
      %327 = vst.msk [vmem:[%s313 + $0x99] sm:$0xff] %vm225, %v294
      %328 = vst.msk [vmem:[%s313 + $0xa9] sm:$0xff] %vm225, %v295
      %329 = vst.msk [vmem:[%s313 + $0xb1] sm:$0xff] %vm225, %v296
      %330 = vst.msk [vmem:[%s313 + $0xc1] sm:$0xff] %vm225, %v297
      %331 = vst.msk [vmem:[%s313 + $0xc9] sm:$0xff] %vm225, %v298
      %332 = vst.msk [vmem:[%s313 + $0xd9] sm:$0xff] %vm225, %v299
      %333 = vst.msk [vmem:[%s313 + $0xe1] sm:$0xff] %vm225, %v300
      %334 = vst.msk [vmem:[%s313 + $0xf1] sm:$0xff] %vm225, %v301
      %335 = vst.msk [vmem:[%s313 + $0xf9] sm:$0xff] %vm225, %v302
      %336 = vst.msk [vmem:[%s313 + $0x109] sm:$0xff] %vm225, %v303
      %337 = vst.msk [vmem:[%s313 + $0x111] sm:$0xff] %vm225, %v304
      %338 = vst.msk [vmem:[%s313 + $0x121] sm:$0xff] %vm225, %v305
      %339 = vst.msk [vmem:[%s313 + $0x129] sm:$0xff] %vm225, %v306
      %340 = vst.msk [vmem:[%s313 + $0x139] sm:$0xff] %vm225, %v307
      %341 = vst.msk [vmem:[%s313 + $0x141] sm:$0xff] %vm225, %v308
      %342 = vst.msk [vmem:[%s313 + $0x151] sm:$0xff] %vm225, %v309
      %343 = vst.msk [vmem:[%s313 + $0x159] sm:$0xff] %vm225, %v310
      %344 = vst.msk [vmem:[%s313 + $0x169] sm:$0xff] %vm225, %v311
      %345 = vst.msk [vmem:[%s313 + $0x171] sm:$0xff] %vm225, %v312
      %v346 = vld [vmem:[#allocation2] sm:$0xff]
      %v347 = vld [vmem:[#allocation2 + $0x8] sm:$0xff]
      %v348 = vld [vmem:[#allocation2 + $0x10] sm:$0x3]
      %v349 = vld [vmem:[#allocation2 + $0x18] sm:$0xff]
      %v350 = vld [vmem:[#allocation2 + $0x20] sm:$0xff]
      %v351 = vld [vmem:[#allocation2 + $0x28] sm:$0x3]
      %v352 = vld [vmem:[#allocation2 + $0x30] sm:$0xff]
      %v353 = vld [vmem:[#allocation2 + $0x38] sm:$0xff]
      %v354 = vld [vmem:[#allocation2 + $0x40] sm:$0x3]
      %v355 = vld [vmem:[#allocation2 + $0x48] sm:$0xff]
      %v356 = vld [vmem:[#allocation2 + $0x50] sm:$0xff]
      %v357 = vld [vmem:[#allocation2 + $0x58] sm:$0x3]
      %v358 = vld [vmem:[#allocation2 + $0x60] sm:$0xff]
      %v359 = vld [vmem:[#allocation2 + $0x68] sm:$0xff]
      %v360 = vld [vmem:[#allocation2 + $0x70] sm:$0x3]
      %v361 = vld [vmem:[#allocation2 + $0x78] sm:$0xff]
      %v362 = vld [vmem:[#allocation2 + $0x80] sm:$0xff]
      %v363 = vld [vmem:[#allocation2 + $0x88] sm:$0x3]
      %v364 = vld [vmem:[#allocation2 + $0x90] sm:$0xff]
      %v365 = vld [vmem:[#allocation2 + $0x98] sm:$0xff]
      %v366 = vld [vmem:[#allocation2 + $0xa0] sm:$0x3]
      %v367 = vld [vmem:[#allocation2 + $0xa8] sm:$0xff]
      %v368 = vld [vmem:[#allocation2 + $0xb0] sm:$0xff]
      %v369 = vld [vmem:[#allocation2 + $0xb8] sm:$0x3]
      %v370 = vld [vmem:[#allocation2 + $0xc0] sm:$0xff]
      %v371 = vld [vmem:[#allocation2 + $0xc8] sm:$0xff]
      %v372 = vld [vmem:[#allocation2 + $0xd0] sm:$0x3]
      %v373 = vld [vmem:[#allocation2 + $0xd8] sm:$0xff]
      %v374 = vld [vmem:[#allocation2 + $0xe0] sm:$0xff]
      %v375 = vld [vmem:[#allocation2 + $0xe8] sm:$0x3]
      %v376 = vld [vmem:[#allocation2 + $0xf0] sm:$0xff]
      %v377 = vld [vmem:[#allocation2 + $0xf8] sm:$0xff]
      %v378 = vld [vmem:[#allocation2 + $0x100] sm:$0x3]
      %v379 = vld [vmem:[#allocation2 + $0x108] sm:$0xff]
      %v380 = vld [vmem:[#allocation2 + $0x110] sm:$0xff]
      %v381 = vld [vmem:[#allocation2 + $0x118] sm:$0x3]
      %v382 = vld [vmem:[#allocation2 + $0x120] sm:$0xff]
      %v383 = vld [vmem:[#allocation2 + $0x128] sm:$0xff]
      %v384 = vld [vmem:[#allocation2 + $0x130] sm:$0x3]
      %v385 = vld [vmem:[#allocation2 + $0x138] sm:$0xff]
      %v386 = vld [vmem:[#allocation2 + $0x140] sm:$0xff]
      %v387 = vld [vmem:[#allocation2 + $0x148] sm:$0x3]
      %v388 = vld [vmem:[#allocation2 + $0x150] sm:$0xff]
      %v389 = vld [vmem:[#allocation2 + $0x158] sm:$0xff]
      %v390 = vld [vmem:[#allocation2 + $0x160] sm:$0x3]
      %v391 = vld [vmem:[#allocation2 + $0x168] sm:$0xff]
      %v392 = vld [vmem:[#allocation2 + $0x170] sm:$0xff]
      %v393 = vld [vmem:[#allocation2 + $0x178] sm:$0x3]
      %v394 = vld [vmem:[#allocation2 + $0x180] sm:$0xff]
      %v395 = vld [vmem:[#allocation2 + $0x188] sm:$0xff]
      %v396 = vld [vmem:[#allocation2 + $0x190] sm:$0x3]
      %v397 = vld [vmem:[#allocation2 + $0x198] sm:$0xff]
      %v398 = vld [vmem:[#allocation2 + $0x1a0] sm:$0xff]
      %v399 = vld [vmem:[#allocation2 + $0x1a8] sm:$0x3]
      %vm448 = vcmask 1046528
      %v449 = vrot.slane %v346, 1
      %v450 = vrot.slane %v347, 1
      %v451 = vsel %vm448, %v449, %v450
      %v452 = vrot.slane %v348, 1
      %v453 = vsel %vm448, %v450, %v452
      %v454 = vrot.slane %v349, 1
      %v455 = vrot.slane %v350, 1
      %v456 = vsel %vm448, %v454, %v455
      %v457 = vrot.slane %v351, 1
      %v458 = vsel %vm448, %v455, %v457
      %v459 = vrot.slane %v352, 1
      %v460 = vrot.slane %v353, 1
      %v461 = vsel %vm448, %v459, %v460
      %v462 = vrot.slane %v354, 1
      %v463 = vsel %vm448, %v460, %v462
      %v464 = vrot.slane %v355, 1
      %v465 = vrot.slane %v356, 1
      %v466 = vsel %vm448, %v464, %v465
      %v467 = vrot.slane %v357, 1
      %v468 = vsel %vm448, %v465, %v467
      %v469 = vrot.slane %v358, 1
      %v470 = vrot.slane %v359, 1
      %v471 = vsel %vm448, %v469, %v470
      %v472 = vrot.slane %v360, 1
      %v473 = vsel %vm448, %v470, %v472
      %v474 = vrot.slane %v361, 1
      %v475 = vrot.slane %v362, 1
      %v476 = vsel %vm448, %v474, %v475
      %v477 = vrot.slane %v363, 1
      %v478 = vsel %vm448, %v475, %v477
      %v479 = vrot.slane %v364, 1
      %v480 = vrot.slane %v365, 1
      %v481 = vsel %vm448, %v479, %v480
      %v482 = vrot.slane %v366, 1
      %v483 = vsel %vm448, %v480, %v482
      %v484 = vrot.slane %v367, 1
      %v485 = vrot.slane %v368, 1
      %v486 = vsel %vm448, %v484, %v485
      %v487 = vrot.slane %v369, 1
      %v488 = vsel %vm448, %v485, %v487
      %v489 = vrot.slane %v370, 1
      %v490 = vrot.slane %v371, 1
      %v491 = vsel %vm448, %v489, %v490
      %v492 = vrot.slane %v372, 1
      %v493 = vsel %vm448, %v490, %v492
      %v494 = vrot.slane %v373, 1
      %v495 = vrot.slane %v374, 1
      %v496 = vsel %vm448, %v494, %v495
      %v497 = vrot.slane %v375, 1
      %v498 = vsel %vm448, %v495, %v497
      %v499 = vrot.slane %v376, 1
      %v500 = vrot.slane %v377, 1
      %v501 = vsel %vm448, %v499, %v500
      %v502 = vrot.slane %v378, 1
      %v503 = vsel %vm448, %v500, %v502
      %v504 = vrot.slane %v379, 1
      %v505 = vrot.slane %v380, 1
      %v506 = vsel %vm448, %v504, %v505
      %v507 = vrot.slane %v381, 1
      %v508 = vsel %vm448, %v505, %v507
      %v509 = vrot.slane %v382, 1
      %v510 = vrot.slane %v383, 1
      %v511 = vsel %vm448, %v509, %v510
      %v512 = vrot.slane %v384, 1
      %v513 = vsel %vm448, %v510, %v512
      %v514 = vrot.slane %v385, 1
      %v515 = vrot.slane %v386, 1
      %v516 = vsel %vm448, %v514, %v515
      %v517 = vrot.slane %v387, 1
      %v518 = vsel %vm448, %v515, %v517
      %v519 = vrot.slane %v388, 1
      %v520 = vrot.slane %v389, 1
      %v521 = vsel %vm448, %v519, %v520
      %v522 = vrot.slane %v390, 1
      %v523 = vsel %vm448, %v520, %v522
      %v524 = vrot.slane %v391, 1
      %v525 = vrot.slane %v392, 1
      %v526 = vsel %vm448, %v524, %v525
      %v527 = vrot.slane %v393, 1
      %v528 = vsel %vm448, %v525, %v527
      %vm529 = vcmask 1045504
      %v530 = vrot.slane %v346, 2
      %v531 = vrot.slane %v347, 2
      %v532 = vsel %vm529, %v530, %v531
      %v533 = vrot.slane %v348, 2
      %v534 = vsel %vm529, %v531, %v533
      %v535 = vrot.slane %v349, 2
      %v536 = vrot.slane %v350, 2
      %v537 = vsel %vm529, %v535, %v536
      %v538 = vrot.slane %v351, 2
      %v539 = vsel %vm529, %v536, %v538
      %v540 = vrot.slane %v352, 2
      %v541 = vrot.slane %v353, 2
      %v542 = vsel %vm529, %v540, %v541
      %v543 = vrot.slane %v354, 2
      %v544 = vsel %vm529, %v541, %v543
      %v545 = vrot.slane %v355, 2
      %v546 = vrot.slane %v356, 2
      %v547 = vsel %vm529, %v545, %v546
      %v548 = vrot.slane %v357, 2
      %v549 = vsel %vm529, %v546, %v548
      %v550 = vrot.slane %v358, 2
      %v551 = vrot.slane %v359, 2
      %v552 = vsel %vm529, %v550, %v551
      %v553 = vrot.slane %v360, 2
      %v554 = vsel %vm529, %v551, %v553
      %v555 = vrot.slane %v361, 2
      %v556 = vrot.slane %v362, 2
      %v557 = vsel %vm529, %v555, %v556
      %v558 = vrot.slane %v363, 2
      %v559 = vsel %vm529, %v556, %v558
      %v560 = vrot.slane %v364, 2
      %v561 = vrot.slane %v365, 2
      %v562 = vsel %vm529, %v560, %v561
      %v563 = vrot.slane %v366, 2
      %v564 = vsel %vm529, %v561, %v563
      %v565 = vrot.slane %v367, 2
      %v566 = vrot.slane %v368, 2
      %v567 = vsel %vm529, %v565, %v566
      %v568 = vrot.slane %v369, 2
      %v569 = vsel %vm529, %v566, %v568
      %v570 = vrot.slane %v370, 2
      %v571 = vrot.slane %v371, 2
      %v572 = vsel %vm529, %v570, %v571
      %v573 = vrot.slane %v372, 2
      %v574 = vsel %vm529, %v571, %v573
      %v575 = vrot.slane %v373, 2
      %v576 = vrot.slane %v374, 2
      %v577 = vsel %vm529, %v575, %v576
      %v578 = vrot.slane %v375, 2
      %v579 = vsel %vm529, %v576, %v578
      %v580 = vrot.slane %v376, 2
      %v581 = vrot.slane %v377, 2
      %v582 = vsel %vm529, %v580, %v581
      %v583 = vrot.slane %v378, 2
      %v584 = vsel %vm529, %v581, %v583
      %v585 = vrot.slane %v379, 2
      %v586 = vrot.slane %v380, 2
      %v587 = vsel %vm529, %v585, %v586
      %v588 = vrot.slane %v381, 2
      %v589 = vsel %vm529, %v586, %v588
      %v590 = vrot.slane %v382, 2
      %v591 = vrot.slane %v383, 2
      %v592 = vsel %vm529, %v590, %v591
      %v593 = vrot.slane %v384, 2
      %v594 = vsel %vm529, %v591, %v593
      %v595 = vrot.slane %v385, 2
      %v596 = vrot.slane %v386, 2
      %v597 = vsel %vm529, %v595, %v596
      %v598 = vrot.slane %v387, 2
      %v599 = vsel %vm529, %v596, %v598
      %v600 = vrot.slane %v388, 2
      %v601 = vrot.slane %v389, 2
      %v602 = vsel %vm529, %v600, %v601
      %v603 = vrot.slane %v390, 2
      %v604 = vsel %vm529, %v601, %v603
      %v605 = vrot.slane %v391, 2
      %v606 = vrot.slane %v392, 2
      %v607 = vsel %vm529, %v605, %v606
      %v608 = vrot.slane %v393, 2
      %v609 = vsel %vm529, %v606, %v608
      %v613 = vrot.slane %v394, 1
      %v614 = vrot.slane %v395, 1
      %v615 = vsel %vm448, %v613, %v614
      %v616 = vrot.slane %v396, 1
      %v617 = vsel %vm448, %v614, %v616
      %v618 = vrot.slane %v394, 2
      %v619 = vrot.slane %v395, 2
      %v620 = vsel %vm529, %v618, %v619
      %v621 = vrot.slane %v396, 2
      %v622 = vsel %vm529, %v619, %v621
      %v626 = vrot.slane %v397, 1
      %v627 = vrot.slane %v398, 1
      %v628 = vsel %vm448, %v626, %v627
      %v629 = vrot.slane %v399, 1
      %v630 = vsel %vm448, %v627, %v629
      %v631 = vrot.slane %v397, 2
      %v632 = vrot.slane %v398, 2
      %v633 = vsel %vm529, %v631, %v632
      %v634 = vrot.slane %v399, 2
      %v635 = vsel %vm529, %v632, %v634
      %636 = vrot.lane.b32.xlu0 %v451, 8
      %v637 = vpop.permute.xlu0 %636
      %638 = vrot.lane.b32.xlu0 %v453, 8
      %v639 = vpop.permute.xlu0 %638
      %640 = vrot.lane.b32.xlu0 %v456, 8
      %v641 = vpop.permute.xlu0 %640
      %642 = vrot.lane.b32.xlu0 %v458, 8
      %v643 = vpop.permute.xlu0 %642
      %644 = vrot.lane.b32.xlu0 %v461, 8
      %v645 = vpop.permute.xlu0 %644
      %646 = vrot.lane.b32.xlu0 %v463, 8
      %v647 = vpop.permute.xlu0 %646
      %648 = vrot.lane.b32.xlu0 %v466, 8
      %v649 = vpop.permute.xlu0 %648
      %650 = vrot.lane.b32.xlu0 %v468, 8
      %v651 = vpop.permute.xlu0 %650
      %652 = vrot.lane.b32.xlu0 %v471, 8
      %v653 = vpop.permute.xlu0 %652
      %654 = vrot.lane.b32.xlu0 %v473, 8
      %v655 = vpop.permute.xlu0 %654
      %656 = vrot.lane.b32.xlu0 %v476, 8
      %v657 = vpop.permute.xlu0 %656
      %658 = vrot.lane.b32.xlu0 %v478, 8
      %v659 = vpop.permute.xlu0 %658
      %660 = vrot.lane.b32.xlu0 %v481, 8
      %v661 = vpop.permute.xlu0 %660
      %662 = vrot.lane.b32.xlu0 %v483, 8
      %v663 = vpop.permute.xlu0 %662
      %664 = vrot.lane.b32.xlu0 %v486, 8
      %v665 = vpop.permute.xlu0 %664
      %666 = vrot.lane.b32.xlu0 %v488, 8
      %v667 = vpop.permute.xlu0 %666
      %668 = vrot.lane.b32.xlu0 %v491, 8
      %v669 = vpop.permute.xlu0 %668
      %670 = vrot.lane.b32.xlu0 %v493, 8
      %v671 = vpop.permute.xlu0 %670
      %672 = vrot.lane.b32.xlu0 %v496, 8
      %v673 = vpop.permute.xlu0 %672
      %674 = vrot.lane.b32.xlu0 %v498, 8
      %v675 = vpop.permute.xlu0 %674
      %676 = vrot.lane.b32.xlu0 %v501, 8
      %v677 = vpop.permute.xlu0 %676
      %678 = vrot.lane.b32.xlu0 %v503, 8
      %v679 = vpop.permute.xlu0 %678
      %680 = vrot.lane.b32.xlu0 %v506, 8
      %v681 = vpop.permute.xlu0 %680
      %682 = vrot.lane.b32.xlu0 %v508, 8
      %v683 = vpop.permute.xlu0 %682
      %684 = vrot.lane.b32.xlu0 %v511, 8
      %v685 = vpop.permute.xlu0 %684
      %686 = vrot.lane.b32.xlu0 %v513, 8
      %v687 = vpop.permute.xlu0 %686
      %688 = vrot.lane.b32.xlu0 %v516, 8
      %v689 = vpop.permute.xlu0 %688
      %690 = vrot.lane.b32.xlu0 %v518, 8
      %v691 = vpop.permute.xlu0 %690
      %692 = vrot.lane.b32.xlu0 %v521, 8
      %v693 = vpop.permute.xlu0 %692
      %694 = vrot.lane.b32.xlu0 %v523, 8
      %v695 = vpop.permute.xlu0 %694
      %696 = vrot.lane.b32.xlu0 %v526, 8
      %v697 = vpop.permute.xlu0 %696
      %698 = vrot.lane.b32.xlu0 %v528, 8
      %v699 = vpop.permute.xlu0 %698
      %732 = vrot.lane.b32.xlu0 %v532, 16
      %v733 = vpop.permute.xlu0 %732
      %734 = vrot.lane.b32.xlu0 %v534, 16
      %v735 = vpop.permute.xlu0 %734
      %736 = vrot.lane.b32.xlu0 %v537, 16
      %v737 = vpop.permute.xlu0 %736
      %738 = vrot.lane.b32.xlu0 %v539, 16
      %v739 = vpop.permute.xlu0 %738
      %740 = vrot.lane.b32.xlu0 %v542, 16
      %v741 = vpop.permute.xlu0 %740
      %742 = vrot.lane.b32.xlu0 %v544, 16
      %v743 = vpop.permute.xlu0 %742
      %744 = vrot.lane.b32.xlu0 %v547, 16
      %v745 = vpop.permute.xlu0 %744
      %746 = vrot.lane.b32.xlu0 %v549, 16
      %v747 = vpop.permute.xlu0 %746
      %748 = vrot.lane.b32.xlu0 %v552, 16
      %v749 = vpop.permute.xlu0 %748
      %750 = vrot.lane.b32.xlu0 %v554, 16
      %v751 = vpop.permute.xlu0 %750
      %752 = vrot.lane.b32.xlu0 %v557, 16
      %v753 = vpop.permute.xlu0 %752
      %754 = vrot.lane.b32.xlu0 %v559, 16
      %v755 = vpop.permute.xlu0 %754
      %756 = vrot.lane.b32.xlu0 %v562, 16
      %v757 = vpop.permute.xlu0 %756
      %758 = vrot.lane.b32.xlu0 %v564, 16
      %v759 = vpop.permute.xlu0 %758
      %760 = vrot.lane.b32.xlu0 %v567, 16
      %v761 = vpop.permute.xlu0 %760
      %762 = vrot.lane.b32.xlu0 %v569, 16
      %v763 = vpop.permute.xlu0 %762
      %764 = vrot.lane.b32.xlu0 %v572, 16
      %v765 = vpop.permute.xlu0 %764
      %766 = vrot.lane.b32.xlu0 %v574, 16
      %v767 = vpop.permute.xlu0 %766
      %768 = vrot.lane.b32.xlu0 %v577, 16
      %v769 = vpop.permute.xlu0 %768
      %770 = vrot.lane.b32.xlu0 %v579, 16
      %v771 = vpop.permute.xlu0 %770
      %772 = vrot.lane.b32.xlu0 %v582, 16
      %v773 = vpop.permute.xlu0 %772
      %774 = vrot.lane.b32.xlu0 %v584, 16
      %v775 = vpop.permute.xlu0 %774
      %776 = vrot.lane.b32.xlu0 %v587, 16
      %v777 = vpop.permute.xlu0 %776
      %778 = vrot.lane.b32.xlu0 %v589, 16
      %v779 = vpop.permute.xlu0 %778
      %780 = vrot.lane.b32.xlu0 %v592, 16
      %v781 = vpop.permute.xlu0 %780
      %782 = vrot.lane.b32.xlu0 %v594, 16
      %v783 = vpop.permute.xlu0 %782
      %784 = vrot.lane.b32.xlu0 %v597, 16
      %v785 = vpop.permute.xlu0 %784
      %786 = vrot.lane.b32.xlu0 %v599, 16
      %v787 = vpop.permute.xlu0 %786
      %788 = vrot.lane.b32.xlu0 %v602, 16
      %v789 = vpop.permute.xlu0 %788
      %790 = vrot.lane.b32.xlu0 %v604, 16
      %v791 = vpop.permute.xlu0 %790
      %792 = vrot.lane.b32.xlu0 %v607, 16
      %v793 = vpop.permute.xlu0 %792
      %794 = vrot.lane.b32.xlu0 %v609, 16
      %v795 = vpop.permute.xlu0 %794
      %828 = vrot.lane.b32.xlu0 %v349, 24
      %v829 = vpop.permute.xlu0 %828
      %830 = vrot.lane.b32.xlu0 %v350, 24
      %v831 = vpop.permute.xlu0 %830
      %832 = vrot.lane.b32.xlu0 %v352, 24
      %v833 = vpop.permute.xlu0 %832
      %834 = vrot.lane.b32.xlu0 %v353, 24
      %v835 = vpop.permute.xlu0 %834
      %836 = vrot.lane.b32.xlu0 %v355, 24
      %v837 = vpop.permute.xlu0 %836
      %838 = vrot.lane.b32.xlu0 %v356, 24
      %v839 = vpop.permute.xlu0 %838
      %840 = vrot.lane.b32.xlu0 %v358, 24
      %v841 = vpop.permute.xlu0 %840
      %842 = vrot.lane.b32.xlu0 %v359, 24
      %v843 = vpop.permute.xlu0 %842
      %844 = vrot.lane.b32.xlu0 %v361, 24
      %v845 = vpop.permute.xlu0 %844
      %846 = vrot.lane.b32.xlu0 %v362, 24
      %v847 = vpop.permute.xlu0 %846
      %848 = vrot.lane.b32.xlu0 %v364, 24
      %v849 = vpop.permute.xlu0 %848
      %850 = vrot.lane.b32.xlu0 %v365, 24
      %v851 = vpop.permute.xlu0 %850
      %852 = vrot.lane.b32.xlu0 %v367, 24
      %v853 = vpop.permute.xlu0 %852
      %854 = vrot.lane.b32.xlu0 %v368, 24
      %v855 = vpop.permute.xlu0 %854
      %856 = vrot.lane.b32.xlu0 %v370, 24
      %v857 = vpop.permute.xlu0 %856
      %858 = vrot.lane.b32.xlu0 %v371, 24
      %v859 = vpop.permute.xlu0 %858
      %860 = vrot.lane.b32.xlu0 %v373, 24
      %v861 = vpop.permute.xlu0 %860
      %862 = vrot.lane.b32.xlu0 %v374, 24
      %v863 = vpop.permute.xlu0 %862
      %864 = vrot.lane.b32.xlu0 %v376, 24
      %v865 = vpop.permute.xlu0 %864
      %866 = vrot.lane.b32.xlu0 %v377, 24
      %v867 = vpop.permute.xlu0 %866
      %868 = vrot.lane.b32.xlu0 %v379, 24
      %v869 = vpop.permute.xlu0 %868
      %870 = vrot.lane.b32.xlu0 %v380, 24
      %v871 = vpop.permute.xlu0 %870
      %872 = vrot.lane.b32.xlu0 %v382, 24
      %v873 = vpop.permute.xlu0 %872
      %874 = vrot.lane.b32.xlu0 %v383, 24
      %v875 = vpop.permute.xlu0 %874
      %876 = vrot.lane.b32.xlu0 %v385, 24
      %v877 = vpop.permute.xlu0 %876
      %878 = vrot.lane.b32.xlu0 %v386, 24
      %v879 = vpop.permute.xlu0 %878
      %880 = vrot.lane.b32.xlu0 %v388, 24
      %v881 = vpop.permute.xlu0 %880
      %882 = vrot.lane.b32.xlu0 %v389, 24
      %v883 = vpop.permute.xlu0 %882
      %884 = vrot.lane.b32.xlu0 %v391, 24
      %v885 = vpop.permute.xlu0 %884
      %886 = vrot.lane.b32.xlu0 %v392, 24
      %v887 = vpop.permute.xlu0 %886
      %888 = vrot.lane.b32.xlu0 %v394, 24
      %v889 = vpop.permute.xlu0 %888
      %890 = vrot.lane.b32.xlu0 %v395, 24
      %v891 = vpop.permute.xlu0 %890
      %924 = vrot.lane.b32.xlu0 %v456, 32
      %v925 = vpop.permute.xlu0 %924
      %926 = vrot.lane.b32.xlu0 %v458, 32
      %v927 = vpop.permute.xlu0 %926
      %928 = vrot.lane.b32.xlu0 %v461, 32
      %v929 = vpop.permute.xlu0 %928
      %930 = vrot.lane.b32.xlu0 %v463, 32
      %v931 = vpop.permute.xlu0 %930
      %932 = vrot.lane.b32.xlu0 %v466, 32
      %v933 = vpop.permute.xlu0 %932
      %934 = vrot.lane.b32.xlu0 %v468, 32
      %v935 = vpop.permute.xlu0 %934
      %936 = vrot.lane.b32.xlu0 %v471, 32
      %v937 = vpop.permute.xlu0 %936
      %938 = vrot.lane.b32.xlu0 %v473, 32
      %v939 = vpop.permute.xlu0 %938
      %940 = vrot.lane.b32.xlu0 %v476, 32
      %v941 = vpop.permute.xlu0 %940
      %942 = vrot.lane.b32.xlu0 %v478, 32
      %v943 = vpop.permute.xlu0 %942
      %944 = vrot.lane.b32.xlu0 %v481, 32
      %v945 = vpop.permute.xlu0 %944
      %946 = vrot.lane.b32.xlu0 %v483, 32
      %v947 = vpop.permute.xlu0 %946
      %948 = vrot.lane.b32.xlu0 %v486, 32
      %v949 = vpop.permute.xlu0 %948
      %950 = vrot.lane.b32.xlu0 %v488, 32
      %v951 = vpop.permute.xlu0 %950
      %952 = vrot.lane.b32.xlu0 %v491, 32
      %v953 = vpop.permute.xlu0 %952
      %954 = vrot.lane.b32.xlu0 %v493, 32
      %v955 = vpop.permute.xlu0 %954
      %956 = vrot.lane.b32.xlu0 %v496, 32
      %v957 = vpop.permute.xlu0 %956
      %958 = vrot.lane.b32.xlu0 %v498, 32
      %v959 = vpop.permute.xlu0 %958
      %960 = vrot.lane.b32.xlu0 %v501, 32
      %v961 = vpop.permute.xlu0 %960
      %962 = vrot.lane.b32.xlu0 %v503, 32
      %v963 = vpop.permute.xlu0 %962
      %964 = vrot.lane.b32.xlu0 %v506, 32
      %v965 = vpop.permute.xlu0 %964
      %966 = vrot.lane.b32.xlu0 %v508, 32
      %v967 = vpop.permute.xlu0 %966
      %968 = vrot.lane.b32.xlu0 %v511, 32
      %v969 = vpop.permute.xlu0 %968
      %970 = vrot.lane.b32.xlu0 %v513, 32
      %v971 = vpop.permute.xlu0 %970
      %972 = vrot.lane.b32.xlu0 %v516, 32
      %v973 = vpop.permute.xlu0 %972
      %974 = vrot.lane.b32.xlu0 %v518, 32
      %v975 = vpop.permute.xlu0 %974
      %976 = vrot.lane.b32.xlu0 %v521, 32
      %v977 = vpop.permute.xlu0 %976
      %978 = vrot.lane.b32.xlu0 %v523, 32
      %v979 = vpop.permute.xlu0 %978
      %980 = vrot.lane.b32.xlu0 %v526, 32
      %v981 = vpop.permute.xlu0 %980
      %982 = vrot.lane.b32.xlu0 %v528, 32
      %v983 = vpop.permute.xlu0 %982
      %984 = vrot.lane.b32.xlu0 %v615, 32
      %v985 = vpop.permute.xlu0 %984
      %986 = vrot.lane.b32.xlu0 %v617, 32
      %v987 = vpop.permute.xlu0 %986
      %1020 = vrot.lane.b32.xlu0 %v537, 40
      %v1021 = vpop.permute.xlu0 %1020
      %1022 = vrot.lane.b32.xlu0 %v539, 40
      %v1023 = vpop.permute.xlu0 %1022
      %1024 = vrot.lane.b32.xlu0 %v542, 40
      %v1025 = vpop.permute.xlu0 %1024
      %1026 = vrot.lane.b32.xlu0 %v544, 40
      %v1027 = vpop.permute.xlu0 %1026
      %1028 = vrot.lane.b32.xlu0 %v547, 40
      %v1029 = vpop.permute.xlu0 %1028
      %1030 = vrot.lane.b32.xlu0 %v549, 40
      %v1031 = vpop.permute.xlu0 %1030
      %1032 = vrot.lane.b32.xlu0 %v552, 40
      %v1033 = vpop.permute.xlu0 %1032
      %1034 = vrot.lane.b32.xlu0 %v554, 40
      %v1035 = vpop.permute.xlu0 %1034
      %1036 = vrot.lane.b32.xlu0 %v557, 40
      %v1037 = vpop.permute.xlu0 %1036
      %1038 = vrot.lane.b32.xlu0 %v559, 40
      %v1039 = vpop.permute.xlu0 %1038
      %1040 = vrot.lane.b32.xlu0 %v562, 40
      %v1041 = vpop.permute.xlu0 %1040
      %1042 = vrot.lane.b32.xlu0 %v564, 40
      %v1043 = vpop.permute.xlu0 %1042
      %1044 = vrot.lane.b32.xlu0 %v567, 40
      %v1045 = vpop.permute.xlu0 %1044
      %1046 = vrot.lane.b32.xlu0 %v569, 40
      %v1047 = vpop.permute.xlu0 %1046
      %1048 = vrot.lane.b32.xlu0 %v572, 40
      %v1049 = vpop.permute.xlu0 %1048
      %1050 = vrot.lane.b32.xlu0 %v574, 40
      %v1051 = vpop.permute.xlu0 %1050
      %1052 = vrot.lane.b32.xlu0 %v577, 40
      %v1053 = vpop.permute.xlu0 %1052
      %1054 = vrot.lane.b32.xlu0 %v579, 40
      %v1055 = vpop.permute.xlu0 %1054
      %1056 = vrot.lane.b32.xlu0 %v582, 40
      %v1057 = vpop.permute.xlu0 %1056
      %1058 = vrot.lane.b32.xlu0 %v584, 40
      %v1059 = vpop.permute.xlu0 %1058
      %1060 = vrot.lane.b32.xlu0 %v587, 40
      %v1061 = vpop.permute.xlu0 %1060
      %1062 = vrot.lane.b32.xlu0 %v589, 40
      %v1063 = vpop.permute.xlu0 %1062
      %1064 = vrot.lane.b32.xlu0 %v592, 40
      %v1065 = vpop.permute.xlu0 %1064
      %1066 = vrot.lane.b32.xlu0 %v594, 40
      %v1067 = vpop.permute.xlu0 %1066
      %1068 = vrot.lane.b32.xlu0 %v597, 40
      %v1069 = vpop.permute.xlu0 %1068
      %1070 = vrot.lane.b32.xlu0 %v599, 40
      %v1071 = vpop.permute.xlu0 %1070
      %1072 = vrot.lane.b32.xlu0 %v602, 40
      %v1073 = vpop.permute.xlu0 %1072
      %1074 = vrot.lane.b32.xlu0 %v604, 40
      %v1075 = vpop.permute.xlu0 %1074
      %1076 = vrot.lane.b32.xlu0 %v607, 40
      %v1077 = vpop.permute.xlu0 %1076
      %1078 = vrot.lane.b32.xlu0 %v609, 40
      %v1079 = vpop.permute.xlu0 %1078
      %1080 = vrot.lane.b32.xlu0 %v620, 40
      %v1081 = vpop.permute.xlu0 %1080
      %1082 = vrot.lane.b32.xlu0 %v622, 40
      %v1083 = vpop.permute.xlu0 %1082
      %1116 = vrot.lane.b32.xlu0 %v352, 48
      %v1117 = vpop.permute.xlu0 %1116
      %1118 = vrot.lane.b32.xlu0 %v353, 48
      %v1119 = vpop.permute.xlu0 %1118
      %1120 = vrot.lane.b32.xlu0 %v355, 48
      %v1121 = vpop.permute.xlu0 %1120
      %1122 = vrot.lane.b32.xlu0 %v356, 48
      %v1123 = vpop.permute.xlu0 %1122
      %1124 = vrot.lane.b32.xlu0 %v358, 48
      %v1125 = vpop.permute.xlu0 %1124
      %1126 = vrot.lane.b32.xlu0 %v359, 48
      %v1127 = vpop.permute.xlu0 %1126
      %1128 = vrot.lane.b32.xlu0 %v361, 48
      %v1129 = vpop.permute.xlu0 %1128
      %1130 = vrot.lane.b32.xlu0 %v362, 48
      %v1131 = vpop.permute.xlu0 %1130
      %1132 = vrot.lane.b32.xlu0 %v364, 48
      %v1133 = vpop.permute.xlu0 %1132
      %1134 = vrot.lane.b32.xlu0 %v365, 48
      %v1135 = vpop.permute.xlu0 %1134
      %1136 = vrot.lane.b32.xlu0 %v367, 48
      %v1137 = vpop.permute.xlu0 %1136
      %1138 = vrot.lane.b32.xlu0 %v368, 48
      %v1139 = vpop.permute.xlu0 %1138
      %1140 = vrot.lane.b32.xlu0 %v370, 48
      %v1141 = vpop.permute.xlu0 %1140
      %1142 = vrot.lane.b32.xlu0 %v371, 48
      %v1143 = vpop.permute.xlu0 %1142
      %1144 = vrot.lane.b32.xlu0 %v373, 48
      %v1145 = vpop.permute.xlu0 %1144
      %1146 = vrot.lane.b32.xlu0 %v374, 48
      %v1147 = vpop.permute.xlu0 %1146
      %1148 = vrot.lane.b32.xlu0 %v376, 48
      %v1149 = vpop.permute.xlu0 %1148
      %1150 = vrot.lane.b32.xlu0 %v377, 48
      %v1151 = vpop.permute.xlu0 %1150
      %1152 = vrot.lane.b32.xlu0 %v379, 48
      %v1153 = vpop.permute.xlu0 %1152
      %1154 = vrot.lane.b32.xlu0 %v380, 48
      %v1155 = vpop.permute.xlu0 %1154
      %1156 = vrot.lane.b32.xlu0 %v382, 48
      %v1157 = vpop.permute.xlu0 %1156
      %1158 = vrot.lane.b32.xlu0 %v383, 48
      %v1159 = vpop.permute.xlu0 %1158
      %1160 = vrot.lane.b32.xlu0 %v385, 48
      %v1161 = vpop.permute.xlu0 %1160
      %1162 = vrot.lane.b32.xlu0 %v386, 48
      %v1163 = vpop.permute.xlu0 %1162
      %1164 = vrot.lane.b32.xlu0 %v388, 48
      %v1165 = vpop.permute.xlu0 %1164
      %1166 = vrot.lane.b32.xlu0 %v389, 48
      %v1167 = vpop.permute.xlu0 %1166
      %1168 = vrot.lane.b32.xlu0 %v391, 48
      %v1169 = vpop.permute.xlu0 %1168
      %1170 = vrot.lane.b32.xlu0 %v392, 48
      %v1171 = vpop.permute.xlu0 %1170
      %1172 = vrot.lane.b32.xlu0 %v394, 48
      %v1173 = vpop.permute.xlu0 %1172
      %1174 = vrot.lane.b32.xlu0 %v395, 48
      %v1175 = vpop.permute.xlu0 %1174
      %1176 = vrot.lane.b32.xlu0 %v397, 48
      %v1177 = vpop.permute.xlu0 %1176
      %1178 = vrot.lane.b32.xlu0 %v398, 48
      %v1179 = vpop.permute.xlu0 %1178
      %1212 = vrot.lane.b32.xlu0 %v461, 56
      %v1213 = vpop.permute.xlu0 %1212
      %1214 = vrot.lane.b32.xlu0 %v463, 56
      %v1215 = vpop.permute.xlu0 %1214
      %1216 = vrot.lane.b32.xlu0 %v466, 56
      %v1217 = vpop.permute.xlu0 %1216
      %1218 = vrot.lane.b32.xlu0 %v468, 56
      %v1219 = vpop.permute.xlu0 %1218
      %1220 = vrot.lane.b32.xlu0 %v471, 56
      %v1221 = vpop.permute.xlu0 %1220
      %1222 = vrot.lane.b32.xlu0 %v473, 56
      %v1223 = vpop.permute.xlu0 %1222
      %1224 = vrot.lane.b32.xlu0 %v476, 56
      %v1225 = vpop.permute.xlu0 %1224
      %1226 = vrot.lane.b32.xlu0 %v478, 56
      %v1227 = vpop.permute.xlu0 %1226
      %1228 = vrot.lane.b32.xlu0 %v481, 56
      %v1229 = vpop.permute.xlu0 %1228
      %1230 = vrot.lane.b32.xlu0 %v483, 56
      %v1231 = vpop.permute.xlu0 %1230
      %1232 = vrot.lane.b32.xlu0 %v486, 56
      %v1233 = vpop.permute.xlu0 %1232
      %1234 = vrot.lane.b32.xlu0 %v488, 56
      %v1235 = vpop.permute.xlu0 %1234
      %1236 = vrot.lane.b32.xlu0 %v491, 56
      %v1237 = vpop.permute.xlu0 %1236
      %1238 = vrot.lane.b32.xlu0 %v493, 56
      %v1239 = vpop.permute.xlu0 %1238
      %1240 = vrot.lane.b32.xlu0 %v496, 56
      %v1241 = vpop.permute.xlu0 %1240
      %1242 = vrot.lane.b32.xlu0 %v498, 56
      %v1243 = vpop.permute.xlu0 %1242
      %1244 = vrot.lane.b32.xlu0 %v501, 56
      %v1245 = vpop.permute.xlu0 %1244
      %1246 = vrot.lane.b32.xlu0 %v503, 56
      %v1247 = vpop.permute.xlu0 %1246
      %1248 = vrot.lane.b32.xlu0 %v506, 56
      %v1249 = vpop.permute.xlu0 %1248
      %1250 = vrot.lane.b32.xlu0 %v508, 56
      %v1251 = vpop.permute.xlu0 %1250
      %1252 = vrot.lane.b32.xlu0 %v511, 56
      %v1253 = vpop.permute.xlu0 %1252
      %1254 = vrot.lane.b32.xlu0 %v513, 56
      %v1255 = vpop.permute.xlu0 %1254
      %1256 = vrot.lane.b32.xlu0 %v516, 56
      %v1257 = vpop.permute.xlu0 %1256
      %1258 = vrot.lane.b32.xlu0 %v518, 56
      %v1259 = vpop.permute.xlu0 %1258
      %1260 = vrot.lane.b32.xlu0 %v521, 56
      %v1261 = vpop.permute.xlu0 %1260
      %1262 = vrot.lane.b32.xlu0 %v523, 56
      %v1263 = vpop.permute.xlu0 %1262
      %1264 = vrot.lane.b32.xlu0 %v526, 56
      %v1265 = vpop.permute.xlu0 %1264
      %1266 = vrot.lane.b32.xlu0 %v528, 56
      %v1267 = vpop.permute.xlu0 %1266
      %1268 = vrot.lane.b32.xlu0 %v615, 56
      %v1269 = vpop.permute.xlu0 %1268
      %1270 = vrot.lane.b32.xlu0 %v617, 56
      %v1271 = vpop.permute.xlu0 %1270
      %1272 = vrot.lane.b32.xlu0 %v628, 56
      %v1273 = vpop.permute.xlu0 %1272
      %1274 = vrot.lane.b32.xlu0 %v630, 56
      %v1275 = vpop.permute.xlu0 %1274
      %1308 = vrot.lane.b32.xlu0 %v542, 64
      %v1309 = vpop.permute.xlu0 %1308
      %1310 = vrot.lane.b32.xlu0 %v544, 64
      %v1311 = vpop.permute.xlu0 %1310
      %1312 = vrot.lane.b32.xlu0 %v547, 64
      %v1313 = vpop.permute.xlu0 %1312
      %1314 = vrot.lane.b32.xlu0 %v549, 64
      %v1315 = vpop.permute.xlu0 %1314
      %1316 = vrot.lane.b32.xlu0 %v552, 64
      %v1317 = vpop.permute.xlu0 %1316
      %1318 = vrot.lane.b32.xlu0 %v554, 64
      %v1319 = vpop.permute.xlu0 %1318
      %1320 = vrot.lane.b32.xlu0 %v557, 64
      %v1321 = vpop.permute.xlu0 %1320
      %1322 = vrot.lane.b32.xlu0 %v559, 64
      %v1323 = vpop.permute.xlu0 %1322
      %1324 = vrot.lane.b32.xlu0 %v562, 64
      %v1325 = vpop.permute.xlu0 %1324
      %1326 = vrot.lane.b32.xlu0 %v564, 64
      %v1327 = vpop.permute.xlu0 %1326
      %1328 = vrot.lane.b32.xlu0 %v567, 64
      %v1329 = vpop.permute.xlu0 %1328
      %1330 = vrot.lane.b32.xlu0 %v569, 64
      %v1331 = vpop.permute.xlu0 %1330
      %1332 = vrot.lane.b32.xlu0 %v572, 64
      %v1333 = vpop.permute.xlu0 %1332
      %1334 = vrot.lane.b32.xlu0 %v574, 64
      %v1335 = vpop.permute.xlu0 %1334
      %1336 = vrot.lane.b32.xlu0 %v577, 64
      %v1337 = vpop.permute.xlu0 %1336
      %1338 = vrot.lane.b32.xlu0 %v579, 64
      %v1339 = vpop.permute.xlu0 %1338
      %1340 = vrot.lane.b32.xlu0 %v582, 64
      %v1341 = vpop.permute.xlu0 %1340
      %1342 = vrot.lane.b32.xlu0 %v584, 64
      %v1343 = vpop.permute.xlu0 %1342
      %1344 = vrot.lane.b32.xlu0 %v587, 64
      %v1345 = vpop.permute.xlu0 %1344
      %1346 = vrot.lane.b32.xlu0 %v589, 64
      %v1347 = vpop.permute.xlu0 %1346
      %1348 = vrot.lane.b32.xlu0 %v592, 64
      %v1349 = vpop.permute.xlu0 %1348
      %1350 = vrot.lane.b32.xlu0 %v594, 64
      %v1351 = vpop.permute.xlu0 %1350
      %1352 = vrot.lane.b32.xlu0 %v597, 64
      %v1353 = vpop.permute.xlu0 %1352
      %1354 = vrot.lane.b32.xlu0 %v599, 64
      %v1355 = vpop.permute.xlu0 %1354
      %1356 = vrot.lane.b32.xlu0 %v602, 64
      %v1357 = vpop.permute.xlu0 %1356
      %1358 = vrot.lane.b32.xlu0 %v604, 64
      %v1359 = vpop.permute.xlu0 %1358
      %1360 = vrot.lane.b32.xlu0 %v607, 64
      %v1361 = vpop.permute.xlu0 %1360
      %1362 = vrot.lane.b32.xlu0 %v609, 64
      %v1363 = vpop.permute.xlu0 %1362
      %1364 = vrot.lane.b32.xlu0 %v620, 64
      %v1365 = vpop.permute.xlu0 %1364
      %1366 = vrot.lane.b32.xlu0 %v622, 64
      %v1367 = vpop.permute.xlu0 %1366
      %1368 = vrot.lane.b32.xlu0 %v633, 64
      %v1369 = vpop.permute.xlu0 %1368
      %1370 = vrot.lane.b32.xlu0 %v635, 64
      %v1371 = vpop.permute.xlu0 %1370
      %v1404 = vsel %vm225, %v346, %v637
      %v1405 = vsel %vm225, %v347, %v639
      %v1406 = vsel %vm225, %v349, %v641
      %v1407 = vsel %vm225, %v350, %v643
      %v1408 = vsel %vm225, %v352, %v645
      %v1409 = vsel %vm225, %v353, %v647
      %v1410 = vsel %vm225, %v355, %v649
      %v1411 = vsel %vm225, %v356, %v651
      %v1412 = vsel %vm225, %v358, %v653
      %v1413 = vsel %vm225, %v359, %v655
      %v1414 = vsel %vm225, %v361, %v657
      %v1415 = vsel %vm225, %v362, %v659
      %v1416 = vsel %vm225, %v364, %v661
      %v1417 = vsel %vm225, %v365, %v663
      %v1418 = vsel %vm225, %v367, %v665
      %v1419 = vsel %vm225, %v368, %v667
      %v1420 = vsel %vm225, %v370, %v669
      %v1421 = vsel %vm225, %v371, %v671
      %v1422 = vsel %vm225, %v373, %v673
      %v1423 = vsel %vm225, %v374, %v675
      %v1424 = vsel %vm225, %v376, %v677
      %v1425 = vsel %vm225, %v377, %v679
      %v1426 = vsel %vm225, %v379, %v681
      %v1427 = vsel %vm225, %v380, %v683
      %v1428 = vsel %vm225, %v382, %v685
      %v1429 = vsel %vm225, %v383, %v687
      %v1430 = vsel %vm225, %v385, %v689
      %v1431 = vsel %vm225, %v386, %v691
      %v1432 = vsel %vm225, %v388, %v693
      %v1433 = vsel %vm225, %v389, %v695
      %v1434 = vsel %vm225, %v391, %v697
      %v1435 = vsel %vm225, %v392, %v699
      %vm1436 = vcmask 130048
      %v1437 = vsel %vm1436, %v1404, %v733
      %v1438 = vsel %vm1436, %v1405, %v735
      %v1439 = vsel %vm1436, %v1406, %v737
      %v1440 = vsel %vm1436, %v1407, %v739
      %v1441 = vsel %vm1436, %v1408, %v741
      %v1442 = vsel %vm1436, %v1409, %v743
      %v1443 = vsel %vm1436, %v1410, %v745
      %v1444 = vsel %vm1436, %v1411, %v747
      %v1445 = vsel %vm1436, %v1412, %v749
      %v1446 = vsel %vm1436, %v1413, %v751
      %v1447 = vsel %vm1436, %v1414, %v753
      %v1448 = vsel %vm1436, %v1415, %v755
      %v1449 = vsel %vm1436, %v1416, %v757
      %v1450 = vsel %vm1436, %v1417, %v759
      %v1451 = vsel %vm1436, %v1418, %v761
      %v1452 = vsel %vm1436, %v1419, %v763
      %v1453 = vsel %vm1436, %v1420, %v765
      %v1454 = vsel %vm1436, %v1421, %v767
      %v1455 = vsel %vm1436, %v1422, %v769
      %v1456 = vsel %vm1436, %v1423, %v771
      %v1457 = vsel %vm1436, %v1424, %v773
      %v1458 = vsel %vm1436, %v1425, %v775
      %v1459 = vsel %vm1436, %v1426, %v777
      %v1460 = vsel %vm1436, %v1427, %v779
      %v1461 = vsel %vm1436, %v1428, %v781
      %v1462 = vsel %vm1436, %v1429, %v783
      %v1463 = vsel %vm1436, %v1430, %v785
      %v1464 = vsel %vm1436, %v1431, %v787
      %v1465 = vsel %vm1436, %v1432, %v789
      %v1466 = vsel %vm1436, %v1433, %v791
      %v1467 = vsel %vm1436, %v1434, %v793
      %v1468 = vsel %vm1436, %v1435, %v795
      %vm1469 = vcmask 195584
      %v1470 = vsel %vm1469, %v1437, %v829
      %v1471 = vsel %vm1469, %v1438, %v831
      %v1472 = vsel %vm1469, %v1439, %v833
      %v1473 = vsel %vm1469, %v1440, %v835
      %v1474 = vsel %vm1469, %v1441, %v837
      %v1475 = vsel %vm1469, %v1442, %v839
      %v1476 = vsel %vm1469, %v1443, %v841
      %v1477 = vsel %vm1469, %v1444, %v843
      %v1478 = vsel %vm1469, %v1445, %v845
      %v1479 = vsel %vm1469, %v1446, %v847
      %v1480 = vsel %vm1469, %v1447, %v849
      %v1481 = vsel %vm1469, %v1448, %v851
      %v1482 = vsel %vm1469, %v1449, %v853
      %v1483 = vsel %vm1469, %v1450, %v855
      %v1484 = vsel %vm1469, %v1451, %v857
      %v1485 = vsel %vm1469, %v1452, %v859
      %v1486 = vsel %vm1469, %v1453, %v861
      %v1487 = vsel %vm1469, %v1454, %v863
      %v1488 = vsel %vm1469, %v1455, %v865
      %v1489 = vsel %vm1469, %v1456, %v867
      %v1490 = vsel %vm1469, %v1457, %v869
      %v1491 = vsel %vm1469, %v1458, %v871
      %v1492 = vsel %vm1469, %v1459, %v873
      %v1493 = vsel %vm1469, %v1460, %v875
      %v1494 = vsel %vm1469, %v1461, %v877
      %v1495 = vsel %vm1469, %v1462, %v879
      %v1496 = vsel %vm1469, %v1463, %v881
      %v1497 = vsel %vm1469, %v1464, %v883
      %v1498 = vsel %vm1469, %v1465, %v885
      %v1499 = vsel %vm1469, %v1466, %v887
      %v1500 = vsel %vm1469, %v1467, %v889
      %v1501 = vsel %vm1469, %v1468, %v891
      %vm1502 = vcmask 261120
      %v1503 = vsel %vm1502, %v1470, %v925
      %v1504 = vsel %vm1502, %v1471, %v927
      %v1505 = vsel %vm1502, %v1472, %v929
      %v1506 = vsel %vm1502, %v1473, %v931
      %v1507 = vsel %vm1502, %v1474, %v933
      %v1508 = vsel %vm1502, %v1475, %v935
      %v1509 = vsel %vm1502, %v1476, %v937
      %v1510 = vsel %vm1502, %v1477, %v939
      %v1511 = vsel %vm1502, %v1478, %v941
      %v1512 = vsel %vm1502, %v1479, %v943
      %v1513 = vsel %vm1502, %v1480, %v945
      %v1514 = vsel %vm1502, %v1481, %v947
      %v1515 = vsel %vm1502, %v1482, %v949
      %v1516 = vsel %vm1502, %v1483, %v951
      %v1517 = vsel %vm1502, %v1484, %v953
      %v1518 = vsel %vm1502, %v1485, %v955
      %v1519 = vsel %vm1502, %v1486, %v957
      %v1520 = vsel %vm1502, %v1487, %v959
      %v1521 = vsel %vm1502, %v1488, %v961
      %v1522 = vsel %vm1502, %v1489, %v963
      %v1523 = vsel %vm1502, %v1490, %v965
      %v1524 = vsel %vm1502, %v1491, %v967
      %v1525 = vsel %vm1502, %v1492, %v969
      %v1526 = vsel %vm1502, %v1493, %v971
      %v1527 = vsel %vm1502, %v1494, %v973
      %v1528 = vsel %vm1502, %v1495, %v975
      %v1529 = vsel %vm1502, %v1496, %v977
      %v1530 = vsel %vm1502, %v1497, %v979
      %v1531 = vsel %vm1502, %v1498, %v981
      %v1532 = vsel %vm1502, %v1499, %v983
      %v1533 = vsel %vm1502, %v1500, %v985
      %v1534 = vsel %vm1502, %v1501, %v987
      %vm1535 = vcmask 326656
      %v1536 = vsel %vm1535, %v1503, %v1021
      %v1537 = vsel %vm1535, %v1504, %v1023
      %v1538 = vsel %vm1535, %v1505, %v1025
      %v1539 = vsel %vm1535, %v1506, %v1027
      %v1540 = vsel %vm1535, %v1507, %v1029
      %v1541 = vsel %vm1535, %v1508, %v1031
      %v1542 = vsel %vm1535, %v1509, %v1033
      %v1543 = vsel %vm1535, %v1510, %v1035
      %v1544 = vsel %vm1535, %v1511, %v1037
      %v1545 = vsel %vm1535, %v1512, %v1039
      %v1546 = vsel %vm1535, %v1513, %v1041
      %v1547 = vsel %vm1535, %v1514, %v1043
      %v1548 = vsel %vm1535, %v1515, %v1045
      %v1549 = vsel %vm1535, %v1516, %v1047
      %v1550 = vsel %vm1535, %v1517, %v1049
      %v1551 = vsel %vm1535, %v1518, %v1051
      %v1552 = vsel %vm1535, %v1519, %v1053
      %v1553 = vsel %vm1535, %v1520, %v1055
      %v1554 = vsel %vm1535, %v1521, %v1057
      %v1555 = vsel %vm1535, %v1522, %v1059
      %v1556 = vsel %vm1535, %v1523, %v1061
      %v1557 = vsel %vm1535, %v1524, %v1063
      %v1558 = vsel %vm1535, %v1525, %v1065
      %v1559 = vsel %vm1535, %v1526, %v1067
      %v1560 = vsel %vm1535, %v1527, %v1069
      %v1561 = vsel %vm1535, %v1528, %v1071
      %v1562 = vsel %vm1535, %v1529, %v1073
      %v1563 = vsel %vm1535, %v1530, %v1075
      %v1564 = vsel %vm1535, %v1531, %v1077
      %v1565 = vsel %vm1535, %v1532, %v1079
      %v1566 = vsel %vm1535, %v1533, %v1081
      %v1567 = vsel %vm1535, %v1534, %v1083
      %vm1568 = vcmask 392192
      %v1569 = vsel %vm1568, %v1536, %v1117
      %v1570 = vsel %vm1568, %v1537, %v1119
      %v1571 = vsel %vm1568, %v1538, %v1121
      %v1572 = vsel %vm1568, %v1539, %v1123
      %v1573 = vsel %vm1568, %v1540, %v1125
      %v1574 = vsel %vm1568, %v1541, %v1127
      %v1575 = vsel %vm1568, %v1542, %v1129
      %v1576 = vsel %vm1568, %v1543, %v1131
      %v1577 = vsel %vm1568, %v1544, %v1133
      %v1578 = vsel %vm1568, %v1545, %v1135
      %v1579 = vsel %vm1568, %v1546, %v1137
      %v1580 = vsel %vm1568, %v1547, %v1139
      %v1581 = vsel %vm1568, %v1548, %v1141
      %v1582 = vsel %vm1568, %v1549, %v1143
      %v1583 = vsel %vm1568, %v1550, %v1145
      %v1584 = vsel %vm1568, %v1551, %v1147
      %v1585 = vsel %vm1568, %v1552, %v1149
      %v1586 = vsel %vm1568, %v1553, %v1151
      %v1587 = vsel %vm1568, %v1554, %v1153
      %v1588 = vsel %vm1568, %v1555, %v1155
      %v1589 = vsel %vm1568, %v1556, %v1157
      %v1590 = vsel %vm1568, %v1557, %v1159
      %v1591 = vsel %vm1568, %v1558, %v1161
      %v1592 = vsel %vm1568, %v1559, %v1163
      %v1593 = vsel %vm1568, %v1560, %v1165
      %v1594 = vsel %vm1568, %v1561, %v1167
      %v1595 = vsel %vm1568, %v1562, %v1169
      %v1596 = vsel %vm1568, %v1563, %v1171
      %v1597 = vsel %vm1568, %v1564, %v1173
      %v1598 = vsel %vm1568, %v1565, %v1175
      %v1599 = vsel %vm1568, %v1566, %v1177
      %v1600 = vsel %vm1568, %v1567, %v1179
      %vm1601 = vcmask 457728
      %v1602 = vsel %vm1601, %v1569, %v1213
      %v1603 = vsel %vm1601, %v1570, %v1215
      %v1604 = vsel %vm1601, %v1571, %v1217
      %v1605 = vsel %vm1601, %v1572, %v1219
      %v1606 = vsel %vm1601, %v1573, %v1221
      %v1607 = vsel %vm1601, %v1574, %v1223
      %v1608 = vsel %vm1601, %v1575, %v1225
      %v1609 = vsel %vm1601, %v1576, %v1227
      %v1610 = vsel %vm1601, %v1577, %v1229
      %v1611 = vsel %vm1601, %v1578, %v1231
      %v1612 = vsel %vm1601, %v1579, %v1233
      %v1613 = vsel %vm1601, %v1580, %v1235
      %v1614 = vsel %vm1601, %v1581, %v1237
      %v1615 = vsel %vm1601, %v1582, %v1239
      %v1616 = vsel %vm1601, %v1583, %v1241
      %v1617 = vsel %vm1601, %v1584, %v1243
      %v1618 = vsel %vm1601, %v1585, %v1245
      %v1619 = vsel %vm1601, %v1586, %v1247
      %v1620 = vsel %vm1601, %v1587, %v1249
      %v1621 = vsel %vm1601, %v1588, %v1251
      %v1622 = vsel %vm1601, %v1589, %v1253
      %v1623 = vsel %vm1601, %v1590, %v1255
      %v1624 = vsel %vm1601, %v1591, %v1257
      %v1625 = vsel %vm1601, %v1592, %v1259
      %v1626 = vsel %vm1601, %v1593, %v1261
      %v1627 = vsel %vm1601, %v1594, %v1263
      %v1628 = vsel %vm1601, %v1595, %v1265
      %v1629 = vsel %vm1601, %v1596, %v1267
      %v1630 = vsel %vm1601, %v1597, %v1269
      %v1631 = vsel %vm1601, %v1598, %v1271
      %v1632 = vsel %vm1601, %v1599, %v1273
      %v1633 = vsel %vm1601, %v1600, %v1275
      %vm1634 = vcmask 523264
      %v1635 = vsel %vm1634, %v1602, %v1309
      %v1636 = vsel %vm1634, %v1603, %v1311
      %v1637 = vsel %vm1634, %v1604, %v1313
      %v1638 = vsel %vm1634, %v1605, %v1315
      %v1639 = vsel %vm1634, %v1606, %v1317
      %v1640 = vsel %vm1634, %v1607, %v1319
      %v1641 = vsel %vm1634, %v1608, %v1321
      %v1642 = vsel %vm1634, %v1609, %v1323
      %v1643 = vsel %vm1634, %v1610, %v1325
      %v1644 = vsel %vm1634, %v1611, %v1327
      %v1645 = vsel %vm1634, %v1612, %v1329
      %v1646 = vsel %vm1634, %v1613, %v1331
      %v1647 = vsel %vm1634, %v1614, %v1333
      %v1648 = vsel %vm1634, %v1615, %v1335
      %v1649 = vsel %vm1634, %v1616, %v1337
      %v1650 = vsel %vm1634, %v1617, %v1339
      %v1651 = vsel %vm1634, %v1618, %v1341
      %v1652 = vsel %vm1634, %v1619, %v1343
      %v1653 = vsel %vm1634, %v1620, %v1345
      %v1654 = vsel %vm1634, %v1621, %v1347
      %v1655 = vsel %vm1634, %v1622, %v1349
      %v1656 = vsel %vm1634, %v1623, %v1351
      %v1657 = vsel %vm1634, %v1624, %v1353
      %v1658 = vsel %vm1634, %v1625, %v1355
      %v1659 = vsel %vm1634, %v1626, %v1357
      %v1660 = vsel %vm1634, %v1627, %v1359
      %v1661 = vsel %vm1634, %v1628, %v1361
      %v1662 = vsel %vm1634, %v1629, %v1363
      %v1663 = vsel %vm1634, %v1630, %v1365
      %v1664 = vsel %vm1634, %v1631, %v1367
      %v1665 = vsel %vm1634, %v1632, %v1369
      %v1666 = vsel %vm1634, %v1633, %v1371
      %v1667 = vld [vmem:[%s1] sm:$0xff]
      %v1668 = vld [vmem:[%s1 + $0x8] sm:$0xff]
      %v1669 = vld [vmem:[%s1 + $0x10] sm:$0xff]
      %v1670 = vld [vmem:[%s1 + $0x18] sm:$0xff]
      %v1671 = vld [vmem:[%s1 + $0x20] sm:$0xff]
      %v1672 = vld [vmem:[%s1 + $0x28] sm:$0xff]
      %v1673 = vld [vmem:[%s1 + $0x30] sm:$0xff]
      %v1674 = vld [vmem:[%s1 + $0x38] sm:$0xff]
      %v1675 = vld [vmem:[%s1 + $0x40] sm:$0xff]
      %v1676 = vld [vmem:[%s2] sm:$0x1]
      %v1678 = vlaneseq
      %v1679 = vshrl.u32 %v1678, 7
      %v1680 = vsub.s32 0, %v1679
      %v1681 = vrot.slane %v1676, %v1680
      %vm1683 = vcmask 588800
      %v1685 = vsel %vm1683, %v1635, 0
      %v1688 = vsel %vm1683, %v1636, 0
      %v1691 = vsel %vm1683, %v1637, 0
      %v1694 = vsel %vm1683, %v1638, 0
      %v1697 = vsel %vm1683, %v1639, 0
      %v1700 = vsel %vm1683, %v1640, 0
      %v1703 = vsel %vm1683, %v1641, 0
      %v1706 = vsel %vm1683, %v1642, 0
      %v1709 = vsel %vm1683, %v1643, 0
      %v1712 = vsel %vm1683, %v1644, 0
      %v1715 = vsel %vm1683, %v1645, 0
      %v1718 = vsel %vm1683, %v1646, 0
      %v1721 = vsel %vm1683, %v1647, 0
      %v1724 = vsel %vm1683, %v1648, 0
      %v1727 = vsel %vm1683, %v1649, 0
      %v1730 = vsel %vm1683, %v1650, 0
      %v1733 = vsel %vm1683, %v1651, 0
      %v1736 = vsel %vm1683, %v1652, 0
      %v1739 = vsel %vm1683, %v1653, 0
      %v1742 = vsel %vm1683, %v1654, 0
      %v1745 = vsel %vm1683, %v1655, 0
      %v1748 = vsel %vm1683, %v1656, 0
      %v1751 = vsel %vm1683, %v1657, 0
      %v1754 = vsel %vm1683, %v1658, 0
      %v1757 = vsel %vm1683, %v1659, 0
      %v1760 = vsel %vm1683, %v1660, 0
      %v1763 = vsel %vm1683, %v1661, 0
      %v1766 = vsel %vm1683, %v1662, 0
      %v1769 = vsel %vm1683, %v1663, 0
      %v1772 = vsel %vm1683, %v1664, 0
      %v1775 = vsel %vm1683, %v1665, 0
      %v1778 = vsel %vm1683, %v1666, 0
      %1780 = vmatprep.subr.mxu0 0.0
      %1781 = vmatpush1.msra.mxu0 %v1667
      %1782 = vmatprep.subr.mxu0 0.0
      %1783 = vmatpush1.msra.mxu0 %v1668
      %1784 = vmatprep.subr.mxu0 0.0
      %1785 = vmatpush1.msra.mxu0 %v1669
      %1786 = vmatprep.subr.mxu0 0.0
      %1787 = vmatpush1.msra.mxu0 %v1670
      %1788 = vmatprep.subr.mxu0 0.0
      %1789 = vmatpush1.msra.mxu0 %v1671
      %1790 = vmatprep.subr.mxu0 0.0
      %1791 = vmatpush1.msra.mxu0 %v1672
      %1792 = vmatprep.subr.mxu0 0.0
      %1793 = vmatpush1.msra.mxu0 %v1673
      %1794 = vmatprep.subr.mxu0 0.0
      %1795 = vmatpush1.msra.mxu0 %v1674
      %1796 = vmatprep.subr.mxu0 0.0
      %1797 = vmatpush1.msra.mxu0 %v1675
      %1798 = vmatprep.subr.mxu0 0.0
      %1799 = vmatpush1.msra.mxu0 0.0
      %1800 = vmatprep.subr.mxu0 0.0
      %1801 = vmatpush1.msra.mxu0 0.0
      %1802 = vmatprep.subr.mxu0 0.0
      %1803 = vmatpush1.msra.mxu0 0.0
      %1804 = vmatprep.subr.mxu0 0.0
      %1805 = vmatpush1.msra.mxu0 0.0
      %1806 = vmatprep.subr.mxu0 0.0
      %1807 = vmatpush1.msra.mxu0 0.0
      %1808 = vmatprep.subr.mxu0 0.0
      %1809 = vmatpush1.msra.mxu0 0.0
      %1810 = vmatprep.subr.mxu0 0.0
      %1811 = vmatpush1.msra.mxu0 0.0
      %1812 = vmatprep.subr.mxu0 0.0
      %1813 = vmatpush1.msra.mxu0 0.0
      %1814 = vmatprep.subr.mxu0 0.0
      %1815 = vmatpush1.msra.mxu0 0.0
      %1816 = vmatprep.subr.mxu0 0.0
      %1817 = vmatpush1.msra.mxu0 0.0
      %1818 = vmatprep.subr.mxu0 0.0
      %1819 = vmatpush1.msra.mxu0 0.0
      %1820 = vmatprep.subr.mxu0 0.0
      %1821 = vmatpush1.msra.mxu0 0.0
      %1822 = vmatprep.subr.mxu0 0.0
      %1823 = vmatpush1.msra.mxu0 0.0
      %1824 = vmatprep.subr.mxu0 0.0
      %1825 = vmatpush1.msra.mxu0 0.0
      %1826 = vmatprep.subr.mxu0 0.0
      %1827 = vmatpush1.msra.mxu0 0.0
      %1828 = vmatprep.subr.mxu0 0.0
      %1829 = vmatpush1.msra.mxu0 0.0
      %1830 = vmatprep.subr.mxu0 0.0
      %1831 = vmatpush1.msra.mxu0 0.0
      %1832 = vmatprep.subr.mxu0 0.0
      %1833 = vmatpush1.msra.mxu0 0.0
      %1834 = vmatprep.subr.mxu0 0.0
      %1835 = vmatpush1.msra.mxu0 0.0
      %1836 = vmatprep.subr.mxu0 0.0
      %1837 = vmatpush1.msra.mxu0 0.0
      %1838 = vmatprep.subr.mxu0 0.0
      %1839 = vmatpush1.msra.mxu0 0.0
      %1840 = vmatprep.subr.mxu0 0.0
      %1841 = vmatpush1.msra.mxu0 0.0
      %1842 = vmatprep.subr.mxu0 0.0
      %1843 = vmatpush1.msra.mxu0 0.0
      %1844 = vmatprep.mubr.f32.mxu0 0.0
      %1845 = vmatmul.mubr.f32.gmra.mrb[0].mxu0 %v1685
      %v1846 = vpop.f32.mrb[0].mxu0
      %v1847 = vadd.f32 %v1681, %v1846
      %v1848 = vpop.f32.mrb[0].mxu0
      %1849 = vmatprep.mubr.f32.mxu0 0.0
      %1850 = vmatmul.mubr.f32.gmra.mrb[0].mxu0 %v1688
      %v1851 = vpop.f32.mrb[0].mxu0
      %v1852 = vadd.f32 %v1681, %v1851
      %v1853 = vpop.f32.mrb[0].mxu0
      %1854 = vmatprep.mubr.f32.mxu0 0.0
      %1855 = vmatmul.mubr.f32.gmra.mrb[0].mxu0 %v1691
      %v1856 = vpop.f32.mrb[0].mxu0
      %v1857 = vadd.f32 %v1681, %v1856
      %v1858 = vpop.f32.mrb[0].mxu0
      %1859 = vmatprep.mubr.f32.mxu0 0.0
      %1860 = vmatmul.mubr.f32.gmra.mrb[0].mxu0 %v1694
      %v1861 = vpop.f32.mrb[0].mxu0
      %v1862 = vadd.f32 %v1681, %v1861
      %v1863 = vpop.f32.mrb[0].mxu0
      %1864 = vmatprep.mubr.f32.mxu0 0.0
      %1865 = vmatmul.mubr.f32.gmra.mrb[0].mxu0 %v1697
      %v1866 = vpop.f32.mrb[0].mxu0
      %v1867 = vadd.f32 %v1681, %v1866
      %v1868 = vpop.f32.mrb[0].mxu0
      %1869 = vmatprep.mubr.f32.mxu0 0.0
      %1870 = vmatmul.mubr.f32.gmra.mrb[0].mxu0 %v1700
      %v1871 = vpop.f32.mrb[0].mxu0
      %v1872 = vadd.f32 %v1681, %v1871
      %v1873 = vpop.f32.mrb[0].mxu0
      %1874 = vmatprep.mubr.f32.mxu0 0.0
      %1875 = vmatmul.mubr.f32.gmra.mrb[0].mxu0 %v1703
      %v1876 = vpop.f32.mrb[0].mxu0
      %v1877 = vadd.f32 %v1681, %v1876
      %v1878 = vpop.f32.mrb[0].mxu0
      %1879 = vmatprep.mubr.f32.mxu0 0.0
      %1880 = vmatmul.mubr.f32.gmra.mrb[0].mxu0 %v1706
      %v1881 = vpop.f32.mrb[0].mxu0
      %v1882 = vadd.f32 %v1681, %v1881
      %v1883 = vpop.f32.mrb[0].mxu0
      %1884 = vmatprep.mubr.f32.mxu0 0.0
      %1885 = vmatmul.mubr.f32.gmra.mrb[0].mxu0 %v1709
      %v1886 = vpop.f32.mrb[0].mxu0
      %v1887 = vadd.f32 %v1681, %v1886
      %v1888 = vpop.f32.mrb[0].mxu0
      %1889 = vmatprep.mubr.f32.mxu0 0.0
      %1890 = vmatmul.mubr.f32.gmra.mrb[0].mxu0 %v1712
      %v1891 = vpop.f32.mrb[0].mxu0
      %v1892 = vadd.f32 %v1681, %v1891
      %v1893 = vpop.f32.mrb[0].mxu0
      %1894 = vmatprep.mubr.f32.mxu0 0.0
      %1895 = vmatmul.mubr.f32.gmra.mrb[0].mxu0 %v1715
      %v1896 = vpop.f32.mrb[0].mxu0
      %v1897 = vadd.f32 %v1681, %v1896
      %v1898 = vpop.f32.mrb[0].mxu0
      %1899 = vmatprep.mubr.f32.mxu0 0.0
      %1900 = vmatmul.mubr.f32.gmra.mrb[0].mxu0 %v1718
      %v1901 = vpop.f32.mrb[0].mxu0
      %v1902 = vadd.f32 %v1681, %v1901
      %v1903 = vpop.f32.mrb[0].mxu0
      %1904 = vmatprep.mubr.f32.mxu0 0.0
      %1905 = vmatmul.mubr.f32.gmra.mrb[0].mxu0 %v1721
      %v1906 = vpop.f32.mrb[0].mxu0
      %v1907 = vadd.f32 %v1681, %v1906
      %v1908 = vpop.f32.mrb[0].mxu0
      %1909 = vmatprep.mubr.f32.mxu0 0.0
      %1910 = vmatmul.mubr.f32.gmra.mrb[0].mxu0 %v1724
      %v1911 = vpop.f32.mrb[0].mxu0
      %v1912 = vadd.f32 %v1681, %v1911
      %v1913 = vpop.f32.mrb[0].mxu0
      %1914 = vmatprep.mubr.f32.mxu0 0.0
      %1915 = vmatmul.mubr.f32.gmra.mrb[0].mxu0 %v1727
      %v1916 = vpop.f32.mrb[0].mxu0
      %v1917 = vadd.f32 %v1681, %v1916
      %v1918 = vpop.f32.mrb[0].mxu0
      %1919 = vmatprep.mubr.f32.mxu0 0.0
      %1920 = vmatmul.mubr.f32.gmra.mrb[0].mxu0 %v1730
      %v1921 = vpop.f32.mrb[0].mxu0
      %v1922 = vadd.f32 %v1681, %v1921
      %v1923 = vpop.f32.mrb[0].mxu0
      %1924 = vmatprep.mubr.f32.mxu0 0.0
      %1925 = vmatmul.mubr.f32.gmra.mrb[0].mxu0 %v1733
      %v1926 = vpop.f32.mrb[0].mxu0
      %v1927 = vadd.f32 %v1681, %v1926
      %v1928 = vpop.f32.mrb[0].mxu0
      %1929 = vmatprep.mubr.f32.mxu0 0.0
      %1930 = vmatmul.mubr.f32.gmra.mrb[0].mxu0 %v1736
      %v1931 = vpop.f32.mrb[0].mxu0
      %v1932 = vadd.f32 %v1681, %v1931
      %v1933 = vpop.f32.mrb[0].mxu0
      %1934 = vmatprep.mubr.f32.mxu0 0.0
      %1935 = vmatmul.mubr.f32.gmra.mrb[0].mxu0 %v1739
      %v1936 = vpop.f32.mrb[0].mxu0
      %v1937 = vadd.f32 %v1681, %v1936
      %v1938 = vpop.f32.mrb[0].mxu0
      %1939 = vmatprep.mubr.f32.mxu0 0.0
      %1940 = vmatmul.mubr.f32.gmra.mrb[0].mxu0 %v1742
      %v1941 = vpop.f32.mrb[0].mxu0
      %v1942 = vadd.f32 %v1681, %v1941
      %v1943 = vpop.f32.mrb[0].mxu0
      %1944 = vmatprep.mubr.f32.mxu0 0.0
      %1945 = vmatmul.mubr.f32.gmra.mrb[0].mxu0 %v1745
      %v1946 = vpop.f32.mrb[0].mxu0
      %v1947 = vadd.f32 %v1681, %v1946
      %v1948 = vpop.f32.mrb[0].mxu0
      %1949 = vmatprep.mubr.f32.mxu0 0.0
      %1950 = vmatmul.mubr.f32.gmra.mrb[0].mxu0 %v1748
      %v1951 = vpop.f32.mrb[0].mxu0
      %v1952 = vadd.f32 %v1681, %v1951
      %v1953 = vpop.f32.mrb[0].mxu0
      %1954 = vmatprep.mubr.f32.mxu0 0.0
      %1955 = vmatmul.mubr.f32.gmra.mrb[0].mxu0 %v1751
      %v1956 = vpop.f32.mrb[0].mxu0
      %v1957 = vadd.f32 %v1681, %v1956
      %v1958 = vpop.f32.mrb[0].mxu0
      %1959 = vmatprep.mubr.f32.mxu0 0.0
      %1960 = vmatmul.mubr.f32.gmra.mrb[0].mxu0 %v1754
      %v1961 = vpop.f32.mrb[0].mxu0
      %v1962 = vadd.f32 %v1681, %v1961
      %v1963 = vpop.f32.mrb[0].mxu0
      %1964 = vmatprep.mubr.f32.mxu0 0.0
      %1965 = vmatmul.mubr.f32.gmra.mrb[0].mxu0 %v1757
      %v1966 = vpop.f32.mrb[0].mxu0
      %v1967 = vadd.f32 %v1681, %v1966
      %v1968 = vpop.f32.mrb[0].mxu0
      %1969 = vmatprep.mubr.f32.mxu0 0.0
      %1970 = vmatmul.mubr.f32.gmra.mrb[0].mxu0 %v1760
      %v1971 = vpop.f32.mrb[0].mxu0
      %v1972 = vadd.f32 %v1681, %v1971
      %v1973 = vpop.f32.mrb[0].mxu0
      %1974 = vmatprep.mubr.f32.mxu0 0.0
      %1975 = vmatmul.mubr.f32.gmra.mrb[0].mxu0 %v1763
      %v1976 = vpop.f32.mrb[0].mxu0
      %v1977 = vadd.f32 %v1681, %v1976
      %v1978 = vpop.f32.mrb[0].mxu0
      %1979 = vmatprep.mubr.f32.mxu0 0.0
      %1980 = vmatmul.mubr.f32.gmra.mrb[0].mxu0 %v1766
      %v1981 = vpop.f32.mrb[0].mxu0
      %v1982 = vadd.f32 %v1681, %v1981
      %v1983 = vpop.f32.mrb[0].mxu0
      %1984 = vmatprep.mubr.f32.mxu0 0.0
      %1985 = vmatmul.mubr.f32.gmra.mrb[0].mxu0 %v1769
      %v1986 = vpop.f32.mrb[0].mxu0
      %v1987 = vadd.f32 %v1681, %v1986
      %v1988 = vpop.f32.mrb[0].mxu0
      %1989 = vmatprep.mubr.f32.mxu0 0.0
      %1990 = vmatmul.mubr.f32.gmra.mrb[0].mxu0 %v1772
      %v1991 = vpop.f32.mrb[0].mxu0
      %v1992 = vadd.f32 %v1681, %v1991
      %v1993 = vpop.f32.mrb[0].mxu0
      %1994 = vmatprep.mubr.f32.mxu0 0.0
      %1995 = vmatmul.mubr.f32.gmra.mrb[0].mxu0 %v1775
      %v1996 = vpop.f32.mrb[0].mxu0
      %v1997 = vadd.f32 %v1681, %v1996
      %v1998 = vpop.f32.mrb[0].mxu0
      %1999 = vmatprep.mubr.f32.mxu0 0.0
      %2000 = vmatmul.mubr.f32.gmra.mrb[0].mxu0 %v1778
      %v2001 = vpop.f32.mrb[0].mxu0
      %v2002 = vadd.f32 %v1681, %v2001
      %v2003 = vpop.f32.mrb[0].mxu0
      %2004 = vdwg.mxu0
      %v2005 = vmax.f32 %v1847, 0.0
      %v2006 = vmax.f32 %v1852, 0.0
      %v2007 = vmax.f32 %v1857, 0.0
      %v2008 = vmax.f32 %v1862, 0.0
      %v2009 = vmax.f32 %v1867, 0.0
      %v2010 = vmax.f32 %v1872, 0.0
      %v2011 = vmax.f32 %v1877, 0.0
      %v2012 = vmax.f32 %v1882, 0.0
      %v2013 = vmax.f32 %v1887, 0.0
      %v2014 = vmax.f32 %v1892, 0.0
      %v2015 = vmax.f32 %v1897, 0.0
      %v2016 = vmax.f32 %v1902, 0.0
      %v2017 = vmax.f32 %v1907, 0.0
      %v2018 = vmax.f32 %v1912, 0.0
      %v2019 = vmax.f32 %v1917, 0.0
      %v2020 = vmax.f32 %v1922, 0.0
      %v2021 = vmax.f32 %v1927, 0.0
      %v2022 = vmax.f32 %v1932, 0.0
      %v2023 = vmax.f32 %v1937, 0.0
      %v2024 = vmax.f32 %v1942, 0.0
      %v2025 = vmax.f32 %v1947, 0.0
      %v2026 = vmax.f32 %v1952, 0.0
      %v2027 = vmax.f32 %v1957, 0.0
      %v2028 = vmax.f32 %v1962, 0.0
      %v2029 = vmax.f32 %v1967, 0.0
      %v2030 = vmax.f32 %v1972, 0.0
      %v2031 = vmax.f32 %v1977, 0.0
      %v2032 = vmax.f32 %v1982, 0.0
      %v2033 = vmax.f32 %v1987, 0.0
      %v2034 = vmax.f32 %v1992, 0.0
      %v2035 = vmax.f32 %v1997, 0.0
      %v2036 = vmax.f32 %v2002, 0.0
      %2037 = vst.msk [vmem:[%s313 + $0x1] sm:$0xff] %vm225, %v2005
      %2038 = vst.msk [vmem:[%s313 + $0x9] sm:$0xff] %vm225, %v2006
      %2039 = vst.msk [vmem:[%s313 + $0x19] sm:$0xff] %vm225, %v2007
      %2040 = vst.msk [vmem:[%s313 + $0x21] sm:$0xff] %vm225, %v2008
      %2041 = vst.msk [vmem:[%s313 + $0x31] sm:$0xff] %vm225, %v2009
      %2042 = vst.msk [vmem:[%s313 + $0x39] sm:$0xff] %vm225, %v2010
      %2043 = vst.msk [vmem:[%s313 + $0x49] sm:$0xff] %vm225, %v2011
      %2044 = vst.msk [vmem:[%s313 + $0x51] sm:$0xff] %vm225, %v2012
      %2045 = vst.msk [vmem:[%s313 + $0x61] sm:$0xff] %vm225, %v2013
      %2046 = vst.msk [vmem:[%s313 + $0x69] sm:$0xff] %vm225, %v2014
      %2047 = vst.msk [vmem:[%s313 + $0x79] sm:$0xff] %vm225, %v2015
      %2048 = vst.msk [vmem:[%s313 + $0x81] sm:$0xff] %vm225, %v2016
      %2049 = vst.msk [vmem:[%s313 + $0x91] sm:$0xff] %vm225, %v2017
      %2050 = vst.msk [vmem:[%s313 + $0x99] sm:$0xff] %vm225, %v2018
      %2051 = vst.msk [vmem:[%s313 + $0xa9] sm:$0xff] %vm225, %v2019
      %2052 = vst.msk [vmem:[%s313 + $0xb1] sm:$0xff] %vm225, %v2020
      %2053 = vst.msk [vmem:[%s313 + $0xc1] sm:$0xff] %vm225, %v2021
      %2054 = vst.msk [vmem:[%s313 + $0xc9] sm:$0xff] %vm225, %v2022
      %2055 = vst.msk [vmem:[%s313 + $0xd9] sm:$0xff] %vm225, %v2023
      %2056 = vst.msk [vmem:[%s313 + $0xe1] sm:$0xff] %vm225, %v2024
      %2057 = vst.msk [vmem:[%s313 + $0xf1] sm:$0xff] %vm225, %v2025
      %2058 = vst.msk [vmem:[%s313 + $0xf9] sm:$0xff] %vm225, %v2026
      %2059 = vst.msk [vmem:[%s313 + $0x109] sm:$0xff] %vm225, %v2027
      %2060 = vst.msk [vmem:[%s313 + $0x111] sm:$0xff] %vm225, %v2028
      %2061 = vst.msk [vmem:[%s313 + $0x121] sm:$0xff] %vm225, %v2029
      %2062 = vst.msk [vmem:[%s313 + $0x129] sm:$0xff] %vm225, %v2030
      %2063 = vst.msk [vmem:[%s313 + $0x139] sm:$0xff] %vm225, %v2031
      %2064 = vst.msk [vmem:[%s313 + $0x141] sm:$0xff] %vm225, %v2032
      %2065 = vst.msk [vmem:[%s313 + $0x151] sm:$0xff] %vm225, %v2033
      %2066 = vst.msk [vmem:[%s313 + $0x159] sm:$0xff] %vm225, %v2034
      %2067 = vst.msk [vmem:[%s313 + $0x169] sm:$0xff] %vm225, %v2035
      %2068 = vst.msk [vmem:[%s313 + $0x171] sm:$0xff] %vm225, %v2036
      %v2069 = vld [vmem:[#allocation2] sm:$0xff]
      %v2070 = vld [vmem:[#allocation2 + $0x8] sm:$0xff]
      %v2071 = vld [vmem:[#allocation2 + $0x10] sm:$0x3]
      %v2072 = vld [vmem:[#allocation2 + $0x18] sm:$0xff]
      %v2073 = vld [vmem:[#allocation2 + $0x20] sm:$0xff]
      %v2074 = vld [vmem:[#allocation2 + $0x28] sm:$0x3]
      %v2075 = vld [vmem:[#allocation2 + $0x30] sm:$0xff]
      %v2076 = vld [vmem:[#allocation2 + $0x38] sm:$0xff]
      %v2077 = vld [vmem:[#allocation2 + $0x40] sm:$0x3]
      %v2078 = vld [vmem:[#allocation2 + $0x48] sm:$0xff]
      %v2079 = vld [vmem:[#allocation2 + $0x50] sm:$0xff]
      %v2080 = vld [vmem:[#allocation2 + $0x58] sm:$0x3]
      %v2081 = vld [vmem:[#allocation2 + $0x60] sm:$0xff]
      %v2082 = vld [vmem:[#allocation2 + $0x68] sm:$0xff]
      %v2083 = vld [vmem:[#allocation2 + $0x70] sm:$0x3]
      %v2084 = vld [vmem:[#allocation2 + $0x78] sm:$0xff]
      %v2085 = vld [vmem:[#allocation2 + $0x80] sm:$0xff]
      %v2086 = vld [vmem:[#allocation2 + $0x88] sm:$0x3]
      %v2087 = vld [vmem:[#allocation2 + $0x90] sm:$0xff]
      %v2088 = vld [vmem:[#allocation2 + $0x98] sm:$0xff]
      %v2089 = vld [vmem:[#allocation2 + $0xa0] sm:$0x3]
      %v2090 = vld [vmem:[#allocation2 + $0xa8] sm:$0xff]
      %v2091 = vld [vmem:[#allocation2 + $0xb0] sm:$0xff]
      %v2092 = vld [vmem:[#allocation2 + $0xb8] sm:$0x3]
      %v2093 = vld [vmem:[#allocation2 + $0xc0] sm:$0xff]
      %v2094 = vld [vmem:[#allocation2 + $0xc8] sm:$0xff]
      %v2095 = vld [vmem:[#allocation2 + $0xd0] sm:$0x3]
      %v2096 = vld [vmem:[#allocation2 + $0xd8] sm:$0xff]
      %v2097 = vld [vmem:[#allocation2 + $0xe0] sm:$0xff]
      %v2098 = vld [vmem:[#allocation2 + $0xe8] sm:$0x3]
      %v2099 = vld [vmem:[#allocation2 + $0xf0] sm:$0xff]
      %v2100 = vld [vmem:[#allocation2 + $0xf8] sm:$0xff]
      %v2101 = vld [vmem:[#allocation2 + $0x100] sm:$0x3]
      %v2102 = vld [vmem:[#allocation2 + $0x108] sm:$0xff]
      %v2103 = vld [vmem:[#allocation2 + $0x110] sm:$0xff]
      %v2104 = vld [vmem:[#allocation2 + $0x118] sm:$0x3]
      %v2105 = vld [vmem:[#allocation2 + $0x120] sm:$0xff]
      %v2106 = vld [vmem:[#allocation2 + $0x128] sm:$0xff]
      %v2107 = vld [vmem:[#allocation2 + $0x130] sm:$0x3]
      %v2108 = vld [vmem:[#allocation2 + $0x138] sm:$0xff]
      %v2109 = vld [vmem:[#allocation2 + $0x140] sm:$0xff]
      %v2110 = vld [vmem:[#allocation2 + $0x148] sm:$0x3]
      %v2111 = vld [vmem:[#allocation2 + $0x150] sm:$0xff]
      %v2112 = vld [vmem:[#allocation2 + $0x158] sm:$0xff]
      %v2113 = vld [vmem:[#allocation2 + $0x160] sm:$0x3]
      %v2114 = vld [vmem:[#allocation2 + $0x168] sm:$0xff]
      %v2115 = vld [vmem:[#allocation2 + $0x170] sm:$0xff]
      %v2116 = vld [vmem:[#allocation2 + $0x178] sm:$0x3]
      %v2117 = vld [vmem:[#allocation2 + $0x180] sm:$0xff]
      %v2118 = vld [vmem:[#allocation2 + $0x188] sm:$0xff]
      %v2119 = vld [vmem:[#allocation2 + $0x190] sm:$0x3]
      %v2120 = vld [vmem:[#allocation2 + $0x198] sm:$0xff]
      %v2121 = vld [vmem:[#allocation2 + $0x1a0] sm:$0xff]
      %v2122 = vld [vmem:[#allocation2 + $0x1a8] sm:$0x3]
      %v2171 = vrot.slane %v2069, 1
      %v2172 = vrot.slane %v2070, 1
      %v2173 = vsel %vm448, %v2171, %v2172
      %v2174 = vrot.slane %v2071, 1
      %v2175 = vsel %vm448, %v2172, %v2174
      %v2176 = vrot.slane %v2072, 1
      %v2177 = vrot.slane %v2073, 1
      %v2178 = vsel %vm448, %v2176, %v2177
      %v2179 = vrot.slane %v2074, 1
      %v2180 = vsel %vm448, %v2177, %v2179
      %v2181 = vrot.slane %v2075, 1
      %v2182 = vrot.slane %v2076, 1
      %v2183 = vsel %vm448, %v2181, %v2182
      %v2184 = vrot.slane %v2077, 1
      %v2185 = vsel %vm448, %v2182, %v2184
      %v2186 = vrot.slane %v2078, 1
      %v2187 = vrot.slane %v2079, 1
      %v2188 = vsel %vm448, %v2186, %v2187
      %v2189 = vrot.slane %v2080, 1
      %v2190 = vsel %vm448, %v2187, %v2189
      %v2191 = vrot.slane %v2081, 1
      %v2192 = vrot.slane %v2082, 1
      %v2193 = vsel %vm448, %v2191, %v2192
      %v2194 = vrot.slane %v2083, 1
      %v2195 = vsel %vm448, %v2192, %v2194
      %v2196 = vrot.slane %v2084, 1
      %v2197 = vrot.slane %v2085, 1
      %v2198 = vsel %vm448, %v2196, %v2197
      %v2199 = vrot.slane %v2086, 1
      %v2200 = vsel %vm448, %v2197, %v2199
      %v2201 = vrot.slane %v2087, 1
      %v2202 = vrot.slane %v2088, 1
      %v2203 = vsel %vm448, %v2201, %v2202
      %v2204 = vrot.slane %v2089, 1
      %v2205 = vsel %vm448, %v2202, %v2204
      %v2206 = vrot.slane %v2090, 1
      %v2207 = vrot.slane %v2091, 1
      %v2208 = vsel %vm448, %v2206, %v2207
      %v2209 = vrot.slane %v2092, 1
      %v2210 = vsel %vm448, %v2207, %v2209
      %v2211 = vrot.slane %v2093, 1
      %v2212 = vrot.slane %v2094, 1
      %v2213 = vsel %vm448, %v2211, %v2212
      %v2214 = vrot.slane %v2095, 1
      %v2215 = vsel %vm448, %v2212, %v2214
      %v2216 = vrot.slane %v2096, 1
      %v2217 = vrot.slane %v2097, 1
      %v2218 = vsel %vm448, %v2216, %v2217
      %v2219 = vrot.slane %v2098, 1
      %v2220 = vsel %vm448, %v2217, %v2219
      %v2221 = vrot.slane %v2099, 1
      %v2222 = vrot.slane %v2100, 1
      %v2223 = vsel %vm448, %v2221, %v2222
      %v2224 = vrot.slane %v2101, 1
      %v2225 = vsel %vm448, %v2222, %v2224
      %v2226 = vrot.slane %v2102, 1
      %v2227 = vrot.slane %v2103, 1
      %v2228 = vsel %vm448, %v2226, %v2227
      %v2229 = vrot.slane %v2104, 1
      %v2230 = vsel %vm448, %v2227, %v2229
      %v2231 = vrot.slane %v2105, 1
      %v2232 = vrot.slane %v2106, 1
      %v2233 = vsel %vm448, %v2231, %v2232
      %v2234 = vrot.slane %v2107, 1
      %v2235 = vsel %vm448, %v2232, %v2234
      %v2236 = vrot.slane %v2108, 1
      %v2237 = vrot.slane %v2109, 1
      %v2238 = vsel %vm448, %v2236, %v2237
      %v2239 = vrot.slane %v2110, 1
      %v2240 = vsel %vm448, %v2237, %v2239
      %v2241 = vrot.slane %v2111, 1
      %v2242 = vrot.slane %v2112, 1
      %v2243 = vsel %vm448, %v2241, %v2242
      %v2244 = vrot.slane %v2113, 1
      %v2245 = vsel %vm448, %v2242, %v2244
      %v2246 = vrot.slane %v2114, 1
      %v2247 = vrot.slane %v2115, 1
      %v2248 = vsel %vm448, %v2246, %v2247
      %v2249 = vrot.slane %v2116, 1
      %v2250 = vsel %vm448, %v2247, %v2249
      %v2251 = vrot.slane %v2069, 2
      %v2252 = vrot.slane %v2070, 2
      %v2253 = vsel %vm529, %v2251, %v2252
      %v2254 = vrot.slane %v2071, 2
      %v2255 = vsel %vm529, %v2252, %v2254
      %v2256 = vrot.slane %v2072, 2
      %v2257 = vrot.slane %v2073, 2
      %v2258 = vsel %vm529, %v2256, %v2257
      %v2259 = vrot.slane %v2074, 2
      %v2260 = vsel %vm529, %v2257, %v2259
      %v2261 = vrot.slane %v2075, 2
      %v2262 = vrot.slane %v2076, 2
      %v2263 = vsel %vm529, %v2261, %v2262
      %v2264 = vrot.slane %v2077, 2
      %v2265 = vsel %vm529, %v2262, %v2264
      %v2266 = vrot.slane %v2078, 2
      %v2267 = vrot.slane %v2079, 2
      %v2268 = vsel %vm529, %v2266, %v2267
      %v2269 = vrot.slane %v2080, 2
      %v2270 = vsel %vm529, %v2267, %v2269
      %v2271 = vrot.slane %v2081, 2
      %v2272 = vrot.slane %v2082, 2
      %v2273 = vsel %vm529, %v2271, %v2272
      %v2274 = vrot.slane %v2083, 2
      %v2275 = vsel %vm529, %v2272, %v2274
      %v2276 = vrot.slane %v2084, 2
      %v2277 = vrot.slane %v2085, 2
      %v2278 = vsel %vm529, %v2276, %v2277
      %v2279 = vrot.slane %v2086, 2
      %v2280 = vsel %vm529, %v2277, %v2279
      %v2281 = vrot.slane %v2087, 2
      %v2282 = vrot.slane %v2088, 2
      %v2283 = vsel %vm529, %v2281, %v2282
      %v2284 = vrot.slane %v2089, 2
      %v2285 = vsel %vm529, %v2282, %v2284
      %v2286 = vrot.slane %v2090, 2
      %v2287 = vrot.slane %v2091, 2
      %v2288 = vsel %vm529, %v2286, %v2287
      %v2289 = vrot.slane %v2092, 2
      %v2290 = vsel %vm529, %v2287, %v2289
      %v2291 = vrot.slane %v2093, 2
      %v2292 = vrot.slane %v2094, 2
      %v2293 = vsel %vm529, %v2291, %v2292
      %v2294 = vrot.slane %v2095, 2
      %v2295 = vsel %vm529, %v2292, %v2294
      %v2296 = vrot.slane %v2096, 2
      %v2297 = vrot.slane %v2097, 2
      %v2298 = vsel %vm529, %v2296, %v2297
      %v2299 = vrot.slane %v2098, 2
      %v2300 = vsel %vm529, %v2297, %v2299
      %v2301 = vrot.slane %v2099, 2
      %v2302 = vrot.slane %v2100, 2
      %v2303 = vsel %vm529, %v2301, %v2302
      %v2304 = vrot.slane %v2101, 2
      %v2305 = vsel %vm529, %v2302, %v2304
      %v2306 = vrot.slane %v2102, 2
      %v2307 = vrot.slane %v2103, 2
      %v2308 = vsel %vm529, %v2306, %v2307
      %v2309 = vrot.slane %v2104, 2
      %v2310 = vsel %vm529, %v2307, %v2309
      %v2311 = vrot.slane %v2105, 2
      %v2312 = vrot.slane %v2106, 2
      %v2313 = vsel %vm529, %v2311, %v2312
      %v2314 = vrot.slane %v2107, 2
      %v2315 = vsel %vm529, %v2312, %v2314
      %v2316 = vrot.slane %v2108, 2
      %v2317 = vrot.slane %v2109, 2
      %v2318 = vsel %vm529, %v2316, %v2317
      %v2319 = vrot.slane %v2110, 2
      %v2320 = vsel %vm529, %v2317, %v2319
      %v2321 = vrot.slane %v2111, 2
      %v2322 = vrot.slane %v2112, 2
      %v2323 = vsel %vm529, %v2321, %v2322
      %v2324 = vrot.slane %v2113, 2
      %v2325 = vsel %vm529, %v2322, %v2324
      %v2326 = vrot.slane %v2114, 2
      %v2327 = vrot.slane %v2115, 2
      %v2328 = vsel %vm529, %v2326, %v2327
      %v2329 = vrot.slane %v2116, 2
      %v2330 = vsel %vm529, %v2327, %v2329
      %v2334 = vrot.slane %v2117, 1
      %v2335 = vrot.slane %v2118, 1
      %v2336 = vsel %vm448, %v2334, %v2335
      %v2337 = vrot.slane %v2119, 1
      %v2338 = vsel %vm448, %v2335, %v2337
      %v2339 = vrot.slane %v2117, 2
      %v2340 = vrot.slane %v2118, 2
      %v2341 = vsel %vm529, %v2339, %v2340
      %v2342 = vrot.slane %v2119, 2
      %v2343 = vsel %vm529, %v2340, %v2342
      %v2347 = vrot.slane %v2120, 1
      %v2348 = vrot.slane %v2121, 1
      %v2349 = vsel %vm448, %v2347, %v2348
      %v2350 = vrot.slane %v2122, 1
      %v2351 = vsel %vm448, %v2348, %v2350
      %v2352 = vrot.slane %v2120, 2
      %v2353 = vrot.slane %v2121, 2
      %v2354 = vsel %vm529, %v2352, %v2353
      %v2355 = vrot.slane %v2122, 2
      %v2356 = vsel %vm529, %v2353, %v2355
      %2357 = vrot.lane.b32.xlu0 %v2173, 8
      %v2358 = vpop.permute.xlu0 %2357
      %2359 = vrot.lane.b32.xlu0 %v2175, 8
      %v2360 = vpop.permute.xlu0 %2359
      %2361 = vrot.lane.b32.xlu0 %v2178, 8
      %v2362 = vpop.permute.xlu0 %2361
      %2363 = vrot.lane.b32.xlu0 %v2180, 8
      %v2364 = vpop.permute.xlu0 %2363
      %2365 = vrot.lane.b32.xlu0 %v2183, 8
      %v2366 = vpop.permute.xlu0 %2365
      %2367 = vrot.lane.b32.xlu0 %v2185, 8
      %v2368 = vpop.permute.xlu0 %2367
      %2369 = vrot.lane.b32.xlu0 %v2188, 8
      %v2370 = vpop.permute.xlu0 %2369
      %2371 = vrot.lane.b32.xlu0 %v2190, 8
      %v2372 = vpop.permute.xlu0 %2371
      %2373 = vrot.lane.b32.xlu0 %v2193, 8
      %v2374 = vpop.permute.xlu0 %2373
      %2375 = vrot.lane.b32.xlu0 %v2195, 8
      %v2376 = vpop.permute.xlu0 %2375
      %2377 = vrot.lane.b32.xlu0 %v2198, 8
      %v2378 = vpop.permute.xlu0 %2377
      %2379 = vrot.lane.b32.xlu0 %v2200, 8
      %v2380 = vpop.permute.xlu0 %2379
      %2381 = vrot.lane.b32.xlu0 %v2203, 8
      %v2382 = vpop.permute.xlu0 %2381
      %2383 = vrot.lane.b32.xlu0 %v2205, 8
      %v2384 = vpop.permute.xlu0 %2383
      %2385 = vrot.lane.b32.xlu0 %v2208, 8
      %v2386 = vpop.permute.xlu0 %2385
      %2387 = vrot.lane.b32.xlu0 %v2210, 8
      %v2388 = vpop.permute.xlu0 %2387
      %2389 = vrot.lane.b32.xlu0 %v2213, 8
      %v2390 = vpop.permute.xlu0 %2389
      %2391 = vrot.lane.b32.xlu0 %v2215, 8
      %v2392 = vpop.permute.xlu0 %2391
      %2393 = vrot.lane.b32.xlu0 %v2218, 8
      %v2394 = vpop.permute.xlu0 %2393
      %2395 = vrot.lane.b32.xlu0 %v2220, 8
      %v2396 = vpop.permute.xlu0 %2395
      %2397 = vrot.lane.b32.xlu0 %v2223, 8
      %v2398 = vpop.permute.xlu0 %2397
      %2399 = vrot.lane.b32.xlu0 %v2225, 8
      %v2400 = vpop.permute.xlu0 %2399
      %2401 = vrot.lane.b32.xlu0 %v2228, 8
      %v2402 = vpop.permute.xlu0 %2401
      %2403 = vrot.lane.b32.xlu0 %v2230, 8
      %v2404 = vpop.permute.xlu0 %2403
      %2405 = vrot.lane.b32.xlu0 %v2233, 8
      %v2406 = vpop.permute.xlu0 %2405
      %2407 = vrot.lane.b32.xlu0 %v2235, 8
      %v2408 = vpop.permute.xlu0 %2407
      %2409 = vrot.lane.b32.xlu0 %v2238, 8
      %v2410 = vpop.permute.xlu0 %2409
      %2411 = vrot.lane.b32.xlu0 %v2240, 8
      %v2412 = vpop.permute.xlu0 %2411
      %2413 = vrot.lane.b32.xlu0 %v2243, 8
      %v2414 = vpop.permute.xlu0 %2413
      %2415 = vrot.lane.b32.xlu0 %v2245, 8
      %v2416 = vpop.permute.xlu0 %2415
      %2417 = vrot.lane.b32.xlu0 %v2248, 8
      %v2418 = vpop.permute.xlu0 %2417
      %2419 = vrot.lane.b32.xlu0 %v2250, 8
      %v2420 = vpop.permute.xlu0 %2419
      %2453 = vrot.lane.b32.xlu0 %v2253, 16
      %v2454 = vpop.permute.xlu0 %2453
      %2455 = vrot.lane.b32.xlu0 %v2255, 16
      %v2456 = vpop.permute.xlu0 %2455
      %2457 = vrot.lane.b32.xlu0 %v2258, 16
      %v2458 = vpop.permute.xlu0 %2457
      %2459 = vrot.lane.b32.xlu0 %v2260, 16
      %v2460 = vpop.permute.xlu0 %2459
      %2461 = vrot.lane.b32.xlu0 %v2263, 16
      %v2462 = vpop.permute.xlu0 %2461
      %2463 = vrot.lane.b32.xlu0 %v2265, 16
      %v2464 = vpop.permute.xlu0 %2463
      %2465 = vrot.lane.b32.xlu0 %v2268, 16
      %v2466 = vpop.permute.xlu0 %2465
      %2467 = vrot.lane.b32.xlu0 %v2270, 16
      %v2468 = vpop.permute.xlu0 %2467
      %2469 = vrot.lane.b32.xlu0 %v2273, 16
      %v2470 = vpop.permute.xlu0 %2469
      %2471 = vrot.lane.b32.xlu0 %v2275, 16
      %v2472 = vpop.permute.xlu0 %2471
      %2473 = vrot.lane.b32.xlu0 %v2278, 16
      %v2474 = vpop.permute.xlu0 %2473
      %2475 = vrot.lane.b32.xlu0 %v2280, 16
      %v2476 = vpop.permute.xlu0 %2475
      %2477 = vrot.lane.b32.xlu0 %v2283, 16
      %v2478 = vpop.permute.xlu0 %2477
      %2479 = vrot.lane.b32.xlu0 %v2285, 16
      %v2480 = vpop.permute.xlu0 %2479
      %2481 = vrot.lane.b32.xlu0 %v2288, 16
      %v2482 = vpop.permute.xlu0 %2481
      %2483 = vrot.lane.b32.xlu0 %v2290, 16
      %v2484 = vpop.permute.xlu0 %2483
      %2485 = vrot.lane.b32.xlu0 %v2293, 16
      %v2486 = vpop.permute.xlu0 %2485
      %2487 = vrot.lane.b32.xlu0 %v2295, 16
      %v2488 = vpop.permute.xlu0 %2487
      %2489 = vrot.lane.b32.xlu0 %v2298, 16
      %v2490 = vpop.permute.xlu0 %2489
      %2491 = vrot.lane.b32.xlu0 %v2300, 16
      %v2492 = vpop.permute.xlu0 %2491
      %2493 = vrot.lane.b32.xlu0 %v2303, 16
      %v2494 = vpop.permute.xlu0 %2493
      %2495 = vrot.lane.b32.xlu0 %v2305, 16
      %v2496 = vpop.permute.xlu0 %2495
      %2497 = vrot.lane.b32.xlu0 %v2308, 16
      %v2498 = vpop.permute.xlu0 %2497
      %2499 = vrot.lane.b32.xlu0 %v2310, 16
      %v2500 = vpop.permute.xlu0 %2499
      %2501 = vrot.lane.b32.xlu0 %v2313, 16
      %v2502 = vpop.permute.xlu0 %2501
      %2503 = vrot.lane.b32.xlu0 %v2315, 16
      %v2504 = vpop.permute.xlu0 %2503
      %2505 = vrot.lane.b32.xlu0 %v2318, 16
      %v2506 = vpop.permute.xlu0 %2505
      %2507 = vrot.lane.b32.xlu0 %v2320, 16
      %v2508 = vpop.permute.xlu0 %2507
      %2509 = vrot.lane.b32.xlu0 %v2323, 16
      %v2510 = vpop.permute.xlu0 %2509
      %2511 = vrot.lane.b32.xlu0 %v2325, 16
      %v2512 = vpop.permute.xlu0 %2511
      %2513 = vrot.lane.b32.xlu0 %v2328, 16
      %v2514 = vpop.permute.xlu0 %2513
      %2515 = vrot.lane.b32.xlu0 %v2330, 16
      %v2516 = vpop.permute.xlu0 %2515
      %2549 = vrot.lane.b32.xlu0 %v2072, 24
      %v2550 = vpop.permute.xlu0 %2549
      %2551 = vrot.lane.b32.xlu0 %v2073, 24
      %v2552 = vpop.permute.xlu0 %2551
      %2553 = vrot.lane.b32.xlu0 %v2075, 24
      %v2554 = vpop.permute.xlu0 %2553
      %2555 = vrot.lane.b32.xlu0 %v2076, 24
      %v2556 = vpop.permute.xlu0 %2555
      %2557 = vrot.lane.b32.xlu0 %v2078, 24
      %v2558 = vpop.permute.xlu0 %2557
      %2559 = vrot.lane.b32.xlu0 %v2079, 24
      %v2560 = vpop.permute.xlu0 %2559
      %2561 = vrot.lane.b32.xlu0 %v2081, 24
      %v2562 = vpop.permute.xlu0 %2561
      %2563 = vrot.lane.b32.xlu0 %v2082, 24
      %v2564 = vpop.permute.xlu0 %2563
      %2565 = vrot.lane.b32.xlu0 %v2084, 24
      %v2566 = vpop.permute.xlu0 %2565
      %2567 = vrot.lane.b32.xlu0 %v2085, 24
      %v2568 = vpop.permute.xlu0 %2567
      %2569 = vrot.lane.b32.xlu0 %v2087, 24
      %v2570 = vpop.permute.xlu0 %2569
      %2571 = vrot.lane.b32.xlu0 %v2088, 24
      %v2572 = vpop.permute.xlu0 %2571
      %2573 = vrot.lane.b32.xlu0 %v2090, 24
      %v2574 = vpop.permute.xlu0 %2573
      %2575 = vrot.lane.b32.xlu0 %v2091, 24
      %v2576 = vpop.permute.xlu0 %2575
      %2577 = vrot.lane.b32.xlu0 %v2093, 24
      %v2578 = vpop.permute.xlu0 %2577
      %2579 = vrot.lane.b32.xlu0 %v2094, 24
      %v2580 = vpop.permute.xlu0 %2579
      %2581 = vrot.lane.b32.xlu0 %v2096, 24
      %v2582 = vpop.permute.xlu0 %2581
      %2583 = vrot.lane.b32.xlu0 %v2097, 24
      %v2584 = vpop.permute.xlu0 %2583
      %2585 = vrot.lane.b32.xlu0 %v2099, 24
      %v2586 = vpop.permute.xlu0 %2585
      %2587 = vrot.lane.b32.xlu0 %v2100, 24
      %v2588 = vpop.permute.xlu0 %2587
      %2589 = vrot.lane.b32.xlu0 %v2102, 24
      %v2590 = vpop.permute.xlu0 %2589
      %2591 = vrot.lane.b32.xlu0 %v2103, 24
      %v2592 = vpop.permute.xlu0 %2591
      %2593 = vrot.lane.b32.xlu0 %v2105, 24
      %v2594 = vpop.permute.xlu0 %2593
      %2595 = vrot.lane.b32.xlu0 %v2106, 24
      %v2596 = vpop.permute.xlu0 %2595
      %2597 = vrot.lane.b32.xlu0 %v2108, 24
      %v2598 = vpop.permute.xlu0 %2597
      %2599 = vrot.lane.b32.xlu0 %v2109, 24
      %v2600 = vpop.permute.xlu0 %2599
      %2601 = vrot.lane.b32.xlu0 %v2111, 24
      %v2602 = vpop.permute.xlu0 %2601
      %2603 = vrot.lane.b32.xlu0 %v2112, 24
      %v2604 = vpop.permute.xlu0 %2603
      %2605 = vrot.lane.b32.xlu0 %v2114, 24
      %v2606 = vpop.permute.xlu0 %2605
      %2607 = vrot.lane.b32.xlu0 %v2115, 24
      %v2608 = vpop.permute.xlu0 %2607
      %2609 = vrot.lane.b32.xlu0 %v2117, 24
      %v2610 = vpop.permute.xlu0 %2609
      %2611 = vrot.lane.b32.xlu0 %v2118, 24
      %v2612 = vpop.permute.xlu0 %2611
      %2645 = vrot.lane.b32.xlu0 %v2178, 32
      %v2646 = vpop.permute.xlu0 %2645
      %2647 = vrot.lane.b32.xlu0 %v2180, 32
      %v2648 = vpop.permute.xlu0 %2647
      %2649 = vrot.lane.b32.xlu0 %v2183, 32
      %v2650 = vpop.permute.xlu0 %2649
      %2651 = vrot.lane.b32.xlu0 %v2185, 32
      %v2652 = vpop.permute.xlu0 %2651
      %2653 = vrot.lane.b32.xlu0 %v2188, 32
      %v2654 = vpop.permute.xlu0 %2653
      %2655 = vrot.lane.b32.xlu0 %v2190, 32
      %v2656 = vpop.permute.xlu0 %2655
      %2657 = vrot.lane.b32.xlu0 %v2193, 32
      %v2658 = vpop.permute.xlu0 %2657
      %2659 = vrot.lane.b32.xlu0 %v2195, 32
      %v2660 = vpop.permute.xlu0 %2659
      %2661 = vrot.lane.b32.xlu0 %v2198, 32
      %v2662 = vpop.permute.xlu0 %2661
      %2663 = vrot.lane.b32.xlu0 %v2200, 32
      %v2664 = vpop.permute.xlu0 %2663
      %2665 = vrot.lane.b32.xlu0 %v2203, 32
      %v2666 = vpop.permute.xlu0 %2665
      %2667 = vrot.lane.b32.xlu0 %v2205, 32
      %v2668 = vpop.permute.xlu0 %2667
      %2669 = vrot.lane.b32.xlu0 %v2208, 32
      %v2670 = vpop.permute.xlu0 %2669
      %2671 = vrot.lane.b32.xlu0 %v2210, 32
      %v2672 = vpop.permute.xlu0 %2671
      %2673 = vrot.lane.b32.xlu0 %v2213, 32
      %v2674 = vpop.permute.xlu0 %2673
      %2675 = vrot.lane.b32.xlu0 %v2215, 32
      %v2676 = vpop.permute.xlu0 %2675
      %2677 = vrot.lane.b32.xlu0 %v2218, 32
      %v2678 = vpop.permute.xlu0 %2677
      %2679 = vrot.lane.b32.xlu0 %v2220, 32
      %v2680 = vpop.permute.xlu0 %2679
      %2681 = vrot.lane.b32.xlu0 %v2223, 32
      %v2682 = vpop.permute.xlu0 %2681
      %2683 = vrot.lane.b32.xlu0 %v2225, 32
      %v2684 = vpop.permute.xlu0 %2683
      %2685 = vrot.lane.b32.xlu0 %v2228, 32
      %v2686 = vpop.permute.xlu0 %2685
      %2687 = vrot.lane.b32.xlu0 %v2230, 32
      %v2688 = vpop.permute.xlu0 %2687
      %2689 = vrot.lane.b32.xlu0 %v2233, 32
      %v2690 = vpop.permute.xlu0 %2689
      %2691 = vrot.lane.b32.xlu0 %v2235, 32
      %v2692 = vpop.permute.xlu0 %2691
      %2693 = vrot.lane.b32.xlu0 %v2238, 32
      %v2694 = vpop.permute.xlu0 %2693
      %2695 = vrot.lane.b32.xlu0 %v2240, 32
      %v2696 = vpop.permute.xlu0 %2695
      %2697 = vrot.lane.b32.xlu0 %v2243, 32
      %v2698 = vpop.permute.xlu0 %2697
      %2699 = vrot.lane.b32.xlu0 %v2245, 32
      %v2700 = vpop.permute.xlu0 %2699
      %2701 = vrot.lane.b32.xlu0 %v2248, 32
      %v2702 = vpop.permute.xlu0 %2701
      %2703 = vrot.lane.b32.xlu0 %v2250, 32
      %v2704 = vpop.permute.xlu0 %2703
      %2705 = vrot.lane.b32.xlu0 %v2336, 32
      %v2706 = vpop.permute.xlu0 %2705
      %2707 = vrot.lane.b32.xlu0 %v2338, 32
      %v2708 = vpop.permute.xlu0 %2707
      %2741 = vrot.lane.b32.xlu0 %v2258, 40
      %v2742 = vpop.permute.xlu0 %2741
      %2743 = vrot.lane.b32.xlu0 %v2260, 40
      %v2744 = vpop.permute.xlu0 %2743
      %2745 = vrot.lane.b32.xlu0 %v2263, 40
      %v2746 = vpop.permute.xlu0 %2745
      %2747 = vrot.lane.b32.xlu0 %v2265, 40
      %v2748 = vpop.permute.xlu0 %2747
      %2749 = vrot.lane.b32.xlu0 %v2268, 40
      %v2750 = vpop.permute.xlu0 %2749
      %2751 = vrot.lane.b32.xlu0 %v2270, 40
      %v2752 = vpop.permute.xlu0 %2751
      %2753 = vrot.lane.b32.xlu0 %v2273, 40
      %v2754 = vpop.permute.xlu0 %2753
      %2755 = vrot.lane.b32.xlu0 %v2275, 40
      %v2756 = vpop.permute.xlu0 %2755
      %2757 = vrot.lane.b32.xlu0 %v2278, 40
      %v2758 = vpop.permute.xlu0 %2757
      %2759 = vrot.lane.b32.xlu0 %v2280, 40
      %v2760 = vpop.permute.xlu0 %2759
      %2761 = vrot.lane.b32.xlu0 %v2283, 40
      %v2762 = vpop.permute.xlu0 %2761
      %2763 = vrot.lane.b32.xlu0 %v2285, 40
      %v2764 = vpop.permute.xlu0 %2763
      %2765 = vrot.lane.b32.xlu0 %v2288, 40
      %v2766 = vpop.permute.xlu0 %2765
      %2767 = vrot.lane.b32.xlu0 %v2290, 40
      %v2768 = vpop.permute.xlu0 %2767
      %2769 = vrot.lane.b32.xlu0 %v2293, 40
      %v2770 = vpop.permute.xlu0 %2769
      %2771 = vrot.lane.b32.xlu0 %v2295, 40
      %v2772 = vpop.permute.xlu0 %2771
      %2773 = vrot.lane.b32.xlu0 %v2298, 40
      %v2774 = vpop.permute.xlu0 %2773
      %2775 = vrot.lane.b32.xlu0 %v2300, 40
      %v2776 = vpop.permute.xlu0 %2775
      %2777 = vrot.lane.b32.xlu0 %v2303, 40
      %v2778 = vpop.permute.xlu0 %2777
      %2779 = vrot.lane.b32.xlu0 %v2305, 40
      %v2780 = vpop.permute.xlu0 %2779
      %2781 = vrot.lane.b32.xlu0 %v2308, 40
      %v2782 = vpop.permute.xlu0 %2781
      %2783 = vrot.lane.b32.xlu0 %v2310, 40
      %v2784 = vpop.permute.xlu0 %2783
      %2785 = vrot.lane.b32.xlu0 %v2313, 40
      %v2786 = vpop.permute.xlu0 %2785
      %2787 = vrot.lane.b32.xlu0 %v2315, 40
      %v2788 = vpop.permute.xlu0 %2787
      %2789 = vrot.lane.b32.xlu0 %v2318, 40
      %v2790 = vpop.permute.xlu0 %2789
      %2791 = vrot.lane.b32.xlu0 %v2320, 40
      %v2792 = vpop.permute.xlu0 %2791
      %2793 = vrot.lane.b32.xlu0 %v2323, 40
      %v2794 = vpop.permute.xlu0 %2793
      %2795 = vrot.lane.b32.xlu0 %v2325, 40
      %v2796 = vpop.permute.xlu0 %2795
      %2797 = vrot.lane.b32.xlu0 %v2328, 40
      %v2798 = vpop.permute.xlu0 %2797
      %2799 = vrot.lane.b32.xlu0 %v2330, 40
      %v2800 = vpop.permute.xlu0 %2799
      %2801 = vrot.lane.b32.xlu0 %v2341, 40
      %v2802 = vpop.permute.xlu0 %2801
      %2803 = vrot.lane.b32.xlu0 %v2343, 40
      %v2804 = vpop.permute.xlu0 %2803
      %2837 = vrot.lane.b32.xlu0 %v2075, 48
      %v2838 = vpop.permute.xlu0 %2837
      %2839 = vrot.lane.b32.xlu0 %v2076, 48
      %v2840 = vpop.permute.xlu0 %2839
      %2841 = vrot.lane.b32.xlu0 %v2078, 48
      %v2842 = vpop.permute.xlu0 %2841
      %2843 = vrot.lane.b32.xlu0 %v2079, 48
      %v2844 = vpop.permute.xlu0 %2843
      %2845 = vrot.lane.b32.xlu0 %v2081, 48
      %v2846 = vpop.permute.xlu0 %2845
      %2847 = vrot.lane.b32.xlu0 %v2082, 48
      %v2848 = vpop.permute.xlu0 %2847
      %2849 = vrot.lane.b32.xlu0 %v2084, 48
      %v2850 = vpop.permute.xlu0 %2849
      %2851 = vrot.lane.b32.xlu0 %v2085, 48
      %v2852 = vpop.permute.xlu0 %2851
      %2853 = vrot.lane.b32.xlu0 %v2087, 48
      %v2854 = vpop.permute.xlu0 %2853
      %2855 = vrot.lane.b32.xlu0 %v2088, 48
      %v2856 = vpop.permute.xlu0 %2855
      %2857 = vrot.lane.b32.xlu0 %v2090, 48
      %v2858 = vpop.permute.xlu0 %2857
      %2859 = vrot.lane.b32.xlu0 %v2091, 48
      %v2860 = vpop.permute.xlu0 %2859
      %2861 = vrot.lane.b32.xlu0 %v2093, 48
      %v2862 = vpop.permute.xlu0 %2861
      %2863 = vrot.lane.b32.xlu0 %v2094, 48
      %v2864 = vpop.permute.xlu0 %2863
      %2865 = vrot.lane.b32.xlu0 %v2096, 48
      %v2866 = vpop.permute.xlu0 %2865
      %2867 = vrot.lane.b32.xlu0 %v2097, 48
      %v2868 = vpop.permute.xlu0 %2867
      %2869 = vrot.lane.b32.xlu0 %v2099, 48
      %v2870 = vpop.permute.xlu0 %2869
      %2871 = vrot.lane.b32.xlu0 %v2100, 48
      %v2872 = vpop.permute.xlu0 %2871
      %2873 = vrot.lane.b32.xlu0 %v2102, 48
      %v2874 = vpop.permute.xlu0 %2873
      %2875 = vrot.lane.b32.xlu0 %v2103, 48
      %v2876 = vpop.permute.xlu0 %2875
      %2877 = vrot.lane.b32.xlu0 %v2105, 48
      %v2878 = vpop.permute.xlu0 %2877
      %2879 = vrot.lane.b32.xlu0 %v2106, 48
      %v2880 = vpop.permute.xlu0 %2879
      %2881 = vrot.lane.b32.xlu0 %v2108, 48
      %v2882 = vpop.permute.xlu0 %2881
      %2883 = vrot.lane.b32.xlu0 %v2109, 48
      %v2884 = vpop.permute.xlu0 %2883
      %2885 = vrot.lane.b32.xlu0 %v2111, 48
      %v2886 = vpop.permute.xlu0 %2885
      %2887 = vrot.lane.b32.xlu0 %v2112, 48
      %v2888 = vpop.permute.xlu0 %2887
      %2889 = vrot.lane.b32.xlu0 %v2114, 48
      %v2890 = vpop.permute.xlu0 %2889
      %2891 = vrot.lane.b32.xlu0 %v2115, 48
      %v2892 = vpop.permute.xlu0 %2891
      %2893 = vrot.lane.b32.xlu0 %v2117, 48
      %v2894 = vpop.permute.xlu0 %2893
      %2895 = vrot.lane.b32.xlu0 %v2118, 48
      %v2896 = vpop.permute.xlu0 %2895
      %2897 = vrot.lane.b32.xlu0 %v2120, 48
      %v2898 = vpop.permute.xlu0 %2897
      %2899 = vrot.lane.b32.xlu0 %v2121, 48
      %v2900 = vpop.permute.xlu0 %2899
      %2933 = vrot.lane.b32.xlu0 %v2183, 56
      %v2934 = vpop.permute.xlu0 %2933
      %2935 = vrot.lane.b32.xlu0 %v2185, 56
      %v2936 = vpop.permute.xlu0 %2935
      %2937 = vrot.lane.b32.xlu0 %v2188, 56
      %v2938 = vpop.permute.xlu0 %2937
      %2939 = vrot.lane.b32.xlu0 %v2190, 56
      %v2940 = vpop.permute.xlu0 %2939
      %2941 = vrot.lane.b32.xlu0 %v2193, 56
      %v2942 = vpop.permute.xlu0 %2941
      %2943 = vrot.lane.b32.xlu0 %v2195, 56
      %v2944 = vpop.permute.xlu0 %2943
      %2945 = vrot.lane.b32.xlu0 %v2198, 56
      %v2946 = vpop.permute.xlu0 %2945
      %2947 = vrot.lane.b32.xlu0 %v2200, 56
      %v2948 = vpop.permute.xlu0 %2947
      %2949 = vrot.lane.b32.xlu0 %v2203, 56
      %v2950 = vpop.permute.xlu0 %2949
      %2951 = vrot.lane.b32.xlu0 %v2205, 56
      %v2952 = vpop.permute.xlu0 %2951
      %2953 = vrot.lane.b32.xlu0 %v2208, 56
      %v2954 = vpop.permute.xlu0 %2953
      %2955 = vrot.lane.b32.xlu0 %v2210, 56
      %v2956 = vpop.permute.xlu0 %2955
      %2957 = vrot.lane.b32.xlu0 %v2213, 56
      %v2958 = vpop.permute.xlu0 %2957
      %2959 = vrot.lane.b32.xlu0 %v2215, 56
      %v2960 = vpop.permute.xlu0 %2959
      %2961 = vrot.lane.b32.xlu0 %v2218, 56
      %v2962 = vpop.permute.xlu0 %2961
      %2963 = vrot.lane.b32.xlu0 %v2220, 56
      %v2964 = vpop.permute.xlu0 %2963
      %2965 = vrot.lane.b32.xlu0 %v2223, 56
      %v2966 = vpop.permute.xlu0 %2965
      %2967 = vrot.lane.b32.xlu0 %v2225, 56
      %v2968 = vpop.permute.xlu0 %2967
      %2969 = vrot.lane.b32.xlu0 %v2228, 56
      %v2970 = vpop.permute.xlu0 %2969
      %2971 = vrot.lane.b32.xlu0 %v2230, 56
      %v2972 = vpop.permute.xlu0 %2971
      %2973 = vrot.lane.b32.xlu0 %v2233, 56
      %v2974 = vpop.permute.xlu0 %2973
      %2975 = vrot.lane.b32.xlu0 %v2235, 56
      %v2976 = vpop.permute.xlu0 %2975
      %2977 = vrot.lane.b32.xlu0 %v2238, 56
      %v2978 = vpop.permute.xlu0 %2977
      %2979 = vrot.lane.b32.xlu0 %v2240, 56
      %v2980 = vpop.permute.xlu0 %2979
      %2981 = vrot.lane.b32.xlu0 %v2243, 56
      %v2982 = vpop.permute.xlu0 %2981
      %2983 = vrot.lane.b32.xlu0 %v2245, 56
      %v2984 = vpop.permute.xlu0 %2983
      %2985 = vrot.lane.b32.xlu0 %v2248, 56
      %v2986 = vpop.permute.xlu0 %2985
      %2987 = vrot.lane.b32.xlu0 %v2250, 56
      %v2988 = vpop.permute.xlu0 %2987
      %2989 = vrot.lane.b32.xlu0 %v2336, 56
      %v2990 = vpop.permute.xlu0 %2989
      %2991 = vrot.lane.b32.xlu0 %v2338, 56
      %v2992 = vpop.permute.xlu0 %2991
      %2993 = vrot.lane.b32.xlu0 %v2349, 56
      %v2994 = vpop.permute.xlu0 %2993
      %2995 = vrot.lane.b32.xlu0 %v2351, 56
      %v2996 = vpop.permute.xlu0 %2995
      %3029 = vrot.lane.b32.xlu0 %v2263, 64
      %v3030 = vpop.permute.xlu0 %3029
      %3031 = vrot.lane.b32.xlu0 %v2265, 64
      %v3032 = vpop.permute.xlu0 %3031
      %3033 = vrot.lane.b32.xlu0 %v2268, 64
      %v3034 = vpop.permute.xlu0 %3033
      %3035 = vrot.lane.b32.xlu0 %v2270, 64
      %v3036 = vpop.permute.xlu0 %3035
      %3037 = vrot.lane.b32.xlu0 %v2273, 64
      %v3038 = vpop.permute.xlu0 %3037
      %3039 = vrot.lane.b32.xlu0 %v2275, 64
      %v3040 = vpop.permute.xlu0 %3039
      %3041 = vrot.lane.b32.xlu0 %v2278, 64
      %v3042 = vpop.permute.xlu0 %3041
      %3043 = vrot.lane.b32.xlu0 %v2280, 64
      %v3044 = vpop.permute.xlu0 %3043
      %3045 = vrot.lane.b32.xlu0 %v2283, 64
      %v3046 = vpop.permute.xlu0 %3045
      %3047 = vrot.lane.b32.xlu0 %v2285, 64
      %v3048 = vpop.permute.xlu0 %3047
      %3049 = vrot.lane.b32.xlu0 %v2288, 64
      %v3050 = vpop.permute.xlu0 %3049
      %3051 = vrot.lane.b32.xlu0 %v2290, 64
      %v3052 = vpop.permute.xlu0 %3051
      %3053 = vrot.lane.b32.xlu0 %v2293, 64
      %v3054 = vpop.permute.xlu0 %3053
      %3055 = vrot.lane.b32.xlu0 %v2295, 64
      %v3056 = vpop.permute.xlu0 %3055
      %3057 = vrot.lane.b32.xlu0 %v2298, 64
      %v3058 = vpop.permute.xlu0 %3057
      %3059 = vrot.lane.b32.xlu0 %v2300, 64
      %v3060 = vpop.permute.xlu0 %3059
      %3061 = vrot.lane.b32.xlu0 %v2303, 64
      %v3062 = vpop.permute.xlu0 %3061
      %3063 = vrot.lane.b32.xlu0 %v2305, 64
      %v3064 = vpop.permute.xlu0 %3063
      %3065 = vrot.lane.b32.xlu0 %v2308, 64
      %v3066 = vpop.permute.xlu0 %3065
      %3067 = vrot.lane.b32.xlu0 %v2310, 64
      %v3068 = vpop.permute.xlu0 %3067
      %3069 = vrot.lane.b32.xlu0 %v2313, 64
      %v3070 = vpop.permute.xlu0 %3069
      %3071 = vrot.lane.b32.xlu0 %v2315, 64
      %v3072 = vpop.permute.xlu0 %3071
      %3073 = vrot.lane.b32.xlu0 %v2318, 64
      %v3074 = vpop.permute.xlu0 %3073
      %3075 = vrot.lane.b32.xlu0 %v2320, 64
      %v3076 = vpop.permute.xlu0 %3075
      %3077 = vrot.lane.b32.xlu0 %v2323, 64
      %v3078 = vpop.permute.xlu0 %3077
      %3079 = vrot.lane.b32.xlu0 %v2325, 64
      %v3080 = vpop.permute.xlu0 %3079
      %3081 = vrot.lane.b32.xlu0 %v2328, 64
      %v3082 = vpop.permute.xlu0 %3081
      %3083 = vrot.lane.b32.xlu0 %v2330, 64
      %v3084 = vpop.permute.xlu0 %3083
      %3085 = vrot.lane.b32.xlu0 %v2341, 64
      %v3086 = vpop.permute.xlu0 %3085
      %3087 = vrot.lane.b32.xlu0 %v2343, 64
      %v3088 = vpop.permute.xlu0 %3087
      %3089 = vrot.lane.b32.xlu0 %v2354, 64
      %v3090 = vpop.permute.xlu0 %3089
      %3091 = vrot.lane.b32.xlu0 %v2356, 64
      %v3092 = vpop.permute.xlu0 %3091
      %v3125 = vsel %vm225, %v2069, %v2358
      %v3126 = vsel %vm225, %v2070, %v2360
      %v3127 = vsel %vm225, %v2072, %v2362
      %v3128 = vsel %vm225, %v2073, %v2364
      %v3129 = vsel %vm225, %v2075, %v2366
      %v3130 = vsel %vm225, %v2076, %v2368
      %v3131 = vsel %vm225, %v2078, %v2370
      %v3132 = vsel %vm225, %v2079, %v2372
      %v3133 = vsel %vm225, %v2081, %v2374
      %v3134 = vsel %vm225, %v2082, %v2376
      %v3135 = vsel %vm225, %v2084, %v2378
      %v3136 = vsel %vm225, %v2085, %v2380
      %v3137 = vsel %vm225, %v2087, %v2382
      %v3138 = vsel %vm225, %v2088, %v2384
      %v3139 = vsel %vm225, %v2090, %v2386
      %v3140 = vsel %vm225, %v2091, %v2388
      %v3141 = vsel %vm225, %v2093, %v2390
      %v3142 = vsel %vm225, %v2094, %v2392
      %v3143 = vsel %vm225, %v2096, %v2394
      %v3144 = vsel %vm225, %v2097, %v2396
      %v3145 = vsel %vm225, %v2099, %v2398
      %v3146 = vsel %vm225, %v2100, %v2400
      %v3147 = vsel %vm225, %v2102, %v2402
      %v3148 = vsel %vm225, %v2103, %v2404
      %v3149 = vsel %vm225, %v2105, %v2406
      %v3150 = vsel %vm225, %v2106, %v2408
      %v3151 = vsel %vm225, %v2108, %v2410
      %v3152 = vsel %vm225, %v2109, %v2412
      %v3153 = vsel %vm225, %v2111, %v2414
      %v3154 = vsel %vm225, %v2112, %v2416
      %v3155 = vsel %vm225, %v2114, %v2418
      %v3156 = vsel %vm225, %v2115, %v2420
      %v3157 = vsel %vm1436, %v3125, %v2454
      %v3158 = vsel %vm1436, %v3126, %v2456
      %v3159 = vsel %vm1436, %v3127, %v2458
      %v3160 = vsel %vm1436, %v3128, %v2460
      %v3161 = vsel %vm1436, %v3129, %v2462
      %v3162 = vsel %vm1436, %v3130, %v2464
      %v3163 = vsel %vm1436, %v3131, %v2466
      %v3164 = vsel %vm1436, %v3132, %v2468
      %v3165 = vsel %vm1436, %v3133, %v2470
      %v3166 = vsel %vm1436, %v3134, %v2472
      %v3167 = vsel %vm1436, %v3135, %v2474
      %v3168 = vsel %vm1436, %v3136, %v2476
      %v3169 = vsel %vm1436, %v3137, %v2478
      %v3170 = vsel %vm1436, %v3138, %v2480
      %v3171 = vsel %vm1436, %v3139, %v2482
      %v3172 = vsel %vm1436, %v3140, %v2484
      %v3173 = vsel %vm1436, %v3141, %v2486
      %v3174 = vsel %vm1436, %v3142, %v2488
      %v3175 = vsel %vm1436, %v3143, %v2490
      %v3176 = vsel %vm1436, %v3144, %v2492
      %v3177 = vsel %vm1436, %v3145, %v2494
      %v3178 = vsel %vm1436, %v3146, %v2496
      %v3179 = vsel %vm1436, %v3147, %v2498
      %v3180 = vsel %vm1436, %v3148, %v2500
      %v3181 = vsel %vm1436, %v3149, %v2502
      %v3182 = vsel %vm1436, %v3150, %v2504
      %v3183 = vsel %vm1436, %v3151, %v2506
      %v3184 = vsel %vm1436, %v3152, %v2508
      %v3185 = vsel %vm1436, %v3153, %v2510
      %v3186 = vsel %vm1436, %v3154, %v2512
      %v3187 = vsel %vm1436, %v3155, %v2514
      %v3188 = vsel %vm1436, %v3156, %v2516
      %v3189 = vsel %vm1469, %v3157, %v2550
      %v3190 = vsel %vm1469, %v3158, %v2552
      %v3191 = vsel %vm1469, %v3159, %v2554
      %v3192 = vsel %vm1469, %v3160, %v2556
      %v3193 = vsel %vm1469, %v3161, %v2558
      %v3194 = vsel %vm1469, %v3162, %v2560
      %v3195 = vsel %vm1469, %v3163, %v2562
      %v3196 = vsel %vm1469, %v3164, %v2564
      %v3197 = vsel %vm1469, %v3165, %v2566
      %v3198 = vsel %vm1469, %v3166, %v2568
      %v3199 = vsel %vm1469, %v3167, %v2570
      %v3200 = vsel %vm1469, %v3168, %v2572
      %v3201 = vsel %vm1469, %v3169, %v2574
      %v3202 = vsel %vm1469, %v3170, %v2576
      %v3203 = vsel %vm1469, %v3171, %v2578
      %v3204 = vsel %vm1469, %v3172, %v2580
      %v3205 = vsel %vm1469, %v3173, %v2582
      %v3206 = vsel %vm1469, %v3174, %v2584
      %v3207 = vsel %vm1469, %v3175, %v2586
      %v3208 = vsel %vm1469, %v3176, %v2588
      %v3209 = vsel %vm1469, %v3177, %v2590
      %v3210 = vsel %vm1469, %v3178, %v2592
      %v3211 = vsel %vm1469, %v3179, %v2594
      %v3212 = vsel %vm1469, %v3180, %v2596
      %v3213 = vsel %vm1469, %v3181, %v2598
      %v3214 = vsel %vm1469, %v3182, %v2600
      %v3215 = vsel %vm1469, %v3183, %v2602
      %v3216 = vsel %vm1469, %v3184, %v2604
      %v3217 = vsel %vm1469, %v3185, %v2606
      %v3218 = vsel %vm1469, %v3186, %v2608
      %v3219 = vsel %vm1469, %v3187, %v2610
      %v3220 = vsel %vm1469, %v3188, %v2612
      %v3221 = vsel %vm1502, %v3189, %v2646
      %v3222 = vsel %vm1502, %v3190, %v2648
      %v3223 = vsel %vm1502, %v3191, %v2650
      %v3224 = vsel %vm1502, %v3192, %v2652
      %v3225 = vsel %vm1502, %v3193, %v2654
      %v3226 = vsel %vm1502, %v3194, %v2656
      %v3227 = vsel %vm1502, %v3195, %v2658
      %v3228 = vsel %vm1502, %v3196, %v2660
      %v3229 = vsel %vm1502, %v3197, %v2662
      %v3230 = vsel %vm1502, %v3198, %v2664
      %v3231 = vsel %vm1502, %v3199, %v2666
      %v3232 = vsel %vm1502, %v3200, %v2668
      %v3233 = vsel %vm1502, %v3201, %v2670
      %v3234 = vsel %vm1502, %v3202, %v2672
      %v3235 = vsel %vm1502, %v3203, %v2674
      %v3236 = vsel %vm1502, %v3204, %v2676
      %v3237 = vsel %vm1502, %v3205, %v2678
      %v3238 = vsel %vm1502, %v3206, %v2680
      %v3239 = vsel %vm1502, %v3207, %v2682
      %v3240 = vsel %vm1502, %v3208, %v2684
      %v3241 = vsel %vm1502, %v3209, %v2686
      %v3242 = vsel %vm1502, %v3210, %v2688
      %v3243 = vsel %vm1502, %v3211, %v2690
      %v3244 = vsel %vm1502, %v3212, %v2692
      %v3245 = vsel %vm1502, %v3213, %v2694
      %v3246 = vsel %vm1502, %v3214, %v2696
      %v3247 = vsel %vm1502, %v3215, %v2698
      %v3248 = vsel %vm1502, %v3216, %v2700
      %v3249 = vsel %vm1502, %v3217, %v2702
      %v3250 = vsel %vm1502, %v3218, %v2704
      %v3251 = vsel %vm1502, %v3219, %v2706
      %v3252 = vsel %vm1502, %v3220, %v2708
      %v3253 = vsel %vm1535, %v3221, %v2742
      %v3254 = vsel %vm1535, %v3222, %v2744
      %v3255 = vsel %vm1535, %v3223, %v2746
      %v3256 = vsel %vm1535, %v3224, %v2748
      %v3257 = vsel %vm1535, %v3225, %v2750
      %v3258 = vsel %vm1535, %v3226, %v2752
      %v3259 = vsel %vm1535, %v3227, %v2754
      %v3260 = vsel %vm1535, %v3228, %v2756
      %v3261 = vsel %vm1535, %v3229, %v2758
      %v3262 = vsel %vm1535, %v3230, %v2760
      %v3263 = vsel %vm1535, %v3231, %v2762
      %v3264 = vsel %vm1535, %v3232, %v2764
      %v3265 = vsel %vm1535, %v3233, %v2766
      %v3266 = vsel %vm1535, %v3234, %v2768
      %v3267 = vsel %vm1535, %v3235, %v2770
      %v3268 = vsel %vm1535, %v3236, %v2772
      %v3269 = vsel %vm1535, %v3237, %v2774
      %v3270 = vsel %vm1535, %v3238, %v2776
      %v3271 = vsel %vm1535, %v3239, %v2778
      %v3272 = vsel %vm1535, %v3240, %v2780
      %v3273 = vsel %vm1535, %v3241, %v2782
      %v3274 = vsel %vm1535, %v3242, %v2784
      %v3275 = vsel %vm1535, %v3243, %v2786
      %v3276 = vsel %vm1535, %v3244, %v2788
      %v3277 = vsel %vm1535, %v3245, %v2790
      %v3278 = vsel %vm1535, %v3246, %v2792
      %v3279 = vsel %vm1535, %v3247, %v2794
      %v3280 = vsel %vm1535, %v3248, %v2796
      %v3281 = vsel %vm1535, %v3249, %v2798
      %v3282 = vsel %vm1535, %v3250, %v2800
      %v3283 = vsel %vm1535, %v3251, %v2802
      %v3284 = vsel %vm1535, %v3252, %v2804
      %v3285 = vsel %vm1568, %v3253, %v2838
      %v3286 = vsel %vm1568, %v3254, %v2840
      %v3287 = vsel %vm1568, %v3255, %v2842
      %v3288 = vsel %vm1568, %v3256, %v2844
      %v3289 = vsel %vm1568, %v3257, %v2846
      %v3290 = vsel %vm1568, %v3258, %v2848
      %v3291 = vsel %vm1568, %v3259, %v2850
      %v3292 = vsel %vm1568, %v3260, %v2852
      %v3293 = vsel %vm1568, %v3261, %v2854
      %v3294 = vsel %vm1568, %v3262, %v2856
      %v3295 = vsel %vm1568, %v3263, %v2858
      %v3296 = vsel %vm1568, %v3264, %v2860
      %v3297 = vsel %vm1568, %v3265, %v2862
      %v3298 = vsel %vm1568, %v3266, %v2864
      %v3299 = vsel %vm1568, %v3267, %v2866
      %v3300 = vsel %vm1568, %v3268, %v2868
      %v3301 = vsel %vm1568, %v3269, %v2870
      %v3302 = vsel %vm1568, %v3270, %v2872
      %v3303 = vsel %vm1568, %v3271, %v2874
      %v3304 = vsel %vm1568, %v3272, %v2876
      %v3305 = vsel %vm1568, %v3273, %v2878
      %v3306 = vsel %vm1568, %v3274, %v2880
      %v3307 = vsel %vm1568, %v3275, %v2882
      %v3308 = vsel %vm1568, %v3276, %v2884
      %v3309 = vsel %vm1568, %v3277, %v2886
      %v3310 = vsel %vm1568, %v3278, %v2888
      %v3311 = vsel %vm1568, %v3279, %v2890
      %v3312 = vsel %vm1568, %v3280, %v2892
      %v3313 = vsel %vm1568, %v3281, %v2894
      %v3314 = vsel %vm1568, %v3282, %v2896
      %v3315 = vsel %vm1568, %v3283, %v2898
      %v3316 = vsel %vm1568, %v3284, %v2900
      %v3317 = vsel %vm1601, %v3285, %v2934
      %v3318 = vsel %vm1601, %v3286, %v2936
      %v3319 = vsel %vm1601, %v3287, %v2938
      %v3320 = vsel %vm1601, %v3288, %v2940
      %v3321 = vsel %vm1601, %v3289, %v2942
      %v3322 = vsel %vm1601, %v3290, %v2944
      %v3323 = vsel %vm1601, %v3291, %v2946
      %v3324 = vsel %vm1601, %v3292, %v2948
      %v3325 = vsel %vm1601, %v3293, %v2950
      %v3326 = vsel %vm1601, %v3294, %v2952
      %v3327 = vsel %vm1601, %v3295, %v2954
      %v3328 = vsel %vm1601, %v3296, %v2956
      %v3329 = vsel %vm1601, %v3297, %v2958
      %v3330 = vsel %vm1601, %v3298, %v2960
      %v3331 = vsel %vm1601, %v3299, %v2962
      %v3332 = vsel %vm1601, %v3300, %v2964
      %v3333 = vsel %vm1601, %v3301, %v2966
      %v3334 = vsel %vm1601, %v3302, %v2968
      %v3335 = vsel %vm1601, %v3303, %v2970
      %v3336 = vsel %vm1601, %v3304, %v2972
      %v3337 = vsel %vm1601, %v3305, %v2974
      %v3338 = vsel %vm1601, %v3306, %v2976
      %v3339 = vsel %vm1601, %v3307, %v2978
      %v3340 = vsel %vm1601, %v3308, %v2980
      %v3341 = vsel %vm1601, %v3309, %v2982
      %v3342 = vsel %vm1601, %v3310, %v2984
      %v3343 = vsel %vm1601, %v3311, %v2986
      %v3344 = vsel %vm1601, %v3312, %v2988
      %v3345 = vsel %vm1601, %v3313, %v2990
      %v3346 = vsel %vm1601, %v3314, %v2992
      %v3347 = vsel %vm1601, %v3315, %v2994
      %v3348 = vsel %vm1601, %v3316, %v2996
      %v3349 = vsel %vm1634, %v3317, %v3030
      %v3350 = vsel %vm1634, %v3318, %v3032
      %v3351 = vsel %vm1634, %v3319, %v3034
      %v3352 = vsel %vm1634, %v3320, %v3036
      %v3353 = vsel %vm1634, %v3321, %v3038
      %v3354 = vsel %vm1634, %v3322, %v3040
      %v3355 = vsel %vm1634, %v3323, %v3042
      %v3356 = vsel %vm1634, %v3324, %v3044
      %v3357 = vsel %vm1634, %v3325, %v3046
      %v3358 = vsel %vm1634, %v3326, %v3048
      %v3359 = vsel %vm1634, %v3327, %v3050
      %v3360 = vsel %vm1634, %v3328, %v3052
      %v3361 = vsel %vm1634, %v3329, %v3054
      %v3362 = vsel %vm1634, %v3330, %v3056
      %v3363 = vsel %vm1634, %v3331, %v3058
      %v3364 = vsel %vm1634, %v3332, %v3060
      %v3365 = vsel %vm1634, %v3333, %v3062
      %v3366 = vsel %vm1634, %v3334, %v3064
      %v3367 = vsel %vm1634, %v3335, %v3066
      %v3368 = vsel %vm1634, %v3336, %v3068
      %v3369 = vsel %vm1634, %v3337, %v3070
      %v3370 = vsel %vm1634, %v3338, %v3072
      %v3371 = vsel %vm1634, %v3339, %v3074
      %v3372 = vsel %vm1634, %v3340, %v3076
      %v3373 = vsel %vm1634, %v3341, %v3078
      %v3374 = vsel %vm1634, %v3342, %v3080
      %v3375 = vsel %vm1634, %v3343, %v3082
      %v3376 = vsel %vm1634, %v3344, %v3084
      %v3377 = vsel %vm1634, %v3345, %v3086
      %v3378 = vsel %vm1634, %v3346, %v3088
      %v3379 = vsel %vm1634, %v3347, %v3090
      %v3380 = vsel %vm1634, %v3348, %v3092
      %v3381 = vld [vmem:[%s3] sm:$0xff]
      %v3382 = vld [vmem:[%s3 + $0x8] sm:$0xff]
      %v3383 = vld [vmem:[%s3 + $0x10] sm:$0xff]
      %v3384 = vld [vmem:[%s3 + $0x18] sm:$0xff]
      %v3385 = vld [vmem:[%s3 + $0x20] sm:$0xff]
      %v3386 = vld [vmem:[%s3 + $0x28] sm:$0xff]
      %v3387 = vld [vmem:[%s3 + $0x30] sm:$0xff]
      %v3388 = vld [vmem:[%s3 + $0x38] sm:$0xff]
      %v3389 = vld [vmem:[%s3 + $0x40] sm:$0xff]
      %v3390 = vld [vmem:[%s4] sm:$0x1]
      %v3392 = vlaneseq
      %v3393 = vshrl.u32 %v3392, 7
      %v3394 = vsub.s32 0, %v3393
      %v3395 = vrot.slane %v3390, %v3394
      %v3398 = vsel %vm1683, %v3349, 0
      %v3401 = vsel %vm1683, %v3350, 0
      %v3404 = vsel %vm1683, %v3351, 0
      %v3407 = vsel %vm1683, %v3352, 0
      %v3410 = vsel %vm1683, %v3353, 0
      %v3413 = vsel %vm1683, %v3354, 0
      %v3416 = vsel %vm1683, %v3355, 0
      %v3419 = vsel %vm1683, %v3356, 0
      %v3422 = vsel %vm1683, %v3357, 0
      %v3425 = vsel %vm1683, %v3358, 0
      %v3428 = vsel %vm1683, %v3359, 0
      %v3431 = vsel %vm1683, %v3360, 0
      %v3434 = vsel %vm1683, %v3361, 0
      %v3437 = vsel %vm1683, %v3362, 0
      %v3440 = vsel %vm1683, %v3363, 0
      %v3443 = vsel %vm1683, %v3364, 0
      %v3446 = vsel %vm1683, %v3365, 0
      %v3449 = vsel %vm1683, %v3366, 0
      %v3452 = vsel %vm1683, %v3367, 0
      %v3455 = vsel %vm1683, %v3368, 0
      %v3458 = vsel %vm1683, %v3369, 0
      %v3461 = vsel %vm1683, %v3370, 0
      %v3464 = vsel %vm1683, %v3371, 0
      %v3467 = vsel %vm1683, %v3372, 0
      %v3470 = vsel %vm1683, %v3373, 0
      %v3473 = vsel %vm1683, %v3374, 0
      %v3476 = vsel %vm1683, %v3375, 0
      %v3479 = vsel %vm1683, %v3376, 0
      %v3482 = vsel %vm1683, %v3377, 0
      %v3485 = vsel %vm1683, %v3378, 0
      %v3488 = vsel %vm1683, %v3379, 0
      %v3491 = vsel %vm1683, %v3380, 0
      %3493 = vmatprep.subr.mxu0 0.0
      %3494 = vmatpush1.msra.mxu0 %v3381
      %3495 = vmatprep.subr.mxu0 0.0
      %3496 = vmatpush1.msra.mxu0 %v3382
      %3497 = vmatprep.subr.mxu0 0.0
      %3498 = vmatpush1.msra.mxu0 %v3383
      %3499 = vmatprep.subr.mxu0 0.0
      %3500 = vmatpush1.msra.mxu0 %v3384
      %3501 = vmatprep.subr.mxu0 0.0
      %3502 = vmatpush1.msra.mxu0 %v3385
      %3503 = vmatprep.subr.mxu0 0.0
      %3504 = vmatpush1.msra.mxu0 %v3386
      %3505 = vmatprep.subr.mxu0 0.0
      %3506 = vmatpush1.msra.mxu0 %v3387
      %3507 = vmatprep.subr.mxu0 0.0
      %3508 = vmatpush1.msra.mxu0 %v3388
      %3509 = vmatprep.subr.mxu0 0.0
      %3510 = vmatpush1.msra.mxu0 %v3389
      %3511 = vmatprep.subr.mxu0 0.0
      %3512 = vmatpush1.msra.mxu0 0.0
      %3513 = vmatprep.subr.mxu0 0.0
      %3514 = vmatpush1.msra.mxu0 0.0
      %3515 = vmatprep.subr.mxu0 0.0
      %3516 = vmatpush1.msra.mxu0 0.0
      %3517 = vmatprep.subr.mxu0 0.0
      %3518 = vmatpush1.msra.mxu0 0.0
      %3519 = vmatprep.subr.mxu0 0.0
      %3520 = vmatpush1.msra.mxu0 0.0
      %3521 = vmatprep.subr.mxu0 0.0
      %3522 = vmatpush1.msra.mxu0 0.0
      %3523 = vmatprep.subr.mxu0 0.0
      %3524 = vmatpush1.msra.mxu0 0.0
      %3525 = vmatprep.subr.mxu0 0.0
      %3526 = vmatpush1.msra.mxu0 0.0
      %3527 = vmatprep.subr.mxu0 0.0
      %3528 = vmatpush1.msra.mxu0 0.0
      %3529 = vmatprep.subr.mxu0 0.0
      %3530 = vmatpush1.msra.mxu0 0.0
      %3531 = vmatprep.subr.mxu0 0.0
      %3532 = vmatpush1.msra.mxu0 0.0
      %3533 = vmatprep.subr.mxu0 0.0
      %3534 = vmatpush1.msra.mxu0 0.0
      %3535 = vmatprep.subr.mxu0 0.0
      %3536 = vmatpush1.msra.mxu0 0.0
      %3537 = vmatprep.subr.mxu0 0.0
      %3538 = vmatpush1.msra.mxu0 0.0
      %3539 = vmatprep.subr.mxu0 0.0
      %3540 = vmatpush1.msra.mxu0 0.0
      %3541 = vmatprep.subr.mxu0 0.0
      %3542 = vmatpush1.msra.mxu0 0.0
      %3543 = vmatprep.subr.mxu0 0.0
      %3544 = vmatpush1.msra.mxu0 0.0
      %3545 = vmatprep.subr.mxu0 0.0
      %3546 = vmatpush1.msra.mxu0 0.0
      %3547 = vmatprep.subr.mxu0 0.0
      %3548 = vmatpush1.msra.mxu0 0.0
      %3549 = vmatprep.subr.mxu0 0.0
      %3550 = vmatpush1.msra.mxu0 0.0
      %3551 = vmatprep.subr.mxu0 0.0
      %3552 = vmatpush1.msra.mxu0 0.0
      %3553 = vmatprep.subr.mxu0 0.0
      %3554 = vmatpush1.msra.mxu0 0.0
      %3555 = vmatprep.subr.mxu0 0.0
      %3556 = vmatpush1.msra.mxu0 0.0
      %3557 = vmatprep.mubr.f32.mxu0 0.0
      %3558 = vmatmul.mubr.f32.gmra.mrb[0].mxu0 %v3398
      %v3559 = vpop.f32.mrb[0].mxu0
      %v3560 = vadd.f32 %v3395, %v3559
      %v3561 = vpop.f32.mrb[0].mxu0
      %3562 = vmatprep.mubr.f32.mxu0 0.0
      %3563 = vmatmul.mubr.f32.gmra.mrb[0].mxu0 %v3401
      %v3564 = vpop.f32.mrb[0].mxu0
      %v3565 = vadd.f32 %v3395, %v3564
      %v3566 = vpop.f32.mrb[0].mxu0
      %3567 = vmatprep.mubr.f32.mxu0 0.0
      %3568 = vmatmul.mubr.f32.gmra.mrb[0].mxu0 %v3404
      %v3569 = vpop.f32.mrb[0].mxu0
      %v3570 = vadd.f32 %v3395, %v3569
      %v3571 = vpop.f32.mrb[0].mxu0
      %3572 = vmatprep.mubr.f32.mxu0 0.0
      %3573 = vmatmul.mubr.f32.gmra.mrb[0].mxu0 %v3407
      %v3574 = vpop.f32.mrb[0].mxu0
      %v3575 = vadd.f32 %v3395, %v3574
      %v3576 = vpop.f32.mrb[0].mxu0
      %3577 = vmatprep.mubr.f32.mxu0 0.0
      %3578 = vmatmul.mubr.f32.gmra.mrb[0].mxu0 %v3410
      %v3579 = vpop.f32.mrb[0].mxu0
      %v3580 = vadd.f32 %v3395, %v3579
      %v3581 = vpop.f32.mrb[0].mxu0
      %3582 = vmatprep.mubr.f32.mxu0 0.0
      %3583 = vmatmul.mubr.f32.gmra.mrb[0].mxu0 %v3413
      %v3584 = vpop.f32.mrb[0].mxu0
      %v3585 = vadd.f32 %v3395, %v3584
      %v3586 = vpop.f32.mrb[0].mxu0
      %3587 = vmatprep.mubr.f32.mxu0 0.0
      %3588 = vmatmul.mubr.f32.gmra.mrb[0].mxu0 %v3416
      %v3589 = vpop.f32.mrb[0].mxu0
      %v3590 = vadd.f32 %v3395, %v3589
      %v3591 = vpop.f32.mrb[0].mxu0
      %3592 = vmatprep.mubr.f32.mxu0 0.0
      %3593 = vmatmul.mubr.f32.gmra.mrb[0].mxu0 %v3419
      %v3594 = vpop.f32.mrb[0].mxu0
      %v3595 = vadd.f32 %v3395, %v3594
      %v3596 = vpop.f32.mrb[0].mxu0
      %3597 = vmatprep.mubr.f32.mxu0 0.0
      %3598 = vmatmul.mubr.f32.gmra.mrb[0].mxu0 %v3422
      %v3599 = vpop.f32.mrb[0].mxu0
      %v3600 = vadd.f32 %v3395, %v3599
      %v3601 = vpop.f32.mrb[0].mxu0
      %3602 = vmatprep.mubr.f32.mxu0 0.0
      %3603 = vmatmul.mubr.f32.gmra.mrb[0].mxu0 %v3425
      %v3604 = vpop.f32.mrb[0].mxu0
      %v3605 = vadd.f32 %v3395, %v3604
      %v3606 = vpop.f32.mrb[0].mxu0
      %3607 = vmatprep.mubr.f32.mxu0 0.0
      %3608 = vmatmul.mubr.f32.gmra.mrb[0].mxu0 %v3428
      %v3609 = vpop.f32.mrb[0].mxu0
      %v3610 = vadd.f32 %v3395, %v3609
      %v3611 = vpop.f32.mrb[0].mxu0
      %3612 = vmatprep.mubr.f32.mxu0 0.0
      %3613 = vmatmul.mubr.f32.gmra.mrb[0].mxu0 %v3431
      %v3614 = vpop.f32.mrb[0].mxu0
      %v3615 = vadd.f32 %v3395, %v3614
      %v3616 = vpop.f32.mrb[0].mxu0
      %3617 = vmatprep.mubr.f32.mxu0 0.0
      %3618 = vmatmul.mubr.f32.gmra.mrb[0].mxu0 %v3434
      %v3619 = vpop.f32.mrb[0].mxu0
      %v3620 = vadd.f32 %v3395, %v3619
      %v3621 = vpop.f32.mrb[0].mxu0
      %3622 = vmatprep.mubr.f32.mxu0 0.0
      %3623 = vmatmul.mubr.f32.gmra.mrb[0].mxu0 %v3437
      %v3624 = vpop.f32.mrb[0].mxu0
      %v3625 = vadd.f32 %v3395, %v3624
      %v3626 = vpop.f32.mrb[0].mxu0
      %3627 = vmatprep.mubr.f32.mxu0 0.0
      %3628 = vmatmul.mubr.f32.gmra.mrb[0].mxu0 %v3440
      %v3629 = vpop.f32.mrb[0].mxu0
      %v3630 = vadd.f32 %v3395, %v3629
      %v3631 = vpop.f32.mrb[0].mxu0
      %3632 = vmatprep.mubr.f32.mxu0 0.0
      %3633 = vmatmul.mubr.f32.gmra.mrb[0].mxu0 %v3443
      %v3634 = vpop.f32.mrb[0].mxu0
      %v3635 = vadd.f32 %v3395, %v3634
      %v3636 = vpop.f32.mrb[0].mxu0
      %3637 = vmatprep.mubr.f32.mxu0 0.0
      %3638 = vmatmul.mubr.f32.gmra.mrb[0].mxu0 %v3446
      %v3639 = vpop.f32.mrb[0].mxu0
      %v3640 = vadd.f32 %v3395, %v3639
      %v3641 = vpop.f32.mrb[0].mxu0
      %3642 = vmatprep.mubr.f32.mxu0 0.0
      %3643 = vmatmul.mubr.f32.gmra.mrb[0].mxu0 %v3449
      %v3644 = vpop.f32.mrb[0].mxu0
      %v3645 = vadd.f32 %v3395, %v3644
      %v3646 = vpop.f32.mrb[0].mxu0
      %3647 = vmatprep.mubr.f32.mxu0 0.0
      %3648 = vmatmul.mubr.f32.gmra.mrb[0].mxu0 %v3452
      %v3649 = vpop.f32.mrb[0].mxu0
      %v3650 = vadd.f32 %v3395, %v3649
      %v3651 = vpop.f32.mrb[0].mxu0
      %3652 = vmatprep.mubr.f32.mxu0 0.0
      %3653 = vmatmul.mubr.f32.gmra.mrb[0].mxu0 %v3455
      %v3654 = vpop.f32.mrb[0].mxu0
      %v3655 = vadd.f32 %v3395, %v3654
      %v3656 = vpop.f32.mrb[0].mxu0
      %3657 = vmatprep.mubr.f32.mxu0 0.0
      %3658 = vmatmul.mubr.f32.gmra.mrb[0].mxu0 %v3458
      %v3659 = vpop.f32.mrb[0].mxu0
      %v3660 = vadd.f32 %v3395, %v3659
      %v3661 = vpop.f32.mrb[0].mxu0
      %3662 = vmatprep.mubr.f32.mxu0 0.0
      %3663 = vmatmul.mubr.f32.gmra.mrb[0].mxu0 %v3461
      %v3664 = vpop.f32.mrb[0].mxu0
      %v3665 = vadd.f32 %v3395, %v3664
      %v3666 = vpop.f32.mrb[0].mxu0
      %3667 = vmatprep.mubr.f32.mxu0 0.0
      %3668 = vmatmul.mubr.f32.gmra.mrb[0].mxu0 %v3464
      %v3669 = vpop.f32.mrb[0].mxu0
      %v3670 = vadd.f32 %v3395, %v3669
      %v3671 = vpop.f32.mrb[0].mxu0
      %3672 = vmatprep.mubr.f32.mxu0 0.0
      %3673 = vmatmul.mubr.f32.gmra.mrb[0].mxu0 %v3467
      %v3674 = vpop.f32.mrb[0].mxu0
      %v3675 = vadd.f32 %v3395, %v3674
      %v3676 = vpop.f32.mrb[0].mxu0
      %3677 = vmatprep.mubr.f32.mxu0 0.0
      %3678 = vmatmul.mubr.f32.gmra.mrb[0].mxu0 %v3470
      %v3679 = vpop.f32.mrb[0].mxu0
      %v3680 = vadd.f32 %v3395, %v3679
      %v3681 = vpop.f32.mrb[0].mxu0
      %3682 = vmatprep.mubr.f32.mxu0 0.0
      %3683 = vmatmul.mubr.f32.gmra.mrb[0].mxu0 %v3473
      %v3684 = vpop.f32.mrb[0].mxu0
      %v3685 = vadd.f32 %v3395, %v3684
      %v3686 = vpop.f32.mrb[0].mxu0
      %3687 = vmatprep.mubr.f32.mxu0 0.0
      %3688 = vmatmul.mubr.f32.gmra.mrb[0].mxu0 %v3476
      %v3689 = vpop.f32.mrb[0].mxu0
      %v3690 = vadd.f32 %v3395, %v3689
      %v3691 = vpop.f32.mrb[0].mxu0
      %3692 = vmatprep.mubr.f32.mxu0 0.0
      %3693 = vmatmul.mubr.f32.gmra.mrb[0].mxu0 %v3479
      %v3694 = vpop.f32.mrb[0].mxu0
      %v3695 = vadd.f32 %v3395, %v3694
      %v3696 = vpop.f32.mrb[0].mxu0
      %3697 = vmatprep.mubr.f32.mxu0 0.0
      %3698 = vmatmul.mubr.f32.gmra.mrb[0].mxu0 %v3482
      %v3699 = vpop.f32.mrb[0].mxu0
      %v3700 = vadd.f32 %v3395, %v3699
      %v3701 = vpop.f32.mrb[0].mxu0
      %3702 = vmatprep.mubr.f32.mxu0 0.0
      %3703 = vmatmul.mubr.f32.gmra.mrb[0].mxu0 %v3485
      %v3704 = vpop.f32.mrb[0].mxu0
      %v3705 = vadd.f32 %v3395, %v3704
      %v3706 = vpop.f32.mrb[0].mxu0
      %3707 = vmatprep.mubr.f32.mxu0 0.0
      %3708 = vmatmul.mubr.f32.gmra.mrb[0].mxu0 %v3488
      %v3709 = vpop.f32.mrb[0].mxu0
      %v3710 = vadd.f32 %v3395, %v3709
      %v3711 = vpop.f32.mrb[0].mxu0
      %3712 = vmatprep.mubr.f32.mxu0 0.0
      %3713 = vmatmul.mubr.f32.gmra.mrb[0].mxu0 %v3491
      %v3714 = vpop.f32.mrb[0].mxu0
      %v3715 = vadd.f32 %v3395, %v3714
      %v3716 = vpop.f32.mrb[0].mxu0
      %3717 = vdwg.mxu0
      %v3718 = vld [vmem:[%s219] sm:$0xff]
      %v3719 = vld [vmem:[%s219 + $0x8] sm:$0xff]
      %v3720 = vld [vmem:[%s219 + $0x10] sm:$0xff]
      %v3721 = vld [vmem:[%s219 + $0x18] sm:$0xff]
      %v3722 = vld [vmem:[%s219 + $0x20] sm:$0xff]
      %v3723 = vld [vmem:[%s219 + $0x28] sm:$0xff]
      %v3724 = vld [vmem:[%s219 + $0x30] sm:$0xff]
      %v3725 = vld [vmem:[%s219 + $0x38] sm:$0xff]
      %v3726 = vld [vmem:[%s219 + $0x40] sm:$0xff]
      %v3727 = vld [vmem:[%s219 + $0x48] sm:$0xff]
      %v3728 = vld [vmem:[%s219 + $0x50] sm:$0xff]
      %v3729 = vld [vmem:[%s219 + $0x58] sm:$0xff]
      %v3730 = vld [vmem:[%s219 + $0x60] sm:$0xff]
      %v3731 = vld [vmem:[%s219 + $0x68] sm:$0xff]
      %v3732 = vld [vmem:[%s219 + $0x70] sm:$0xff]
      %v3733 = vld [vmem:[%s219 + $0x78] sm:$0xff]
      %v3734 = vld [vmem:[%s219 + $0x80] sm:$0xff]
      %v3735 = vld [vmem:[%s219 + $0x88] sm:$0xff]
      %v3736 = vld [vmem:[%s219 + $0x90] sm:$0xff]
      %v3737 = vld [vmem:[%s219 + $0x98] sm:$0xff]
      %v3738 = vld [vmem:[%s219 + $0xa0] sm:$0xff]
      %v3739 = vld [vmem:[%s219 + $0xa8] sm:$0xff]
      %v3740 = vld [vmem:[%s219 + $0xb0] sm:$0xff]
      %v3741 = vld [vmem:[%s219 + $0xb8] sm:$0xff]
      %v3742 = vld [vmem:[%s219 + $0xc0] sm:$0xff]
      %v3743 = vld [vmem:[%s219 + $0xc8] sm:$0xff]
      %v3744 = vld [vmem:[%s219 + $0xd0] sm:$0xff]
      %v3745 = vld [vmem:[%s219 + $0xd8] sm:$0xff]
      %v3746 = vld [vmem:[%s219 + $0xe0] sm:$0xff]
      %v3747 = vld [vmem:[%s219 + $0xe8] sm:$0xff]
      %v3748 = vld [vmem:[%s219 + $0xf0] sm:$0xff]
      %v3749 = vld [vmem:[%s219 + $0xf8] sm:$0xff]
      %v3750 = vadd.f32 %v3718, %v3560
      %v3751 = vadd.f32 %v3719, %v3565
      %v3752 = vadd.f32 %v3720, %v3570
      %v3753 = vadd.f32 %v3721, %v3575
      %v3754 = vadd.f32 %v3722, %v3580
      %v3755 = vadd.f32 %v3723, %v3585
      %v3756 = vadd.f32 %v3724, %v3590
      %v3757 = vadd.f32 %v3725, %v3595
      %v3758 = vadd.f32 %v3726, %v3600
      %v3759 = vadd.f32 %v3727, %v3605
      %v3760 = vadd.f32 %v3728, %v3610
      %v3761 = vadd.f32 %v3729, %v3615
      %v3762 = vadd.f32 %v3730, %v3620
      %v3763 = vadd.f32 %v3731, %v3625
      %v3764 = vadd.f32 %v3732, %v3630
      %v3765 = vadd.f32 %v3733, %v3635
      %v3766 = vadd.f32 %v3734, %v3640
      %v3767 = vadd.f32 %v3735, %v3645
      %v3768 = vadd.f32 %v3736, %v3650
      %v3769 = vadd.f32 %v3737, %v3655
      %v3770 = vadd.f32 %v3738, %v3660
      %v3771 = vadd.f32 %v3739, %v3665
      %v3772 = vadd.f32 %v3740, %v3670
      %v3773 = vadd.f32 %v3741, %v3675
      %v3774 = vadd.f32 %v3742, %v3680
      %v3775 = vadd.f32 %v3743, %v3685
      %v3776 = vadd.f32 %v3744, %v3690
      %v3777 = vadd.f32 %v3745, %v3695
      %v3778 = vadd.f32 %v3746, %v3700
      %v3779 = vadd.f32 %v3747, %v3705
      %v3780 = vadd.f32 %v3748, %v3710
      %v3781 = vadd.f32 %v3749, %v3715
      %3782 = vst.msk [vmem:[%s224] sm:$0xff] %vm225, %v3750
      %3783 = vst.msk [vmem:[%s224 + $0x8] sm:$0xff] %vm225, %v3751
      %3784 = vst.msk [vmem:[%s224 + $0x10] sm:$0xff] %vm225, %v3752
      %3785 = vst.msk [vmem:[%s224 + $0x18] sm:$0xff] %vm225, %v3753
      %3786 = vst.msk [vmem:[%s224 + $0x20] sm:$0xff] %vm225, %v3754
      %3787 = vst.msk [vmem:[%s224 + $0x28] sm:$0xff] %vm225, %v3755
      %3788 = vst.msk [vmem:[%s224 + $0x30] sm:$0xff] %vm225, %v3756
      %3789 = vst.msk [vmem:[%s224 + $0x38] sm:$0xff] %vm225, %v3757
      %3790 = vst.msk [vmem:[%s224 + $0x40] sm:$0xff] %vm225, %v3758
      %3791 = vst.msk [vmem:[%s224 + $0x48] sm:$0xff] %vm225, %v3759
      %3792 = vst.msk [vmem:[%s224 + $0x50] sm:$0xff] %vm225, %v3760
      %3793 = vst.msk [vmem:[%s224 + $0x58] sm:$0xff] %vm225, %v3761
      %3794 = vst.msk [vmem:[%s224 + $0x60] sm:$0xff] %vm225, %v3762
      %3795 = vst.msk [vmem:[%s224 + $0x68] sm:$0xff] %vm225, %v3763
      %3796 = vst.msk [vmem:[%s224 + $0x70] sm:$0xff] %vm225, %v3764
      %3797 = vst.msk [vmem:[%s224 + $0x78] sm:$0xff] %vm225, %v3765
      %3798 = vst.msk [vmem:[%s224 + $0x80] sm:$0xff] %vm225, %v3766
      %3799 = vst.msk [vmem:[%s224 + $0x88] sm:$0xff] %vm225, %v3767
      %3800 = vst.msk [vmem:[%s224 + $0x90] sm:$0xff] %vm225, %v3768
      %3801 = vst.msk [vmem:[%s224 + $0x98] sm:$0xff] %vm225, %v3769
      %3802 = vst.msk [vmem:[%s224 + $0xa0] sm:$0xff] %vm225, %v3770
      %3803 = vst.msk [vmem:[%s224 + $0xa8] sm:$0xff] %vm225, %v3771
      %3804 = vst.msk [vmem:[%s224 + $0xb0] sm:$0xff] %vm225, %v3772
      %3805 = vst.msk [vmem:[%s224 + $0xb8] sm:$0xff] %vm225, %v3773
      %3806 = vst.msk [vmem:[%s224 + $0xc0] sm:$0xff] %vm225, %v3774
      %3807 = vst.msk [vmem:[%s224 + $0xc8] sm:$0xff] %vm225, %v3775
      %3808 = vst.msk [vmem:[%s224 + $0xd0] sm:$0xff] %vm225, %v3776
      %3809 = vst.msk [vmem:[%s224 + $0xd8] sm:$0xff] %vm225, %v3777
      %3810 = vst.msk [vmem:[%s224 + $0xe0] sm:$0xff] %vm225, %v3778
      %3811 = vst.msk [vmem:[%s224 + $0xe8] sm:$0xff] %vm225, %v3779
      %3812 = vst.msk [vmem:[%s224 + $0xf0] sm:$0xff] %vm225, %v3780
      %3813 = vst.msk [vmem:[%s224 + $0xf8] sm:$0xff] %vm225, %v3781
      %p3814 = scmp.lt.s32.totalorder %s16, 1
      %s3815 = scalar_select %p3814, %s16, 1
      %s3816 = smul.addr %s3815, 32
      %s3817 = smul.addr %s3816, 8
      %s3818 = scalar_lea.vmem %s5, %s3817
      // Predicated region
      $region41: #{projnetx_forward.2} parent=39 // pred_check
        %p3819 = pneg %p144
      $region42: #{projnetx_forward.2} parent=39 // pred_check_branch
        %3821 = sbr.rel (%p3819) target = $region44
      $region43: #{projnetx_forward.2} parent=39 // pred_region
        _
      $region44: #{projnetx_forward.2} parent=39 // pred_fallthru
        _
    $region40: #{projnetx_forward.2} parent=5 // pred_fallthru
      _
    %p3822 = scmp.le.s32.totalorder 2, %s11
    // Predicated region
    $region45: #{projnetx_forward.2} parent=5 // pred_check
      %p3823 = pneg %p3822
    $region46: #{projnetx_forward.2} parent=5 // pred_check_branch
      %3825 = sbr.rel (%p3823) target = $region48
    $region47: #{projnetx_forward.2} parent=5 // pred_region
      %s3826 = ssub.s32 %s11, 2
      // Predicated region
      $region49: #{projnetx_forward.2} parent=47 // pred_check
        %p3827 = pneg %p150
      $region50: #{projnetx_forward.2} parent=47 // pred_check_branch
        %3829 = sbr.rel (%p3827) target = $region52
      $region51: #{projnetx_forward.2} parent=47 // pred_region
        %p3830 = scmp.lt.s32.totalorder %s17, 1
        %s3831 = scalar_select %p3830, %s17, 1
        %s3832 = smul.addr %s3831, 32
        %s3833 = smul.addr %s3832, 8
        %s3834 = scalar_lea.vmem %s5, %s3833
      $region52: #{projnetx_forward.2} parent=47 // pred_fallthru
        _
    $region48: #{projnetx_forward.2} parent=5 // pred_fallthru
      _
  $region6: #{projnetx_forward.2} parent=0 // loop_footer
    %s15 = sadd.s32 1, %s11
  $region7: #{projnetx_forward.2} parent=0 // loop_footer_branch
    %10 = sbr.rel target = $region3
  $region8: #{projnetx_forward.2} parent=0 // loop_exit
    _

</llo_original>
